<compile_context>
chip_gen: v5e
topology: v5e:2x2
jax: 0.10.0
libtpu: 0.0.40
codegen_flags: <defaults>
</compile_context>

<pallas_src>
import jax
import jax.numpy as jnp
from jax.experimental import pallas as pl
from jax.experimental.pallas import tpu as pltpu


def cbow_kernel(idx_ref, emb_hbm, wt_ref, b_ref, out_ref,
                gather_ref, lhs_ref, m_ref, l_ref, sem_ref):
    # idx_ref    : SMEM [B, C] int32      (scalar-prefetched context ids)
    # emb_hbm    : HBM  [V, Dp] f32       (raw ref, gathered row-by-row)
    # wt_ref     : VMEM [Dp, tile_V] bf16 (W^T tile for this vocab block)
    # b_ref      : VMEM [1, tile_V] f32
    # out_ref    : VMEM [tile_B, V] f32   (resident output block for batch tile)
    # gather_ref : VMEM [C*tile_B, Dp] f32 (DMA landing buffer for emb rows)
    # lhs_ref    : VMEM [tile_B, Dp] bf16 (summed embeddings, cast once)
    # m_ref/l_ref: VMEM [tile_B, 1] f32   (online log-softmax running max / sum-exp)
    # sem_ref    : DMA semaphores, one per gathered row
    i = pl.program_id(0)                # batch tile
    j = pl.program_id(1)                # vocab tile
    n_j = pl.num_programs(1)
    tile_b, dp = lhs_ref.shape
    C = idx_ref.shape[1]
    tile_v = wt_ref.shape[1]

    @pl.when(j == 0)
    def _gather_and_init():
        # Gather only the B*C rows we need straight from HBM (no resident
        # table).  All row DMAs are issued before any wait so they overlap
        # each other; total traffic is tiny (B*C rows).
        copies = []
        for c in range(C):
            for b in range(tile_b):
                k = c * tile_b + b
                row = idx_ref[i * tile_b + b, c]     # precondition: 0 <= row < V
                copies.append(pltpu.make_async_copy(
                    emb_hbm.at[pl.ds(row, 1), :],
                    gather_ref.at[pl.ds(k, 1), :],
                    sem_ref.at[k]))
        for cp in copies:
            cp.start()
        for cp in copies:
            cp.wait()
        # Sum over the context axis: C vectorized [tile_B, Dp] adds.
        acc = gather_ref[pl.ds(0, tile_b), :]
        for c in range(1, C):
            acc = acc + gather_ref[pl.ds(c * tile_b, tile_b), :]
        # Cast the matmul LHS to bf16 exactly once (v5e has no bf16 VPU).
        lhs_ref[...] = acc.astype(lhs_ref.dtype)
        m_ref[...] = jnp.full(m_ref.shape, -jnp.inf, dtype=m_ref.dtype)
        l_ref[...] = jnp.zeros(l_ref.shape, dtype=l_ref.dtype)

    # Linear-layer tile: [tile_B, tile_V] = [tile_B, Dp] @ [Dp, tile_V]
    # (bf16 MXU, f32 accumulation, vocab axis lane-dense, no in-kernel .T).
    logits = jnp.dot(lhs_ref[...], wt_ref[...],
                     preferred_element_type=jnp.float32)
    logits = logits + b_ref[...]

    # Online (flash-style) running max / sum-exp over the vocab axis.
    m_prev = m_ref[...]
    m_new = jnp.maximum(m_prev, jnp.max(logits, axis=-1, keepdims=True))
    l_ref[...] = (l_ref[...] * jnp.exp(m_prev - m_new)
                  + jnp.sum(jnp.exp(logits - m_new), axis=-1, keepdims=True))
    m_ref[...] = m_new

    # Stash raw logits into the resident output block (lane-aligned slice).
    off = pl.multiple_of(j * tile_v, tile_v)
    out_ref[:, pl.ds(off, tile_v)] = logits

    @pl.when(j == n_j - 1)
    def _finalize():
        lse = m_ref[...] + jnp.log(l_ref[...])
        out_ref[...] = out_ref[...] - lse


def prepare_cbow_params(emb, w, b):
    """One-time parameter relayout (call OUTSIDE the jitted forward).

    Pads the hidden axis to a lane multiple (zero columns are exact no-ops for
    both the gather-sum and the matmul), pre-transposes W to [Dp, V] so the
    MXU is fed directly with the vocab axis lane-dense, and casts it to bf16
    (halves the dominant HBM stream; accumulation stays f32).
    """
    V, D = emb.shape
    assert w.shape == (V, D) and b.shape == (V,)
    d_pad = (-D) % 128
    if d_pad:
        emb = jnp.pad(emb, ((0, 0), (0, d_pad)))
        w = jnp.pad(w, ((0, 0), (0, d_pad)))
    emb_f32 = emb.astype(jnp.float32)                    # [V, Dp] (stays in HBM)
    wt_bf16 = jnp.transpose(w.astype(jnp.bfloat16))      # [Dp, V]
    b2d = b.reshape(1, V).astype(jnp.float32)            # [1, V]
    return emb_f32, wt_bf16, b2d


def cbow_forward(ctx_idx, emb_f32, wt_bf16, b2d, *, tile_v=512, tile_b=8):
    """log_softmax(sum_c emb[ctx[:, c]] @ W.T + b) via one pallas_call."""
    B, C = ctx_idx.shape
    V, dp = emb_f32.shape
    assert wt_bf16.shape == (dp, V) and b2d.shape == (1, V)
    tile_v = min(tile_v, V)
    assert tile_v % 128 == 0 and V % tile_v == 0
    assert tile_b % 8 == 0 and B % tile_b == 0

    idx = ctx_idx.astype(jnp.int32)

    # Explicit VMEM budget: double-buffered W^T/bias tiles, resident output
    # block, gather/LHS scratch (+ margin).  v5e's scoped default is 16 MiB;
    # 32 MiB floor is safe on every chip (<= v7x's 64 MiB physical).
    vmem_bytes = (2 * dp * tile_v * 2            # W^T tiles (bf16, double-buffered)
                  + 2 * 8 * tile_v * 4           # bias tiles (sublane-padded)
                  + 2 * tile_b * V * 4           # resident output block
                  + C * tile_b * dp * 4          # gather buffer
                  + tile_b * dp * 2              # bf16 LHS
                  + 2 * 8 * 128 * 4)             # m / l (padded)
    vmem_limit = int(min(max(2 * vmem_bytes + (2 << 20), 32 << 20), 64 << 20))

    grid_spec = pltpu.PrefetchScalarGridSpec(
        num_scalar_prefetch=1,
        grid=(B // tile_b, V // tile_v),
        in_specs=[
            # Embedding table stays in HBM; only B*C rows are DMA-gathered.
            pl.BlockSpec(memory_space=pl.ANY),
            # W^T tiled along the vocab axis -> double-buffered pipeline.
            pl.BlockSpec((dp, tile_v), lambda i, j, idx_ref: (0, j)),
            # Bias tile tracks the same vocab block.
            pl.BlockSpec((1, tile_v), lambda i, j, idx_ref: (0, j)),
        ],
        # Output block resident across the vocab grid so the last step applies
        # the log-softmax normalization before the single writeback.
        out_specs=pl.BlockSpec((tile_b, V), lambda i, j, idx_ref: (i, 0)),
        scratch_shapes=[
            pltpu.VMEM((C * tile_b, dp), jnp.float32),   # gathered emb rows
            pltpu.VMEM((tile_b, dp), jnp.bfloat16),      # summed embeddings (bf16 LHS)
            pltpu.VMEM((tile_b, 1), jnp.float32),        # running max
            pltpu.VMEM((tile_b, 1), jnp.float32),        # running sum(exp)
            pltpu.SemaphoreType.DMA((C * tile_b,)),      # per-row gather sems
        ],
    )
    return pl.pallas_call(
        cbow_kernel,
        out_shape=jax.ShapeDtypeStruct((B, V), jnp.float32),
        grid_spec=grid_spec,
        compiler_params=pltpu.CompilerParams(
            # Batch tiles shard across v7x's two TensorCores; the vocab axis
            # carries the sequential online reduction + resident output.
            dimension_semantics=("parallel", "arbitrary"),
            vmem_limit_bytes=vmem_limit),
    )(idx, emb_f32, wt_bf16, b2d)


if __name__ == "__main__":
    # Tutorial-ish sizes: CONTEXT_SIZE=2 each side -> C=4 context words.
    # D=100 exercises the lane-padding path (padded to 128); V=1024 with the
    # default tile_v=512 gives a 2-step vocab grid so the online log-softmax
    # and the W-tile pipeline are exercised.
    B, C, V, D = 8, 4, 1024, 100

    key = jax.random.PRNGKey(0)
    k_idx, k_emb, k_w, k_b = jax.random.split(key, 4)

    ctx_idx = jax.random.randint(k_idx, (B, C), 0, V, dtype=jnp.int32)
    emb = jax.random.normal(k_emb, (V, D), dtype=jnp.float32) * 0.1
    w = jax.random.normal(k_w, (V, D), dtype=jnp.float32) * 0.1
    b = jax.random.normal(k_b, (V,), dtype=jnp.float32) * 0.1

    # One-time relayout (hoisted out of the per-call jitted forward).
    emb_f32, wt_bf16, b2d = jax.block_until_ready(prepare_cbow_params(emb, w, b))

    fwd = jax.jit(cbow_forward)
    out = jax.block_until_ready(fwd(ctx_idx, emb_f32, wt_bf16, b2d))

    # Pure-JAX reference with matching bf16 quantization of W and the matmul
    # LHS (the embedding gather/sum stays f32, as in the kernel).
    summed = jnp.take(emb, ctx_idx, axis=0).sum(axis=1)                 # [B, D]
    summed_q = summed.astype(jnp.bfloat16).astype(jnp.float32)
    w_q = w.astype(jnp.bfloat16).astype(jnp.float32)
    ref = jax.nn.log_softmax(summed_q @ w_q.T + b, axis=-1)             # [B, V]

    assert out.shape == (B, V)
    assert jnp.allclose(out, ref, atol=2e-3, rtol=2e-3), "mismatch vs reference"

    print("KERNEL_OK")
</pallas_src>

<mosaic_0001>
module attributes {stable_mosaic.version = 11 : i64} {
  func.func @cbow_kernel(%arg0: i32, %arg1: i32, %arg2: memref<8x4xi32, #tpu.memory_space<smem>>, %arg3: memref<1024x128xf32, #tpu.memory_space<any>>, %arg4: memref<128x512xbf16, #tpu.memory_space<vmem>>, %arg5: memref<1x512xf32, #tpu.memory_space<vmem>>, %arg6: memref<8x1024xf32, #tpu.memory_space<vmem>>, %arg7: memref<32x128xf32, #tpu.memory_space<vmem>>, %arg8: memref<8x128xbf16, #tpu.memory_space<vmem>>, %arg9: memref<8x1xf32, #tpu.memory_space<vmem>>, %arg10: memref<8x1xf32, #tpu.memory_space<vmem>>, %arg11: memref<32x!tpu.dma_semaphore, #tpu.memory_space<semaphore_mem>>) attributes {dimension_semantics = [#tpu.dimension_semantics<parallel>, #tpu.dimension_semantics<arbitrary>], iteration_bounds = array<i64: 1, 2>, scalar_prefetch = 1 : i64, scratch_operands = 5 : i64, tpu.core_type = #tpu.core_type<tc>, window_params = [{}, {transform_indices = @transform_1, window_bounds = array<i64: 128, 512>}, {transform_indices = @transform_2, window_bounds = array<i64: 1, 512>}, {transform_indices = @transform_3, window_bounds = array<i64: 8, 1024>}]} {
    %c0_i32 = arith.constant 0 : i32
    %0 = arith.cmpi eq, %arg1, %c0_i32 : i32
    %1 = arith.extui %0 : i1 to i32
    %c0_i32_0 = arith.constant 0 : i32
    %2 = arith.cmpi ne, %1, %c0_i32_0 : i32
    scf.if %2 {
      %c8_i32 = arith.constant 8 : i32
      %32 = arith.muli %arg0, %c8_i32 : i32
      %c0_i32_18 = arith.constant 0 : i32
      %33 = arith.addi %32, %c0_i32_18 : i32
      %34 = arith.index_cast %33 : i32 to index
      %c0_19 = arith.constant 0 : index
      %35 = memref.load %arg2[%34, %c0_19] : memref<8x4xi32, #tpu.memory_space<smem>>
      %c8_i32_20 = arith.constant 8 : i32
      %36 = arith.muli %arg0, %c8_i32_20 : i32
      %c1_i32_21 = arith.constant 1 : i32
      %37 = arith.addi %36, %c1_i32_21 : i32
      %38 = arith.index_cast %37 : i32 to index
      %c0_22 = arith.constant 0 : index
      %39 = memref.load %arg2[%38, %c0_22] : memref<8x4xi32, #tpu.memory_space<smem>>
      %c8_i32_23 = arith.constant 8 : i32
      %40 = arith.muli %arg0, %c8_i32_23 : i32
      %c2_i32 = arith.constant 2 : i32
      %41 = arith.addi %40, %c2_i32 : i32
      %42 = arith.index_cast %41 : i32 to index
      %c0_24 = arith.constant 0 : index
      %43 = memref.load %arg2[%42, %c0_24] : memref<8x4xi32, #tpu.memory_space<smem>>
      %c8_i32_25 = arith.constant 8 : i32
      %44 = arith.muli %arg0, %c8_i32_25 : i32
      %c3_i32 = arith.constant 3 : i32
      %45 = arith.addi %44, %c3_i32 : i32
      %46 = arith.index_cast %45 : i32 to index
      %c0_26 = arith.constant 0 : index
      %47 = memref.load %arg2[%46, %c0_26] : memref<8x4xi32, #tpu.memory_space<smem>>
      %c8_i32_27 = arith.constant 8 : i32
      %48 = arith.muli %arg0, %c8_i32_27 : i32
      %c4_i32 = arith.constant 4 : i32
      %49 = arith.addi %48, %c4_i32 : i32
      %50 = arith.index_cast %49 : i32 to index
      %c0_28 = arith.constant 0 : index
      %51 = memref.load %arg2[%50, %c0_28] : memref<8x4xi32, #tpu.memory_space<smem>>
      %c8_i32_29 = arith.constant 8 : i32
      %52 = arith.muli %arg0, %c8_i32_29 : i32
      %c5_i32 = arith.constant 5 : i32
      %53 = arith.addi %52, %c5_i32 : i32
      %54 = arith.index_cast %53 : i32 to index
      %c0_30 = arith.constant 0 : index
      %55 = memref.load %arg2[%54, %c0_30] : memref<8x4xi32, #tpu.memory_space<smem>>
      %c8_i32_31 = arith.constant 8 : i32
      %56 = arith.muli %arg0, %c8_i32_31 : i32
      %c6_i32 = arith.constant 6 : i32
      %57 = arith.addi %56, %c6_i32 : i32
      %58 = arith.index_cast %57 : i32 to index
      %c0_32 = arith.constant 0 : index
      %59 = memref.load %arg2[%58, %c0_32] : memref<8x4xi32, #tpu.memory_space<smem>>
      %c8_i32_33 = arith.constant 8 : i32
      %60 = arith.muli %arg0, %c8_i32_33 : i32
      %c7_i32 = arith.constant 7 : i32
      %61 = arith.addi %60, %c7_i32 : i32
      %62 = arith.index_cast %61 : i32 to index
      %c0_34 = arith.constant 0 : index
      %63 = memref.load %arg2[%62, %c0_34] : memref<8x4xi32, #tpu.memory_space<smem>>
      %c8_i32_35 = arith.constant 8 : i32
      %64 = arith.muli %arg0, %c8_i32_35 : i32
      %c0_i32_36 = arith.constant 0 : i32
      %65 = arith.addi %64, %c0_i32_36 : i32
      %66 = arith.index_cast %65 : i32 to index
      %c1 = arith.constant 1 : index
      %67 = memref.load %arg2[%66, %c1] : memref<8x4xi32, #tpu.memory_space<smem>>
      %c8_i32_37 = arith.constant 8 : i32
      %68 = arith.muli %arg0, %c8_i32_37 : i32
      %c1_i32_38 = arith.constant 1 : i32
      %69 = arith.addi %68, %c1_i32_38 : i32
      %70 = arith.index_cast %69 : i32 to index
      %c1_39 = arith.constant 1 : index
      %71 = memref.load %arg2[%70, %c1_39] : memref<8x4xi32, #tpu.memory_space<smem>>
      %c8_i32_40 = arith.constant 8 : i32
      %72 = arith.muli %arg0, %c8_i32_40 : i32
      %c2_i32_41 = arith.constant 2 : i32
      %73 = arith.addi %72, %c2_i32_41 : i32
      %74 = arith.index_cast %73 : i32 to index
      %c1_42 = arith.constant 1 : index
      %75 = memref.load %arg2[%74, %c1_42] : memref<8x4xi32, #tpu.memory_space<smem>>
      %c8_i32_43 = arith.constant 8 : i32
      %76 = arith.muli %arg0, %c8_i32_43 : i32
      %c3_i32_44 = arith.constant 3 : i32
      %77 = arith.addi %76, %c3_i32_44 : i32
      %78 = arith.index_cast %77 : i32 to index
      %c1_45 = arith.constant 1 : index
      %79 = memref.load %arg2[%78, %c1_45] : memref<8x4xi32, #tpu.memory_space<smem>>
      %c8_i32_46 = arith.constant 8 : i32
      %80 = arith.muli %arg0, %c8_i32_46 : i32
      %c4_i32_47 = arith.constant 4 : i32
      %81 = arith.addi %80, %c4_i32_47 : i32
      %82 = arith.index_cast %81 : i32 to index
      %c1_48 = arith.constant 1 : index
      %83 = memref.load %arg2[%82, %c1_48] : memref<8x4xi32, #tpu.memory_space<smem>>
      %c8_i32_49 = arith.constant 8 : i32
      %84 = arith.muli %arg0, %c8_i32_49 : i32
      %c5_i32_50 = arith.constant 5 : i32
      %85 = arith.addi %84, %c5_i32_50 : i32
      %86 = arith.index_cast %85 : i32 to index
      %c1_51 = arith.constant 1 : index
      %87 = memref.load %arg2[%86, %c1_51] : memref<8x4xi32, #tpu.memory_space<smem>>
      %c8_i32_52 = arith.constant 8 : i32
      %88 = arith.muli %arg0, %c8_i32_52 : i32
      %c6_i32_53 = arith.constant 6 : i32
      %89 = arith.addi %88, %c6_i32_53 : i32
      %90 = arith.index_cast %89 : i32 to index
      %c1_54 = arith.constant 1 : index
      %91 = memref.load %arg2[%90, %c1_54] : memref<8x4xi32, #tpu.memory_space<smem>>
      %c8_i32_55 = arith.constant 8 : i32
      %92 = arith.muli %arg0, %c8_i32_55 : i32
      %c7_i32_56 = arith.constant 7 : i32
      %93 = arith.addi %92, %c7_i32_56 : i32
      %94 = arith.index_cast %93 : i32 to index
      %c1_57 = arith.constant 1 : index
      %95 = memref.load %arg2[%94, %c1_57] : memref<8x4xi32, #tpu.memory_space<smem>>
      %c8_i32_58 = arith.constant 8 : i32
      %96 = arith.muli %arg0, %c8_i32_58 : i32
      %c0_i32_59 = arith.constant 0 : i32
      %97 = arith.addi %96, %c0_i32_59 : i32
      %98 = arith.index_cast %97 : i32 to index
      %c2 = arith.constant 2 : index
      %99 = memref.load %arg2[%98, %c2] : memref<8x4xi32, #tpu.memory_space<smem>>
      %c8_i32_60 = arith.constant 8 : i32
      %100 = arith.muli %arg0, %c8_i32_60 : i32
      %c1_i32_61 = arith.constant 1 : i32
      %101 = arith.addi %100, %c1_i32_61 : i32
      %102 = arith.index_cast %101 : i32 to index
      %c2_62 = arith.constant 2 : index
      %103 = memref.load %arg2[%102, %c2_62] : memref<8x4xi32, #tpu.memory_space<smem>>
      %c8_i32_63 = arith.constant 8 : i32
      %104 = arith.muli %arg0, %c8_i32_63 : i32
      %c2_i32_64 = arith.constant 2 : i32
      %105 = arith.addi %104, %c2_i32_64 : i32
      %106 = arith.index_cast %105 : i32 to index
      %c2_65 = arith.constant 2 : index
      %107 = memref.load %arg2[%106, %c2_65] : memref<8x4xi32, #tpu.memory_space<smem>>
      %c8_i32_66 = arith.constant 8 : i32
      %108 = arith.muli %arg0, %c8_i32_66 : i32
      %c3_i32_67 = arith.constant 3 : i32
      %109 = arith.addi %108, %c3_i32_67 : i32
      %110 = arith.index_cast %109 : i32 to index
      %c2_68 = arith.constant 2 : index
      %111 = memref.load %arg2[%110, %c2_68] : memref<8x4xi32, #tpu.memory_space<smem>>
      %c8_i32_69 = arith.constant 8 : i32
      %112 = arith.muli %arg0, %c8_i32_69 : i32
      %c4_i32_70 = arith.constant 4 : i32
      %113 = arith.addi %112, %c4_i32_70 : i32
      %114 = arith.index_cast %113 : i32 to index
      %c2_71 = arith.constant 2 : index
      %115 = memref.load %arg2[%114, %c2_71] : memref<8x4xi32, #tpu.memory_space<smem>>
      %c8_i32_72 = arith.constant 8 : i32
      %116 = arith.muli %arg0, %c8_i32_72 : i32
      %c5_i32_73 = arith.constant 5 : i32
      %117 = arith.addi %116, %c5_i32_73 : i32
      %118 = arith.index_cast %117 : i32 to index
      %c2_74 = arith.constant 2 : index
      %119 = memref.load %arg2[%118, %c2_74] : memref<8x4xi32, #tpu.memory_space<smem>>
      %c8_i32_75 = arith.constant 8 : i32
      %120 = arith.muli %arg0, %c8_i32_75 : i32
      %c6_i32_76 = arith.constant 6 : i32
      %121 = arith.addi %120, %c6_i32_76 : i32
      %122 = arith.index_cast %121 : i32 to index
      %c2_77 = arith.constant 2 : index
      %123 = memref.load %arg2[%122, %c2_77] : memref<8x4xi32, #tpu.memory_space<smem>>
      %c8_i32_78 = arith.constant 8 : i32
      %124 = arith.muli %arg0, %c8_i32_78 : i32
      %c7_i32_79 = arith.constant 7 : i32
      %125 = arith.addi %124, %c7_i32_79 : i32
      %126 = arith.index_cast %125 : i32 to index
      %c2_80 = arith.constant 2 : index
      %127 = memref.load %arg2[%126, %c2_80] : memref<8x4xi32, #tpu.memory_space<smem>>
      %c8_i32_81 = arith.constant 8 : i32
      %128 = arith.muli %arg0, %c8_i32_81 : i32
      %c0_i32_82 = arith.constant 0 : i32
      %129 = arith.addi %128, %c0_i32_82 : i32
      %130 = arith.index_cast %129 : i32 to index
      %c3 = arith.constant 3 : index
      %131 = memref.load %arg2[%130, %c3] : memref<8x4xi32, #tpu.memory_space<smem>>
      %c8_i32_83 = arith.constant 8 : i32
      %132 = arith.muli %arg0, %c8_i32_83 : i32
      %c1_i32_84 = arith.constant 1 : i32
      %133 = arith.addi %132, %c1_i32_84 : i32
      %134 = arith.index_cast %133 : i32 to index
      %c3_85 = arith.constant 3 : index
      %135 = memref.load %arg2[%134, %c3_85] : memref<8x4xi32, #tpu.memory_space<smem>>
      %c8_i32_86 = arith.constant 8 : i32
      %136 = arith.muli %arg0, %c8_i32_86 : i32
      %c2_i32_87 = arith.constant 2 : i32
      %137 = arith.addi %136, %c2_i32_87 : i32
      %138 = arith.index_cast %137 : i32 to index
      %c3_88 = arith.constant 3 : index
      %139 = memref.load %arg2[%138, %c3_88] : memref<8x4xi32, #tpu.memory_space<smem>>
      %c8_i32_89 = arith.constant 8 : i32
      %140 = arith.muli %arg0, %c8_i32_89 : i32
      %c3_i32_90 = arith.constant 3 : i32
      %141 = arith.addi %140, %c3_i32_90 : i32
      %142 = arith.index_cast %141 : i32 to index
      %c3_91 = arith.constant 3 : index
      %143 = memref.load %arg2[%142, %c3_91] : memref<8x4xi32, #tpu.memory_space<smem>>
      %c8_i32_92 = arith.constant 8 : i32
      %144 = arith.muli %arg0, %c8_i32_92 : i32
      %c4_i32_93 = arith.constant 4 : i32
      %145 = arith.addi %144, %c4_i32_93 : i32
      %146 = arith.index_cast %145 : i32 to index
      %c3_94 = arith.constant 3 : index
      %147 = memref.load %arg2[%146, %c3_94] : memref<8x4xi32, #tpu.memory_space<smem>>
      %c8_i32_95 = arith.constant 8 : i32
      %148 = arith.muli %arg0, %c8_i32_95 : i32
      %c5_i32_96 = arith.constant 5 : i32
      %149 = arith.addi %148, %c5_i32_96 : i32
      %150 = arith.index_cast %149 : i32 to index
      %c3_97 = arith.constant 3 : index
      %151 = memref.load %arg2[%150, %c3_97] : memref<8x4xi32, #tpu.memory_space<smem>>
      %c8_i32_98 = arith.constant 8 : i32
      %152 = arith.muli %arg0, %c8_i32_98 : i32
      %c6_i32_99 = arith.constant 6 : i32
      %153 = arith.addi %152, %c6_i32_99 : i32
      %154 = arith.index_cast %153 : i32 to index
      %c3_100 = arith.constant 3 : index
      %155 = memref.load %arg2[%154, %c3_100] : memref<8x4xi32, #tpu.memory_space<smem>>
      %c8_i32_101 = arith.constant 8 : i32
      %156 = arith.muli %arg0, %c8_i32_101 : i32
      %c7_i32_102 = arith.constant 7 : i32
      %157 = arith.addi %156, %c7_i32_102 : i32
      %158 = arith.index_cast %157 : i32 to index
      %c3_103 = arith.constant 3 : index
      %159 = memref.load %arg2[%158, %c3_103] : memref<8x4xi32, #tpu.memory_space<smem>>
      %c0_i32_104 = arith.constant 0 : i32
      %c0_i32_105 = arith.constant 0 : i32
      %160 = tpu.memref_slice %arg3[%35, %c0_i32_105] : memref<1024x128xf32, #tpu.memory_space<any>> -> memref<1x128xf32, #tpu.memory_space<any>>
      %c0_i32_106 = arith.constant 0 : i32
      %c0_i32_107 = arith.constant 0 : i32
      %161 = tpu.memref_slice %arg7[%c0_i32_106, %c0_i32_107] : memref<32x128xf32, #tpu.memory_space<vmem>> -> memref<1x128xf32, #tpu.memory_space<vmem>>
      %162 = tpu.memref_slice %arg11[%c0_i32_104] : memref<32x!tpu.dma_semaphore, #tpu.memory_space<semaphore_mem>> -> memref<1x!tpu.dma_semaphore, #tpu.memory_space<semaphore_mem>>
      %163 = tpu.memref_squeeze %162 : memref<1x!tpu.dma_semaphore, #tpu.memory_space<semaphore_mem>> -> memref<!tpu.dma_semaphore, #tpu.memory_space<semaphore_mem>>
      tpu.enqueue_dma source(%160 : memref<1x128xf32, #tpu.memory_space<any>>) target(%161 : memref<1x128xf32, #tpu.memory_space<vmem>>) target_semaphore(%163 : memref<!tpu.dma_semaphore, #tpu.memory_space<semaphore_mem>>)
      %c1_i32_108 = arith.constant 1 : i32
      %c0_i32_109 = arith.constant 0 : i32
      %164 = tpu.memref_slice %arg3[%39, %c0_i32_109] : memref<1024x128xf32, #tpu.memory_space<any>> -> memref<1x128xf32, #tpu.memory_space<any>>
      %c1_i32_110 = arith.constant 1 : i32
      %c0_i32_111 = arith.constant 0 : i32
      %165 = tpu.memref_slice %arg7[%c1_i32_110, %c0_i32_111] : memref<32x128xf32, #tpu.memory_space<vmem>> -> memref<1x128xf32, #tpu.memory_space<vmem>>
      %166 = tpu.memref_slice %arg11[%c1_i32_108] : memref<32x!tpu.dma_semaphore, #tpu.memory_space<semaphore_mem>> -> memref<1x!tpu.dma_semaphore, #tpu.memory_space<semaphore_mem>>
      %167 = tpu.memref_squeeze %166 : memref<1x!tpu.dma_semaphore, #tpu.memory_space<semaphore_mem>> -> memref<!tpu.dma_semaphore, #tpu.memory_space<semaphore_mem>>
      tpu.enqueue_dma source(%164 : memref<1x128xf32, #tpu.memory_space<any>>) target(%165 : memref<1x128xf32, #tpu.memory_space<vmem>>) target_semaphore(%167 : memref<!tpu.dma_semaphore, #tpu.memory_space<semaphore_mem>>)
      %c2_i32_112 = arith.constant 2 : i32
      %c0_i32_113 = arith.constant 0 : i32
      %168 = tpu.memref_slice %arg3[%43, %c0_i32_113] : memref<1024x128xf32, #tpu.memory_space<any>> -> memref<1x128xf32, #tpu.memory_space<any>>
      %c2_i32_114 = arith.constant 2 : i32
      %c0_i32_115 = arith.constant 0 : i32
      %169 = tpu.memref_slice %arg7[%c2_i32_114, %c0_i32_115] : memref<32x128xf32, #tpu.memory_space<vmem>> -> memref<1x128xf32, #tpu.memory_space<vmem>>
      %170 = tpu.memref_slice %arg11[%c2_i32_112] : memref<32x!tpu.dma_semaphore, #tpu.memory_space<semaphore_mem>> -> memref<1x!tpu.dma_semaphore, #tpu.memory_space<semaphore_mem>>
      %171 = tpu.memref_squeeze %170 : memref<1x!tpu.dma_semaphore, #tpu.memory_space<semaphore_mem>> -> memref<!tpu.dma_semaphore, #tpu.memory_space<semaphore_mem>>
      tpu.enqueue_dma source(%168 : memref<1x128xf32, #tpu.memory_space<any>>) target(%169 : memref<1x128xf32, #tpu.memory_space<vmem>>) target_semaphore(%171 : memref<!tpu.dma_semaphore, #tpu.memory_space<semaphore_mem>>)
      %c3_i32_116 = arith.constant 3 : i32
      %c0_i32_117 = arith.constant 0 : i32
      %172 = tpu.memref_slice %arg3[%47, %c0_i32_117] : memref<1024x128xf32, #tpu.memory_space<any>> -> memref<1x128xf32, #tpu.memory_space<any>>
      %c3_i32_118 = arith.constant 3 : i32
      %c0_i32_119 = arith.constant 0 : i32
      %173 = tpu.memref_slice %arg7[%c3_i32_118, %c0_i32_119] : memref<32x128xf32, #tpu.memory_space<vmem>> -> memref<1x128xf32, #tpu.memory_space<vmem>>
      %174 = tpu.memref_slice %arg11[%c3_i32_116] : memref<32x!tpu.dma_semaphore, #tpu.memory_space<semaphore_mem>> -> memref<1x!tpu.dma_semaphore, #tpu.memory_space<semaphore_mem>>
      %175 = tpu.memref_squeeze %174 : memref<1x!tpu.dma_semaphore, #tpu.memory_space<semaphore_mem>> -> memref<!tpu.dma_semaphore, #tpu.memory_space<semaphore_mem>>
      tpu.enqueue_dma source(%172 : memref<1x128xf32, #tpu.memory_space<any>>) target(%173 : memref<1x128xf32, #tpu.memory_space<vmem>>) target_semaphore(%175 : memref<!tpu.dma_semaphore, #tpu.memory_space<semaphore_mem>>)
      %c4_i32_120 = arith.constant 4 : i32
      %c0_i32_121 = arith.constant 0 : i32
      %176 = tpu.memref_slice %arg3[%51, %c0_i32_121] : memref<1024x128xf32, #tpu.memory_space<any>> -> memref<1x128xf32, #tpu.memory_space<any>>
      %c4_i32_122 = arith.constant 4 : i32
      %c0_i32_123 = arith.constant 0 : i32
      %177 = tpu.memref_slice %arg7[%c4_i32_122, %c0_i32_123] : memref<32x128xf32, #tpu.memory_space<vmem>> -> memref<1x128xf32, #tpu.memory_space<vmem>>
      %178 = tpu.memref_slice %arg11[%c4_i32_120] : memref<32x!tpu.dma_semaphore, #tpu.memory_space<semaphore_mem>> -> memref<1x!tpu.dma_semaphore, #tpu.memory_space<semaphore_mem>>
      %179 = tpu.memref_squeeze %178 : memref<1x!tpu.dma_semaphore, #tpu.memory_space<semaphore_mem>> -> memref<!tpu.dma_semaphore, #tpu.memory_space<semaphore_mem>>
      tpu.enqueue_dma source(%176 : memref<1x128xf32, #tpu.memory_space<any>>) target(%177 : memref<1x128xf32, #tpu.memory_space<vmem>>) target_semaphore(%179 : memref<!tpu.dma_semaphore, #tpu.memory_space<semaphore_mem>>)
      %c5_i32_124 = arith.constant 5 : i32
      %c0_i32_125 = arith.constant 0 : i32
      %180 = tpu.memref_slice %arg3[%55, %c0_i32_125] : memref<1024x128xf32, #tpu.memory_space<any>> -> memref<1x128xf32, #tpu.memory_space<any>>
      %c5_i32_126 = arith.constant 5 : i32
      %c0_i32_127 = arith.constant 0 : i32
      %181 = tpu.memref_slice %arg7[%c5_i32_126, %c0_i32_127] : memref<32x128xf32, #tpu.memory_space<vmem>> -> memref<1x128xf32, #tpu.memory_space<vmem>>
      %182 = tpu.memref_slice %arg11[%c5_i32_124] : memref<32x!tpu.dma_semaphore, #tpu.memory_space<semaphore_mem>> -> memref<1x!tpu.dma_semaphore, #tpu.memory_space<semaphore_mem>>
      %183 = tpu.memref_squeeze %182 : memref<1x!tpu.dma_semaphore, #tpu.memory_space<semaphore_mem>> -> memref<!tpu.dma_semaphore, #tpu.memory_space<semaphore_mem>>
      tpu.enqueue_dma source(%180 : memref<1x128xf32, #tpu.memory_space<any>>) target(%181 : memref<1x128xf32, #tpu.memory_space<vmem>>) target_semaphore(%183 : memref<!tpu.dma_semaphore, #tpu.memory_space<semaphore_mem>>)
      %c6_i32_128 = arith.constant 6 : i32
      %c0_i32_129 = arith.constant 0 : i32
      %184 = tpu.memref_slice %arg3[%59, %c0_i32_129] : memref<1024x128xf32, #tpu.memory_space<any>> -> memref<1x128xf32, #tpu.memory_space<any>>
      %c6_i32_130 = arith.constant 6 : i32
      %c0_i32_131 = arith.constant 0 : i32
      %185 = tpu.memref_slice %arg7[%c6_i32_130, %c0_i32_131] : memref<32x128xf32, #tpu.memory_space<vmem>> -> memref<1x128xf32, #tpu.memory_space<vmem>>
      %186 = tpu.memref_slice %arg11[%c6_i32_128] : memref<32x!tpu.dma_semaphore, #tpu.memory_space<semaphore_mem>> -> memref<1x!tpu.dma_semaphore, #tpu.memory_space<semaphore_mem>>
      %187 = tpu.memref_squeeze %186 : memref<1x!tpu.dma_semaphore, #tpu.memory_space<semaphore_mem>> -> memref<!tpu.dma_semaphore, #tpu.memory_space<semaphore_mem>>
      tpu.enqueue_dma source(%184 : memref<1x128xf32, #tpu.memory_space<any>>) target(%185 : memref<1x128xf32, #tpu.memory_space<vmem>>) target_semaphore(%187 : memref<!tpu.dma_semaphore, #tpu.memory_space<semaphore_mem>>)
      %c7_i32_132 = arith.constant 7 : i32
      %c0_i32_133 = arith.constant 0 : i32
      %188 = tpu.memref_slice %arg3[%63, %c0_i32_133] : memref<1024x128xf32, #tpu.memory_space<any>> -> memref<1x128xf32, #tpu.memory_space<any>>
      %c7_i32_134 = arith.constant 7 : i32
      %c0_i32_135 = arith.constant 0 : i32
      %189 = tpu.memref_slice %arg7[%c7_i32_134, %c0_i32_135] : memref<32x128xf32, #tpu.memory_space<vmem>> -> memref<1x128xf32, #tpu.memory_space<vmem>>
      %190 = tpu.memref_slice %arg11[%c7_i32_132] : memref<32x!tpu.dma_semaphore, #tpu.memory_space<semaphore_mem>> -> memref<1x!tpu.dma_semaphore, #tpu.memory_space<semaphore_mem>>
      %191 = tpu.memref_squeeze %190 : memref<1x!tpu.dma_semaphore, #tpu.memory_space<semaphore_mem>> -> memref<!tpu.dma_semaphore, #tpu.memory_space<semaphore_mem>>
      tpu.enqueue_dma source(%188 : memref<1x128xf32, #tpu.memory_space<any>>) target(%189 : memref<1x128xf32, #tpu.memory_space<vmem>>) target_semaphore(%191 : memref<!tpu.dma_semaphore, #tpu.memory_space<semaphore_mem>>)
      %c8_i32_136 = arith.constant 8 : i32
      %c0_i32_137 = arith.constant 0 : i32
      %192 = tpu.memref_slice %arg3[%67, %c0_i32_137] : memref<1024x128xf32, #tpu.memory_space<any>> -> memref<1x128xf32, #tpu.memory_space<any>>
      %c8_i32_138 = arith.constant 8 : i32
      %c0_i32_139 = arith.constant 0 : i32
      %193 = tpu.memref_slice %arg7[%c8_i32_138, %c0_i32_139] : memref<32x128xf32, #tpu.memory_space<vmem>> -> memref<1x128xf32, #tpu.memory_space<vmem>>
      %194 = tpu.memref_slice %arg11[%c8_i32_136] : memref<32x!tpu.dma_semaphore, #tpu.memory_space<semaphore_mem>> -> memref<1x!tpu.dma_semaphore, #tpu.memory_space<semaphore_mem>>
      %195 = tpu.memref_squeeze %194 : memref<1x!tpu.dma_semaphore, #tpu.memory_space<semaphore_mem>> -> memref<!tpu.dma_semaphore, #tpu.memory_space<semaphore_mem>>
      tpu.enqueue_dma source(%192 : memref<1x128xf32, #tpu.memory_space<any>>) target(%193 : memref<1x128xf32, #tpu.memory_space<vmem>>) target_semaphore(%195 : memref<!tpu.dma_semaphore, #tpu.memory_space<semaphore_mem>>)
      %c9_i32 = arith.constant 9 : i32
      %c0_i32_140 = arith.constant 0 : i32
      %196 = tpu.memref_slice %arg3[%71, %c0_i32_140] : memref<1024x128xf32, #tpu.memory_space<any>> -> memref<1x128xf32, #tpu.memory_space<any>>
      %c9_i32_141 = arith.constant 9 : i32
      %c0_i32_142 = arith.constant 0 : i32
      %197 = tpu.memref_slice %arg7[%c9_i32_141, %c0_i32_142] : memref<32x128xf32, #tpu.memory_space<vmem>> -> memref<1x128xf32, #tpu.memory_space<vmem>>
      %198 = tpu.memref_slice %arg11[%c9_i32] : memref<32x!tpu.dma_semaphore, #tpu.memory_space<semaphore_mem>> -> memref<1x!tpu.dma_semaphore, #tpu.memory_space<semaphore_mem>>
      %199 = tpu.memref_squeeze %198 : memref<1x!tpu.dma_semaphore, #tpu.memory_space<semaphore_mem>> -> memref<!tpu.dma_semaphore, #tpu.memory_space<semaphore_mem>>
      tpu.enqueue_dma source(%196 : memref<1x128xf32, #tpu.memory_space<any>>) target(%197 : memref<1x128xf32, #tpu.memory_space<vmem>>) target_semaphore(%199 : memref<!tpu.dma_semaphore, #tpu.memory_space<semaphore_mem>>)
      %c10_i32 = arith.constant 10 : i32
      %c0_i32_143 = arith.constant 0 : i32
      %200 = tpu.memref_slice %arg3[%75, %c0_i32_143] : memref<1024x128xf32, #tpu.memory_space<any>> -> memref<1x128xf32, #tpu.memory_space<any>>
      %c10_i32_144 = arith.constant 10 : i32
      %c0_i32_145 = arith.constant 0 : i32
      %201 = tpu.memref_slice %arg7[%c10_i32_144, %c0_i32_145] : memref<32x128xf32, #tpu.memory_space<vmem>> -> memref<1x128xf32, #tpu.memory_space<vmem>>
      %202 = tpu.memref_slice %arg11[%c10_i32] : memref<32x!tpu.dma_semaphore, #tpu.memory_space<semaphore_mem>> -> memref<1x!tpu.dma_semaphore, #tpu.memory_space<semaphore_mem>>
      %203 = tpu.memref_squeeze %202 : memref<1x!tpu.dma_semaphore, #tpu.memory_space<semaphore_mem>> -> memref<!tpu.dma_semaphore, #tpu.memory_space<semaphore_mem>>
      tpu.enqueue_dma source(%200 : memref<1x128xf32, #tpu.memory_space<any>>) target(%201 : memref<1x128xf32, #tpu.memory_space<vmem>>) target_semaphore(%203 : memref<!tpu.dma_semaphore, #tpu.memory_space<semaphore_mem>>)
      %c11_i32 = arith.constant 11 : i32
      %c0_i32_146 = arith.constant 0 : i32
      %204 = tpu.memref_slice %arg3[%79, %c0_i32_146] : memref<1024x128xf32, #tpu.memory_space<any>> -> memref<1x128xf32, #tpu.memory_space<any>>
      %c11_i32_147 = arith.constant 11 : i32
      %c0_i32_148 = arith.constant 0 : i32
      %205 = tpu.memref_slice %arg7[%c11_i32_147, %c0_i32_148] : memref<32x128xf32, #tpu.memory_space<vmem>> -> memref<1x128xf32, #tpu.memory_space<vmem>>
      %206 = tpu.memref_slice %arg11[%c11_i32] : memref<32x!tpu.dma_semaphore, #tpu.memory_space<semaphore_mem>> -> memref<1x!tpu.dma_semaphore, #tpu.memory_space<semaphore_mem>>
      %207 = tpu.memref_squeeze %206 : memref<1x!tpu.dma_semaphore, #tpu.memory_space<semaphore_mem>> -> memref<!tpu.dma_semaphore, #tpu.memory_space<semaphore_mem>>
      tpu.enqueue_dma source(%204 : memref<1x128xf32, #tpu.memory_space<any>>) target(%205 : memref<1x128xf32, #tpu.memory_space<vmem>>) target_semaphore(%207 : memref<!tpu.dma_semaphore, #tpu.memory_space<semaphore_mem>>)
      %c12_i32 = arith.constant 12 : i32
      %c0_i32_149 = arith.constant 0 : i32
      %208 = tpu.memref_slice %arg3[%83, %c0_i32_149] : memref<1024x128xf32, #tpu.memory_space<any>> -> memref<1x128xf32, #tpu.memory_space<any>>
      %c12_i32_150 = arith.constant 12 : i32
      %c0_i32_151 = arith.constant 0 : i32
      %209 = tpu.memref_slice %arg7[%c12_i32_150, %c0_i32_151] : memref<32x128xf32, #tpu.memory_space<vmem>> -> memref<1x128xf32, #tpu.memory_space<vmem>>
      %210 = tpu.memref_slice %arg11[%c12_i32] : memref<32x!tpu.dma_semaphore, #tpu.memory_space<semaphore_mem>> -> memref<1x!tpu.dma_semaphore, #tpu.memory_space<semaphore_mem>>
      %211 = tpu.memref_squeeze %210 : memref<1x!tpu.dma_semaphore, #tpu.memory_space<semaphore_mem>> -> memref<!tpu.dma_semaphore, #tpu.memory_space<semaphore_mem>>
      tpu.enqueue_dma source(%208 : memref<1x128xf32, #tpu.memory_space<any>>) target(%209 : memref<1x128xf32, #tpu.memory_space<vmem>>) target_semaphore(%211 : memref<!tpu.dma_semaphore, #tpu.memory_space<semaphore_mem>>)
      %c13_i32 = arith.constant 13 : i32
      %c0_i32_152 = arith.constant 0 : i32
      %212 = tpu.memref_slice %arg3[%87, %c0_i32_152] : memref<1024x128xf32, #tpu.memory_space<any>> -> memref<1x128xf32, #tpu.memory_space<any>>
      %c13_i32_153 = arith.constant 13 : i32
      %c0_i32_154 = arith.constant 0 : i32
      %213 = tpu.memref_slice %arg7[%c13_i32_153, %c0_i32_154] : memref<32x128xf32, #tpu.memory_space<vmem>> -> memref<1x128xf32, #tpu.memory_space<vmem>>
      %214 = tpu.memref_slice %arg11[%c13_i32] : memref<32x!tpu.dma_semaphore, #tpu.memory_space<semaphore_mem>> -> memref<1x!tpu.dma_semaphore, #tpu.memory_space<semaphore_mem>>
      %215 = tpu.memref_squeeze %214 : memref<1x!tpu.dma_semaphore, #tpu.memory_space<semaphore_mem>> -> memref<!tpu.dma_semaphore, #tpu.memory_space<semaphore_mem>>
      tpu.enqueue_dma source(%212 : memref<1x128xf32, #tpu.memory_space<any>>) target(%213 : memref<1x128xf32, #tpu.memory_space<vmem>>) target_semaphore(%215 : memref<!tpu.dma_semaphore, #tpu.memory_space<semaphore_mem>>)
      %c14_i32 = arith.constant 14 : i32
      %c0_i32_155 = arith.constant 0 : i32
      %216 = tpu.memref_slice %arg3[%91, %c0_i32_155] : memref<1024x128xf32, #tpu.memory_space<any>> -> memref<1x128xf32, #tpu.memory_space<any>>
      %c14_i32_156 = arith.constant 14 : i32
      %c0_i32_157 = arith.constant 0 : i32
      %217 = tpu.memref_slice %arg7[%c14_i32_156, %c0_i32_157] : memref<32x128xf32, #tpu.memory_space<vmem>> -> memref<1x128xf32, #tpu.memory_space<vmem>>
      %218 = tpu.memref_slice %arg11[%c14_i32] : memref<32x!tpu.dma_semaphore, #tpu.memory_space<semaphore_mem>> -> memref<1x!tpu.dma_semaphore, #tpu.memory_space<semaphore_mem>>
      %219 = tpu.memref_squeeze %218 : memref<1x!tpu.dma_semaphore, #tpu.memory_space<semaphore_mem>> -> memref<!tpu.dma_semaphore, #tpu.memory_space<semaphore_mem>>
      tpu.enqueue_dma source(%216 : memref<1x128xf32, #tpu.memory_space<any>>) target(%217 : memref<1x128xf32, #tpu.memory_space<vmem>>) target_semaphore(%219 : memref<!tpu.dma_semaphore, #tpu.memory_space<semaphore_mem>>)
      %c15_i32 = arith.constant 15 : i32
      %c0_i32_158 = arith.constant 0 : i32
      %220 = tpu.memref_slice %arg3[%95, %c0_i32_158] : memref<1024x128xf32, #tpu.memory_space<any>> -> memref<1x128xf32, #tpu.memory_space<any>>
      %c15_i32_159 = arith.constant 15 : i32
      %c0_i32_160 = arith.constant 0 : i32
      %221 = tpu.memref_slice %arg7[%c15_i32_159, %c0_i32_160] : memref<32x128xf32, #tpu.memory_space<vmem>> -> memref<1x128xf32, #tpu.memory_space<vmem>>
      %222 = tpu.memref_slice %arg11[%c15_i32] : memref<32x!tpu.dma_semaphore, #tpu.memory_space<semaphore_mem>> -> memref<1x!tpu.dma_semaphore, #tpu.memory_space<semaphore_mem>>
      %223 = tpu.memref_squeeze %222 : memref<1x!tpu.dma_semaphore, #tpu.memory_space<semaphore_mem>> -> memref<!tpu.dma_semaphore, #tpu.memory_space<semaphore_mem>>
      tpu.enqueue_dma source(%220 : memref<1x128xf32, #tpu.memory_space<any>>) target(%221 : memref<1x128xf32, #tpu.memory_space<vmem>>) target_semaphore(%223 : memref<!tpu.dma_semaphore, #tpu.memory_space<semaphore_mem>>)
      %c16_i32 = arith.constant 16 : i32
      %c0_i32_161 = arith.constant 0 : i32
      %224 = tpu.memref_slice %arg3[%99, %c0_i32_161] : memref<1024x128xf32, #tpu.memory_space<any>> -> memref<1x128xf32, #tpu.memory_space<any>>
      %c16_i32_162 = arith.constant 16 : i32
      %c0_i32_163 = arith.constant 0 : i32
      %225 = tpu.memref_slice %arg7[%c16_i32_162, %c0_i32_163] : memref<32x128xf32, #tpu.memory_space<vmem>> -> memref<1x128xf32, #tpu.memory_space<vmem>>
      %226 = tpu.memref_slice %arg11[%c16_i32] : memref<32x!tpu.dma_semaphore, #tpu.memory_space<semaphore_mem>> -> memref<1x!tpu.dma_semaphore, #tpu.memory_space<semaphore_mem>>
      %227 = tpu.memref_squeeze %226 : memref<1x!tpu.dma_semaphore, #tpu.memory_space<semaphore_mem>> -> memref<!tpu.dma_semaphore, #tpu.memory_space<semaphore_mem>>
      tpu.enqueue_dma source(%224 : memref<1x128xf32, #tpu.memory_space<any>>) target(%225 : memref<1x128xf32, #tpu.memory_space<vmem>>) target_semaphore(%227 : memref<!tpu.dma_semaphore, #tpu.memory_space<semaphore_mem>>)
      %c17_i32 = arith.constant 17 : i32
      %c0_i32_164 = arith.constant 0 : i32
      %228 = tpu.memref_slice %arg3[%103, %c0_i32_164] : memref<1024x128xf32, #tpu.memory_space<any>> -> memref<1x128xf32, #tpu.memory_space<any>>
      %c17_i32_165 = arith.constant 17 : i32
      %c0_i32_166 = arith.constant 0 : i32
      %229 = tpu.memref_slice %arg7[%c17_i32_165, %c0_i32_166] : memref<32x128xf32, #tpu.memory_space<vmem>> -> memref<1x128xf32, #tpu.memory_space<vmem>>
      %230 = tpu.memref_slice %arg11[%c17_i32] : memref<32x!tpu.dma_semaphore, #tpu.memory_space<semaphore_mem>> -> memref<1x!tpu.dma_semaphore, #tpu.memory_space<semaphore_mem>>
      %231 = tpu.memref_squeeze %230 : memref<1x!tpu.dma_semaphore, #tpu.memory_space<semaphore_mem>> -> memref<!tpu.dma_semaphore, #tpu.memory_space<semaphore_mem>>
      tpu.enqueue_dma source(%228 : memref<1x128xf32, #tpu.memory_space<any>>) target(%229 : memref<1x128xf32, #tpu.memory_space<vmem>>) target_semaphore(%231 : memref<!tpu.dma_semaphore, #tpu.memory_space<semaphore_mem>>)
      %c18_i32 = arith.constant 18 : i32
      %c0_i32_167 = arith.constant 0 : i32
      %232 = tpu.memref_slice %arg3[%107, %c0_i32_167] : memref<1024x128xf32, #tpu.memory_space<any>> -> memref<1x128xf32, #tpu.memory_space<any>>
      %c18_i32_168 = arith.constant 18 : i32
      %c0_i32_169 = arith.constant 0 : i32
      %233 = tpu.memref_slice %arg7[%c18_i32_168, %c0_i32_169] : memref<32x128xf32, #tpu.memory_space<vmem>> -> memref<1x128xf32, #tpu.memory_space<vmem>>
      %234 = tpu.memref_slice %arg11[%c18_i32] : memref<32x!tpu.dma_semaphore, #tpu.memory_space<semaphore_mem>> -> memref<1x!tpu.dma_semaphore, #tpu.memory_space<semaphore_mem>>
      %235 = tpu.memref_squeeze %234 : memref<1x!tpu.dma_semaphore, #tpu.memory_space<semaphore_mem>> -> memref<!tpu.dma_semaphore, #tpu.memory_space<semaphore_mem>>
      tpu.enqueue_dma source(%232 : memref<1x128xf32, #tpu.memory_space<any>>) target(%233 : memref<1x128xf32, #tpu.memory_space<vmem>>) target_semaphore(%235 : memref<!tpu.dma_semaphore, #tpu.memory_space<semaphore_mem>>)
      %c19_i32 = arith.constant 19 : i32
      %c0_i32_170 = arith.constant 0 : i32
      %236 = tpu.memref_slice %arg3[%111, %c0_i32_170] : memref<1024x128xf32, #tpu.memory_space<any>> -> memref<1x128xf32, #tpu.memory_space<any>>
      %c19_i32_171 = arith.constant 19 : i32
      %c0_i32_172 = arith.constant 0 : i32
      %237 = tpu.memref_slice %arg7[%c19_i32_171, %c0_i32_172] : memref<32x128xf32, #tpu.memory_space<vmem>> -> memref<1x128xf32, #tpu.memory_space<vmem>>
      %238 = tpu.memref_slice %arg11[%c19_i32] : memref<32x!tpu.dma_semaphore, #tpu.memory_space<semaphore_mem>> -> memref<1x!tpu.dma_semaphore, #tpu.memory_space<semaphore_mem>>
      %239 = tpu.memref_squeeze %238 : memref<1x!tpu.dma_semaphore, #tpu.memory_space<semaphore_mem>> -> memref<!tpu.dma_semaphore, #tpu.memory_space<semaphore_mem>>
      tpu.enqueue_dma source(%236 : memref<1x128xf32, #tpu.memory_space<any>>) target(%237 : memref<1x128xf32, #tpu.memory_space<vmem>>) target_semaphore(%239 : memref<!tpu.dma_semaphore, #tpu.memory_space<semaphore_mem>>)
      %c20_i32 = arith.constant 20 : i32
      %c0_i32_173 = arith.constant 0 : i32
      %240 = tpu.memref_slice %arg3[%115, %c0_i32_173] : memref<1024x128xf32, #tpu.memory_space<any>> -> memref<1x128xf32, #tpu.memory_space<any>>
      %c20_i32_174 = arith.constant 20 : i32
      %c0_i32_175 = arith.constant 0 : i32
      %241 = tpu.memref_slice %arg7[%c20_i32_174, %c0_i32_175] : memref<32x128xf32, #tpu.memory_space<vmem>> -> memref<1x128xf32, #tpu.memory_space<vmem>>
      %242 = tpu.memref_slice %arg11[%c20_i32] : memref<32x!tpu.dma_semaphore, #tpu.memory_space<semaphore_mem>> -> memref<1x!tpu.dma_semaphore, #tpu.memory_space<semaphore_mem>>
      %243 = tpu.memref_squeeze %242 : memref<1x!tpu.dma_semaphore, #tpu.memory_space<semaphore_mem>> -> memref<!tpu.dma_semaphore, #tpu.memory_space<semaphore_mem>>
      tpu.enqueue_dma source(%240 : memref<1x128xf32, #tpu.memory_space<any>>) target(%241 : memref<1x128xf32, #tpu.memory_space<vmem>>) target_semaphore(%243 : memref<!tpu.dma_semaphore, #tpu.memory_space<semaphore_mem>>)
      %c21_i32 = arith.constant 21 : i32
      %c0_i32_176 = arith.constant 0 : i32
      %244 = tpu.memref_slice %arg3[%119, %c0_i32_176] : memref<1024x128xf32, #tpu.memory_space<any>> -> memref<1x128xf32, #tpu.memory_space<any>>
      %c21_i32_177 = arith.constant 21 : i32
      %c0_i32_178 = arith.constant 0 : i32
      %245 = tpu.memref_slice %arg7[%c21_i32_177, %c0_i32_178] : memref<32x128xf32, #tpu.memory_space<vmem>> -> memref<1x128xf32, #tpu.memory_space<vmem>>
      %246 = tpu.memref_slice %arg11[%c21_i32] : memref<32x!tpu.dma_semaphore, #tpu.memory_space<semaphore_mem>> -> memref<1x!tpu.dma_semaphore, #tpu.memory_space<semaphore_mem>>
      %247 = tpu.memref_squeeze %246 : memref<1x!tpu.dma_semaphore, #tpu.memory_space<semaphore_mem>> -> memref<!tpu.dma_semaphore, #tpu.memory_space<semaphore_mem>>
      tpu.enqueue_dma source(%244 : memref<1x128xf32, #tpu.memory_space<any>>) target(%245 : memref<1x128xf32, #tpu.memory_space<vmem>>) target_semaphore(%247 : memref<!tpu.dma_semaphore, #tpu.memory_space<semaphore_mem>>)
      %c22_i32 = arith.constant 22 : i32
      %c0_i32_179 = arith.constant 0 : i32
      %248 = tpu.memref_slice %arg3[%123, %c0_i32_179] : memref<1024x128xf32, #tpu.memory_space<any>> -> memref<1x128xf32, #tpu.memory_space<any>>
      %c22_i32_180 = arith.constant 22 : i32
      %c0_i32_181 = arith.constant 0 : i32
      %249 = tpu.memref_slice %arg7[%c22_i32_180, %c0_i32_181] : memref<32x128xf32, #tpu.memory_space<vmem>> -> memref<1x128xf32, #tpu.memory_space<vmem>>
      %250 = tpu.memref_slice %arg11[%c22_i32] : memref<32x!tpu.dma_semaphore, #tpu.memory_space<semaphore_mem>> -> memref<1x!tpu.dma_semaphore, #tpu.memory_space<semaphore_mem>>
      %251 = tpu.memref_squeeze %250 : memref<1x!tpu.dma_semaphore, #tpu.memory_space<semaphore_mem>> -> memref<!tpu.dma_semaphore, #tpu.memory_space<semaphore_mem>>
      tpu.enqueue_dma source(%248 : memref<1x128xf32, #tpu.memory_space<any>>) target(%249 : memref<1x128xf32, #tpu.memory_space<vmem>>) target_semaphore(%251 : memref<!tpu.dma_semaphore, #tpu.memory_space<semaphore_mem>>)
      %c23_i32 = arith.constant 23 : i32
      %c0_i32_182 = arith.constant 0 : i32
      %252 = tpu.memref_slice %arg3[%127, %c0_i32_182] : memref<1024x128xf32, #tpu.memory_space<any>> -> memref<1x128xf32, #tpu.memory_space<any>>
      %c23_i32_183 = arith.constant 23 : i32
      %c0_i32_184 = arith.constant 0 : i32
      %253 = tpu.memref_slice %arg7[%c23_i32_183, %c0_i32_184] : memref<32x128xf32, #tpu.memory_space<vmem>> -> memref<1x128xf32, #tpu.memory_space<vmem>>
      %254 = tpu.memref_slice %arg11[%c23_i32] : memref<32x!tpu.dma_semaphore, #tpu.memory_space<semaphore_mem>> -> memref<1x!tpu.dma_semaphore, #tpu.memory_space<semaphore_mem>>
      %255 = tpu.memref_squeeze %254 : memref<1x!tpu.dma_semaphore, #tpu.memory_space<semaphore_mem>> -> memref<!tpu.dma_semaphore, #tpu.memory_space<semaphore_mem>>
      tpu.enqueue_dma source(%252 : memref<1x128xf32, #tpu.memory_space<any>>) target(%253 : memref<1x128xf32, #tpu.memory_space<vmem>>) target_semaphore(%255 : memref<!tpu.dma_semaphore, #tpu.memory_space<semaphore_mem>>)
      %c24_i32 = arith.constant 24 : i32
      %c0_i32_185 = arith.constant 0 : i32
      %256 = tpu.memref_slice %arg3[%131, %c0_i32_185] : memref<1024x128xf32, #tpu.memory_space<any>> -> memref<1x128xf32, #tpu.memory_space<any>>
      %c24_i32_186 = arith.constant 24 : i32
      %c0_i32_187 = arith.constant 0 : i32
      %257 = tpu.memref_slice %arg7[%c24_i32_186, %c0_i32_187] : memref<32x128xf32, #tpu.memory_space<vmem>> -> memref<1x128xf32, #tpu.memory_space<vmem>>
      %258 = tpu.memref_slice %arg11[%c24_i32] : memref<32x!tpu.dma_semaphore, #tpu.memory_space<semaphore_mem>> -> memref<1x!tpu.dma_semaphore, #tpu.memory_space<semaphore_mem>>
      %259 = tpu.memref_squeeze %258 : memref<1x!tpu.dma_semaphore, #tpu.memory_space<semaphore_mem>> -> memref<!tpu.dma_semaphore, #tpu.memory_space<semaphore_mem>>
      tpu.enqueue_dma source(%256 : memref<1x128xf32, #tpu.memory_space<any>>) target(%257 : memref<1x128xf32, #tpu.memory_space<vmem>>) target_semaphore(%259 : memref<!tpu.dma_semaphore, #tpu.memory_space<semaphore_mem>>)
      %c25_i32 = arith.constant 25 : i32
      %c0_i32_188 = arith.constant 0 : i32
      %260 = tpu.memref_slice %arg3[%135, %c0_i32_188] : memref<1024x128xf32, #tpu.memory_space<any>> -> memref<1x128xf32, #tpu.memory_space<any>>
      %c25_i32_189 = arith.constant 25 : i32
      %c0_i32_190 = arith.constant 0 : i32
      %261 = tpu.memref_slice %arg7[%c25_i32_189, %c0_i32_190] : memref<32x128xf32, #tpu.memory_space<vmem>> -> memref<1x128xf32, #tpu.memory_space<vmem>>
      %262 = tpu.memref_slice %arg11[%c25_i32] : memref<32x!tpu.dma_semaphore, #tpu.memory_space<semaphore_mem>> -> memref<1x!tpu.dma_semaphore, #tpu.memory_space<semaphore_mem>>
      %263 = tpu.memref_squeeze %262 : memref<1x!tpu.dma_semaphore, #tpu.memory_space<semaphore_mem>> -> memref<!tpu.dma_semaphore, #tpu.memory_space<semaphore_mem>>
      tpu.enqueue_dma source(%260 : memref<1x128xf32, #tpu.memory_space<any>>) target(%261 : memref<1x128xf32, #tpu.memory_space<vmem>>) target_semaphore(%263 : memref<!tpu.dma_semaphore, #tpu.memory_space<semaphore_mem>>)
      %c26_i32 = arith.constant 26 : i32
      %c0_i32_191 = arith.constant 0 : i32
      %264 = tpu.memref_slice %arg3[%139, %c0_i32_191] : memref<1024x128xf32, #tpu.memory_space<any>> -> memref<1x128xf32, #tpu.memory_space<any>>
      %c26_i32_192 = arith.constant 26 : i32
      %c0_i32_193 = arith.constant 0 : i32
      %265 = tpu.memref_slice %arg7[%c26_i32_192, %c0_i32_193] : memref<32x128xf32, #tpu.memory_space<vmem>> -> memref<1x128xf32, #tpu.memory_space<vmem>>
      %266 = tpu.memref_slice %arg11[%c26_i32] : memref<32x!tpu.dma_semaphore, #tpu.memory_space<semaphore_mem>> -> memref<1x!tpu.dma_semaphore, #tpu.memory_space<semaphore_mem>>
      %267 = tpu.memref_squeeze %266 : memref<1x!tpu.dma_semaphore, #tpu.memory_space<semaphore_mem>> -> memref<!tpu.dma_semaphore, #tpu.memory_space<semaphore_mem>>
      tpu.enqueue_dma source(%264 : memref<1x128xf32, #tpu.memory_space<any>>) target(%265 : memref<1x128xf32, #tpu.memory_space<vmem>>) target_semaphore(%267 : memref<!tpu.dma_semaphore, #tpu.memory_space<semaphore_mem>>)
      %c27_i32 = arith.constant 27 : i32
      %c0_i32_194 = arith.constant 0 : i32
      %268 = tpu.memref_slice %arg3[%143, %c0_i32_194] : memref<1024x128xf32, #tpu.memory_space<any>> -> memref<1x128xf32, #tpu.memory_space<any>>
      %c27_i32_195 = arith.constant 27 : i32
      %c0_i32_196 = arith.constant 0 : i32
      %269 = tpu.memref_slice %arg7[%c27_i32_195, %c0_i32_196] : memref<32x128xf32, #tpu.memory_space<vmem>> -> memref<1x128xf32, #tpu.memory_space<vmem>>
      %270 = tpu.memref_slice %arg11[%c27_i32] : memref<32x!tpu.dma_semaphore, #tpu.memory_space<semaphore_mem>> -> memref<1x!tpu.dma_semaphore, #tpu.memory_space<semaphore_mem>>
      %271 = tpu.memref_squeeze %270 : memref<1x!tpu.dma_semaphore, #tpu.memory_space<semaphore_mem>> -> memref<!tpu.dma_semaphore, #tpu.memory_space<semaphore_mem>>
      tpu.enqueue_dma source(%268 : memref<1x128xf32, #tpu.memory_space<any>>) target(%269 : memref<1x128xf32, #tpu.memory_space<vmem>>) target_semaphore(%271 : memref<!tpu.dma_semaphore, #tpu.memory_space<semaphore_mem>>)
      %c28_i32 = arith.constant 28 : i32
      %c0_i32_197 = arith.constant 0 : i32
      %272 = tpu.memref_slice %arg3[%147, %c0_i32_197] : memref<1024x128xf32, #tpu.memory_space<any>> -> memref<1x128xf32, #tpu.memory_space<any>>
      %c28_i32_198 = arith.constant 28 : i32
      %c0_i32_199 = arith.constant 0 : i32
      %273 = tpu.memref_slice %arg7[%c28_i32_198, %c0_i32_199] : memref<32x128xf32, #tpu.memory_space<vmem>> -> memref<1x128xf32, #tpu.memory_space<vmem>>
      %274 = tpu.memref_slice %arg11[%c28_i32] : memref<32x!tpu.dma_semaphore, #tpu.memory_space<semaphore_mem>> -> memref<1x!tpu.dma_semaphore, #tpu.memory_space<semaphore_mem>>
      %275 = tpu.memref_squeeze %274 : memref<1x!tpu.dma_semaphore, #tpu.memory_space<semaphore_mem>> -> memref<!tpu.dma_semaphore, #tpu.memory_space<semaphore_mem>>
      tpu.enqueue_dma source(%272 : memref<1x128xf32, #tpu.memory_space<any>>) target(%273 : memref<1x128xf32, #tpu.memory_space<vmem>>) target_semaphore(%275 : memref<!tpu.dma_semaphore, #tpu.memory_space<semaphore_mem>>)
      %c29_i32 = arith.constant 29 : i32
      %c0_i32_200 = arith.constant 0 : i32
      %276 = tpu.memref_slice %arg3[%151, %c0_i32_200] : memref<1024x128xf32, #tpu.memory_space<any>> -> memref<1x128xf32, #tpu.memory_space<any>>
      %c29_i32_201 = arith.constant 29 : i32
      %c0_i32_202 = arith.constant 0 : i32
      %277 = tpu.memref_slice %arg7[%c29_i32_201, %c0_i32_202] : memref<32x128xf32, #tpu.memory_space<vmem>> -> memref<1x128xf32, #tpu.memory_space<vmem>>
      %278 = tpu.memref_slice %arg11[%c29_i32] : memref<32x!tpu.dma_semaphore, #tpu.memory_space<semaphore_mem>> -> memref<1x!tpu.dma_semaphore, #tpu.memory_space<semaphore_mem>>
      %279 = tpu.memref_squeeze %278 : memref<1x!tpu.dma_semaphore, #tpu.memory_space<semaphore_mem>> -> memref<!tpu.dma_semaphore, #tpu.memory_space<semaphore_mem>>
      tpu.enqueue_dma source(%276 : memref<1x128xf32, #tpu.memory_space<any>>) target(%277 : memref<1x128xf32, #tpu.memory_space<vmem>>) target_semaphore(%279 : memref<!tpu.dma_semaphore, #tpu.memory_space<semaphore_mem>>)
      %c30_i32 = arith.constant 30 : i32
      %c0_i32_203 = arith.constant 0 : i32
      %280 = tpu.memref_slice %arg3[%155, %c0_i32_203] : memref<1024x128xf32, #tpu.memory_space<any>> -> memref<1x128xf32, #tpu.memory_space<any>>
      %c30_i32_204 = arith.constant 30 : i32
      %c0_i32_205 = arith.constant 0 : i32
      %281 = tpu.memref_slice %arg7[%c30_i32_204, %c0_i32_205] : memref<32x128xf32, #tpu.memory_space<vmem>> -> memref<1x128xf32, #tpu.memory_space<vmem>>
      %282 = tpu.memref_slice %arg11[%c30_i32] : memref<32x!tpu.dma_semaphore, #tpu.memory_space<semaphore_mem>> -> memref<1x!tpu.dma_semaphore, #tpu.memory_space<semaphore_mem>>
      %283 = tpu.memref_squeeze %282 : memref<1x!tpu.dma_semaphore, #tpu.memory_space<semaphore_mem>> -> memref<!tpu.dma_semaphore, #tpu.memory_space<semaphore_mem>>
      tpu.enqueue_dma source(%280 : memref<1x128xf32, #tpu.memory_space<any>>) target(%281 : memref<1x128xf32, #tpu.memory_space<vmem>>) target_semaphore(%283 : memref<!tpu.dma_semaphore, #tpu.memory_space<semaphore_mem>>)
      %c31_i32 = arith.constant 31 : i32
      %c0_i32_206 = arith.constant 0 : i32
      %284 = tpu.memref_slice %arg3[%159, %c0_i32_206] : memref<1024x128xf32, #tpu.memory_space<any>> -> memref<1x128xf32, #tpu.memory_space<any>>
      %c31_i32_207 = arith.constant 31 : i32
      %c0_i32_208 = arith.constant 0 : i32
      %285 = tpu.memref_slice %arg7[%c31_i32_207, %c0_i32_208] : memref<32x128xf32, #tpu.memory_space<vmem>> -> memref<1x128xf32, #tpu.memory_space<vmem>>
      %286 = tpu.memref_slice %arg11[%c31_i32] : memref<32x!tpu.dma_semaphore, #tpu.memory_space<semaphore_mem>> -> memref<1x!tpu.dma_semaphore, #tpu.memory_space<semaphore_mem>>
      %287 = tpu.memref_squeeze %286 : memref<1x!tpu.dma_semaphore, #tpu.memory_space<semaphore_mem>> -> memref<!tpu.dma_semaphore, #tpu.memory_space<semaphore_mem>>
      tpu.enqueue_dma source(%284 : memref<1x128xf32, #tpu.memory_space<any>>) target(%285 : memref<1x128xf32, #tpu.memory_space<vmem>>) target_semaphore(%287 : memref<!tpu.dma_semaphore, #tpu.memory_space<semaphore_mem>>)
      %c0_i32_209 = arith.constant 0 : i32
      %c0_i32_210 = arith.constant 0 : i32
      %288 = tpu.memref_slice %arg3[%35, %c0_i32_210] : memref<1024x128xf32, #tpu.memory_space<any>> -> memref<1x128xf32, #tpu.memory_space<any>>
      %c0_i32_211 = arith.constant 0 : i32
      %c0_i32_212 = arith.constant 0 : i32
      %289 = tpu.memref_slice %arg7[%c0_i32_211, %c0_i32_212] : memref<32x128xf32, #tpu.memory_space<vmem>> -> memref<1x128xf32, #tpu.memory_space<vmem>>
      %290 = tpu.memref_slice %arg11[%c0_i32_209] : memref<32x!tpu.dma_semaphore, #tpu.memory_space<semaphore_mem>> -> memref<1x!tpu.dma_semaphore, #tpu.memory_space<semaphore_mem>>
      %291 = tpu.memref_squeeze %290 : memref<1x!tpu.dma_semaphore, #tpu.memory_space<semaphore_mem>> -> memref<!tpu.dma_semaphore, #tpu.memory_space<semaphore_mem>>
      tpu.wait_dma2 semaphore(%291 : memref<!tpu.dma_semaphore, #tpu.memory_space<semaphore_mem>>) src(%288 : memref<1x128xf32, #tpu.memory_space<any>>) dst(%289 : memref<1x128xf32, #tpu.memory_space<vmem>>)
      %c1_i32_213 = arith.constant 1 : i32
      %c0_i32_214 = arith.constant 0 : i32
      %292 = tpu.memref_slice %arg3[%39, %c0_i32_214] : memref<1024x128xf32, #tpu.memory_space<any>> -> memref<1x128xf32, #tpu.memory_space<any>>
      %c1_i32_215 = arith.constant 1 : i32
      %c0_i32_216 = arith.constant 0 : i32
      %293 = tpu.memref_slice %arg7[%c1_i32_215, %c0_i32_216] : memref<32x128xf32, #tpu.memory_space<vmem>> -> memref<1x128xf32, #tpu.memory_space<vmem>>
      %294 = tpu.memref_slice %arg11[%c1_i32_213] : memref<32x!tpu.dma_semaphore, #tpu.memory_space<semaphore_mem>> -> memref<1x!tpu.dma_semaphore, #tpu.memory_space<semaphore_mem>>
      %295 = tpu.memref_squeeze %294 : memref<1x!tpu.dma_semaphore, #tpu.memory_space<semaphore_mem>> -> memref<!tpu.dma_semaphore, #tpu.memory_space<semaphore_mem>>
      tpu.wait_dma2 semaphore(%295 : memref<!tpu.dma_semaphore, #tpu.memory_space<semaphore_mem>>) src(%292 : memref<1x128xf32, #tpu.memory_space<any>>) dst(%293 : memref<1x128xf32, #tpu.memory_space<vmem>>)
      %c2_i32_217 = arith.constant 2 : i32
      %c0_i32_218 = arith.constant 0 : i32
      %296 = tpu.memref_slice %arg3[%43, %c0_i32_218] : memref<1024x128xf32, #tpu.memory_space<any>> -> memref<1x128xf32, #tpu.memory_space<any>>
      %c2_i32_219 = arith.constant 2 : i32
      %c0_i32_220 = arith.constant 0 : i32
      %297 = tpu.memref_slice %arg7[%c2_i32_219, %c0_i32_220] : memref<32x128xf32, #tpu.memory_space<vmem>> -> memref<1x128xf32, #tpu.memory_space<vmem>>
      %298 = tpu.memref_slice %arg11[%c2_i32_217] : memref<32x!tpu.dma_semaphore, #tpu.memory_space<semaphore_mem>> -> memref<1x!tpu.dma_semaphore, #tpu.memory_space<semaphore_mem>>
      %299 = tpu.memref_squeeze %298 : memref<1x!tpu.dma_semaphore, #tpu.memory_space<semaphore_mem>> -> memref<!tpu.dma_semaphore, #tpu.memory_space<semaphore_mem>>
      tpu.wait_dma2 semaphore(%299 : memref<!tpu.dma_semaphore, #tpu.memory_space<semaphore_mem>>) src(%296 : memref<1x128xf32, #tpu.memory_space<any>>) dst(%297 : memref<1x128xf32, #tpu.memory_space<vmem>>)
      %c3_i32_221 = arith.constant 3 : i32
      %c0_i32_222 = arith.constant 0 : i32
      %300 = tpu.memref_slice %arg3[%47, %c0_i32_222] : memref<1024x128xf32, #tpu.memory_space<any>> -> memref<1x128xf32, #tpu.memory_space<any>>
      %c3_i32_223 = arith.constant 3 : i32
      %c0_i32_224 = arith.constant 0 : i32
      %301 = tpu.memref_slice %arg7[%c3_i32_223, %c0_i32_224] : memref<32x128xf32, #tpu.memory_space<vmem>> -> memref<1x128xf32, #tpu.memory_space<vmem>>
      %302 = tpu.memref_slice %arg11[%c3_i32_221] : memref<32x!tpu.dma_semaphore, #tpu.memory_space<semaphore_mem>> -> memref<1x!tpu.dma_semaphore, #tpu.memory_space<semaphore_mem>>
      %303 = tpu.memref_squeeze %302 : memref<1x!tpu.dma_semaphore, #tpu.memory_space<semaphore_mem>> -> memref<!tpu.dma_semaphore, #tpu.memory_space<semaphore_mem>>
      tpu.wait_dma2 semaphore(%303 : memref<!tpu.dma_semaphore, #tpu.memory_space<semaphore_mem>>) src(%300 : memref<1x128xf32, #tpu.memory_space<any>>) dst(%301 : memref<1x128xf32, #tpu.memory_space<vmem>>)
      %c4_i32_225 = arith.constant 4 : i32
      %c0_i32_226 = arith.constant 0 : i32
      %304 = tpu.memref_slice %arg3[%51, %c0_i32_226] : memref<1024x128xf32, #tpu.memory_space<any>> -> memref<1x128xf32, #tpu.memory_space<any>>
      %c4_i32_227 = arith.constant 4 : i32
      %c0_i32_228 = arith.constant 0 : i32
      %305 = tpu.memref_slice %arg7[%c4_i32_227, %c0_i32_228] : memref<32x128xf32, #tpu.memory_space<vmem>> -> memref<1x128xf32, #tpu.memory_space<vmem>>
      %306 = tpu.memref_slice %arg11[%c4_i32_225] : memref<32x!tpu.dma_semaphore, #tpu.memory_space<semaphore_mem>> -> memref<1x!tpu.dma_semaphore, #tpu.memory_space<semaphore_mem>>
      %307 = tpu.memref_squeeze %306 : memref<1x!tpu.dma_semaphore, #tpu.memory_space<semaphore_mem>> -> memref<!tpu.dma_semaphore, #tpu.memory_space<semaphore_mem>>
      tpu.wait_dma2 semaphore(%307 : memref<!tpu.dma_semaphore, #tpu.memory_space<semaphore_mem>>) src(%304 : memref<1x128xf32, #tpu.memory_space<any>>) dst(%305 : memref<1x128xf32, #tpu.memory_space<vmem>>)
      %c5_i32_229 = arith.constant 5 : i32
      %c0_i32_230 = arith.constant 0 : i32
      %308 = tpu.memref_slice %arg3[%55, %c0_i32_230] : memref<1024x128xf32, #tpu.memory_space<any>> -> memref<1x128xf32, #tpu.memory_space<any>>
      %c5_i32_231 = arith.constant 5 : i32
      %c0_i32_232 = arith.constant 0 : i32
      %309 = tpu.memref_slice %arg7[%c5_i32_231, %c0_i32_232] : memref<32x128xf32, #tpu.memory_space<vmem>> -> memref<1x128xf32, #tpu.memory_space<vmem>>
      %310 = tpu.memref_slice %arg11[%c5_i32_229] : memref<32x!tpu.dma_semaphore, #tpu.memory_space<semaphore_mem>> -> memref<1x!tpu.dma_semaphore, #tpu.memory_space<semaphore_mem>>
      %311 = tpu.memref_squeeze %310 : memref<1x!tpu.dma_semaphore, #tpu.memory_space<semaphore_mem>> -> memref<!tpu.dma_semaphore, #tpu.memory_space<semaphore_mem>>
      tpu.wait_dma2 semaphore(%311 : memref<!tpu.dma_semaphore, #tpu.memory_space<semaphore_mem>>) src(%308 : memref<1x128xf32, #tpu.memory_space<any>>) dst(%309 : memref<1x128xf32, #tpu.memory_space<vmem>>)
      %c6_i32_233 = arith.constant 6 : i32
      %c0_i32_234 = arith.constant 0 : i32
      %312 = tpu.memref_slice %arg3[%59, %c0_i32_234] : memref<1024x128xf32, #tpu.memory_space<any>> -> memref<1x128xf32, #tpu.memory_space<any>>
      %c6_i32_235 = arith.constant 6 : i32
      %c0_i32_236 = arith.constant 0 : i32
      %313 = tpu.memref_slice %arg7[%c6_i32_235, %c0_i32_236] : memref<32x128xf32, #tpu.memory_space<vmem>> -> memref<1x128xf32, #tpu.memory_space<vmem>>
      %314 = tpu.memref_slice %arg11[%c6_i32_233] : memref<32x!tpu.dma_semaphore, #tpu.memory_space<semaphore_mem>> -> memref<1x!tpu.dma_semaphore, #tpu.memory_space<semaphore_mem>>
      %315 = tpu.memref_squeeze %314 : memref<1x!tpu.dma_semaphore, #tpu.memory_space<semaphore_mem>> -> memref<!tpu.dma_semaphore, #tpu.memory_space<semaphore_mem>>
      tpu.wait_dma2 semaphore(%315 : memref<!tpu.dma_semaphore, #tpu.memory_space<semaphore_mem>>) src(%312 : memref<1x128xf32, #tpu.memory_space<any>>) dst(%313 : memref<1x128xf32, #tpu.memory_space<vmem>>)
      %c7_i32_237 = arith.constant 7 : i32
      %c0_i32_238 = arith.constant 0 : i32
      %316 = tpu.memref_slice %arg3[%63, %c0_i32_238] : memref<1024x128xf32, #tpu.memory_space<any>> -> memref<1x128xf32, #tpu.memory_space<any>>
      %c7_i32_239 = arith.constant 7 : i32
      %c0_i32_240 = arith.constant 0 : i32
      %317 = tpu.memref_slice %arg7[%c7_i32_239, %c0_i32_240] : memref<32x128xf32, #tpu.memory_space<vmem>> -> memref<1x128xf32, #tpu.memory_space<vmem>>
      %318 = tpu.memref_slice %arg11[%c7_i32_237] : memref<32x!tpu.dma_semaphore, #tpu.memory_space<semaphore_mem>> -> memref<1x!tpu.dma_semaphore, #tpu.memory_space<semaphore_mem>>
      %319 = tpu.memref_squeeze %318 : memref<1x!tpu.dma_semaphore, #tpu.memory_space<semaphore_mem>> -> memref<!tpu.dma_semaphore, #tpu.memory_space<semaphore_mem>>
      tpu.wait_dma2 semaphore(%319 : memref<!tpu.dma_semaphore, #tpu.memory_space<semaphore_mem>>) src(%316 : memref<1x128xf32, #tpu.memory_space<any>>) dst(%317 : memref<1x128xf32, #tpu.memory_space<vmem>>)
      %c8_i32_241 = arith.constant 8 : i32
      %c0_i32_242 = arith.constant 0 : i32
      %320 = tpu.memref_slice %arg3[%67, %c0_i32_242] : memref<1024x128xf32, #tpu.memory_space<any>> -> memref<1x128xf32, #tpu.memory_space<any>>
      %c8_i32_243 = arith.constant 8 : i32
      %c0_i32_244 = arith.constant 0 : i32
      %321 = tpu.memref_slice %arg7[%c8_i32_243, %c0_i32_244] : memref<32x128xf32, #tpu.memory_space<vmem>> -> memref<1x128xf32, #tpu.memory_space<vmem>>
      %322 = tpu.memref_slice %arg11[%c8_i32_241] : memref<32x!tpu.dma_semaphore, #tpu.memory_space<semaphore_mem>> -> memref<1x!tpu.dma_semaphore, #tpu.memory_space<semaphore_mem>>
      %323 = tpu.memref_squeeze %322 : memref<1x!tpu.dma_semaphore, #tpu.memory_space<semaphore_mem>> -> memref<!tpu.dma_semaphore, #tpu.memory_space<semaphore_mem>>
      tpu.wait_dma2 semaphore(%323 : memref<!tpu.dma_semaphore, #tpu.memory_space<semaphore_mem>>) src(%320 : memref<1x128xf32, #tpu.memory_space<any>>) dst(%321 : memref<1x128xf32, #tpu.memory_space<vmem>>)
      %c9_i32_245 = arith.constant 9 : i32
      %c0_i32_246 = arith.constant 0 : i32
      %324 = tpu.memref_slice %arg3[%71, %c0_i32_246] : memref<1024x128xf32, #tpu.memory_space<any>> -> memref<1x128xf32, #tpu.memory_space<any>>
      %c9_i32_247 = arith.constant 9 : i32
      %c0_i32_248 = arith.constant 0 : i32
      %325 = tpu.memref_slice %arg7[%c9_i32_247, %c0_i32_248] : memref<32x128xf32, #tpu.memory_space<vmem>> -> memref<1x128xf32, #tpu.memory_space<vmem>>
      %326 = tpu.memref_slice %arg11[%c9_i32_245] : memref<32x!tpu.dma_semaphore, #tpu.memory_space<semaphore_mem>> -> memref<1x!tpu.dma_semaphore, #tpu.memory_space<semaphore_mem>>
      %327 = tpu.memref_squeeze %326 : memref<1x!tpu.dma_semaphore, #tpu.memory_space<semaphore_mem>> -> memref<!tpu.dma_semaphore, #tpu.memory_space<semaphore_mem>>
      tpu.wait_dma2 semaphore(%327 : memref<!tpu.dma_semaphore, #tpu.memory_space<semaphore_mem>>) src(%324 : memref<1x128xf32, #tpu.memory_space<any>>) dst(%325 : memref<1x128xf32, #tpu.memory_space<vmem>>)
      %c10_i32_249 = arith.constant 10 : i32
      %c0_i32_250 = arith.constant 0 : i32
      %328 = tpu.memref_slice %arg3[%75, %c0_i32_250] : memref<1024x128xf32, #tpu.memory_space<any>> -> memref<1x128xf32, #tpu.memory_space<any>>
      %c10_i32_251 = arith.constant 10 : i32
      %c0_i32_252 = arith.constant 0 : i32
      %329 = tpu.memref_slice %arg7[%c10_i32_251, %c0_i32_252] : memref<32x128xf32, #tpu.memory_space<vmem>> -> memref<1x128xf32, #tpu.memory_space<vmem>>
      %330 = tpu.memref_slice %arg11[%c10_i32_249] : memref<32x!tpu.dma_semaphore, #tpu.memory_space<semaphore_mem>> -> memref<1x!tpu.dma_semaphore, #tpu.memory_space<semaphore_mem>>
      %331 = tpu.memref_squeeze %330 : memref<1x!tpu.dma_semaphore, #tpu.memory_space<semaphore_mem>> -> memref<!tpu.dma_semaphore, #tpu.memory_space<semaphore_mem>>
      tpu.wait_dma2 semaphore(%331 : memref<!tpu.dma_semaphore, #tpu.memory_space<semaphore_mem>>) src(%328 : memref<1x128xf32, #tpu.memory_space<any>>) dst(%329 : memref<1x128xf32, #tpu.memory_space<vmem>>)
      %c11_i32_253 = arith.constant 11 : i32
      %c0_i32_254 = arith.constant 0 : i32
      %332 = tpu.memref_slice %arg3[%79, %c0_i32_254] : memref<1024x128xf32, #tpu.memory_space<any>> -> memref<1x128xf32, #tpu.memory_space<any>>
      %c11_i32_255 = arith.constant 11 : i32
      %c0_i32_256 = arith.constant 0 : i32
      %333 = tpu.memref_slice %arg7[%c11_i32_255, %c0_i32_256] : memref<32x128xf32, #tpu.memory_space<vmem>> -> memref<1x128xf32, #tpu.memory_space<vmem>>
      %334 = tpu.memref_slice %arg11[%c11_i32_253] : memref<32x!tpu.dma_semaphore, #tpu.memory_space<semaphore_mem>> -> memref<1x!tpu.dma_semaphore, #tpu.memory_space<semaphore_mem>>
      %335 = tpu.memref_squeeze %334 : memref<1x!tpu.dma_semaphore, #tpu.memory_space<semaphore_mem>> -> memref<!tpu.dma_semaphore, #tpu.memory_space<semaphore_mem>>
      tpu.wait_dma2 semaphore(%335 : memref<!tpu.dma_semaphore, #tpu.memory_space<semaphore_mem>>) src(%332 : memref<1x128xf32, #tpu.memory_space<any>>) dst(%333 : memref<1x128xf32, #tpu.memory_space<vmem>>)
      %c12_i32_257 = arith.constant 12 : i32
      %c0_i32_258 = arith.constant 0 : i32
      %336 = tpu.memref_slice %arg3[%83, %c0_i32_258] : memref<1024x128xf32, #tpu.memory_space<any>> -> memref<1x128xf32, #tpu.memory_space<any>>
      %c12_i32_259 = arith.constant 12 : i32
      %c0_i32_260 = arith.constant 0 : i32
      %337 = tpu.memref_slice %arg7[%c12_i32_259, %c0_i32_260] : memref<32x128xf32, #tpu.memory_space<vmem>> -> memref<1x128xf32, #tpu.memory_space<vmem>>
      %338 = tpu.memref_slice %arg11[%c12_i32_257] : memref<32x!tpu.dma_semaphore, #tpu.memory_space<semaphore_mem>> -> memref<1x!tpu.dma_semaphore, #tpu.memory_space<semaphore_mem>>
      %339 = tpu.memref_squeeze %338 : memref<1x!tpu.dma_semaphore, #tpu.memory_space<semaphore_mem>> -> memref<!tpu.dma_semaphore, #tpu.memory_space<semaphore_mem>>
      tpu.wait_dma2 semaphore(%339 : memref<!tpu.dma_semaphore, #tpu.memory_space<semaphore_mem>>) src(%336 : memref<1x128xf32, #tpu.memory_space<any>>) dst(%337 : memref<1x128xf32, #tpu.memory_space<vmem>>)
      %c13_i32_261 = arith.constant 13 : i32
      %c0_i32_262 = arith.constant 0 : i32
      %340 = tpu.memref_slice %arg3[%87, %c0_i32_262] : memref<1024x128xf32, #tpu.memory_space<any>> -> memref<1x128xf32, #tpu.memory_space<any>>
      %c13_i32_263 = arith.constant 13 : i32
      %c0_i32_264 = arith.constant 0 : i32
      %341 = tpu.memref_slice %arg7[%c13_i32_263, %c0_i32_264] : memref<32x128xf32, #tpu.memory_space<vmem>> -> memref<1x128xf32, #tpu.memory_space<vmem>>
      %342 = tpu.memref_slice %arg11[%c13_i32_261] : memref<32x!tpu.dma_semaphore, #tpu.memory_space<semaphore_mem>> -> memref<1x!tpu.dma_semaphore, #tpu.memory_space<semaphore_mem>>
      %343 = tpu.memref_squeeze %342 : memref<1x!tpu.dma_semaphore, #tpu.memory_space<semaphore_mem>> -> memref<!tpu.dma_semaphore, #tpu.memory_space<semaphore_mem>>
      tpu.wait_dma2 semaphore(%343 : memref<!tpu.dma_semaphore, #tpu.memory_space<semaphore_mem>>) src(%340 : memref<1x128xf32, #tpu.memory_space<any>>) dst(%341 : memref<1x128xf32, #tpu.memory_space<vmem>>)
      %c14_i32_265 = arith.constant 14 : i32
      %c0_i32_266 = arith.constant 0 : i32
      %344 = tpu.memref_slice %arg3[%91, %c0_i32_266] : memref<1024x128xf32, #tpu.memory_space<any>> -> memref<1x128xf32, #tpu.memory_space<any>>
      %c14_i32_267 = arith.constant 14 : i32
      %c0_i32_268 = arith.constant 0 : i32
      %345 = tpu.memref_slice %arg7[%c14_i32_267, %c0_i32_268] : memref<32x128xf32, #tpu.memory_space<vmem>> -> memref<1x128xf32, #tpu.memory_space<vmem>>
      %346 = tpu.memref_slice %arg11[%c14_i32_265] : memref<32x!tpu.dma_semaphore, #tpu.memory_space<semaphore_mem>> -> memref<1x!tpu.dma_semaphore, #tpu.memory_space<semaphore_mem>>
      %347 = tpu.memref_squeeze %346 : memref<1x!tpu.dma_semaphore, #tpu.memory_space<semaphore_mem>> -> memref<!tpu.dma_semaphore, #tpu.memory_space<semaphore_mem>>
      tpu.wait_dma2 semaphore(%347 : memref<!tpu.dma_semaphore, #tpu.memory_space<semaphore_mem>>) src(%344 : memref<1x128xf32, #tpu.memory_space<any>>) dst(%345 : memref<1x128xf32, #tpu.memory_space<vmem>>)
      %c15_i32_269 = arith.constant 15 : i32
      %c0_i32_270 = arith.constant 0 : i32
      %348 = tpu.memref_slice %arg3[%95, %c0_i32_270] : memref<1024x128xf32, #tpu.memory_space<any>> -> memref<1x128xf32, #tpu.memory_space<any>>
      %c15_i32_271 = arith.constant 15 : i32
      %c0_i32_272 = arith.constant 0 : i32
      %349 = tpu.memref_slice %arg7[%c15_i32_271, %c0_i32_272] : memref<32x128xf32, #tpu.memory_space<vmem>> -> memref<1x128xf32, #tpu.memory_space<vmem>>
      %350 = tpu.memref_slice %arg11[%c15_i32_269] : memref<32x!tpu.dma_semaphore, #tpu.memory_space<semaphore_mem>> -> memref<1x!tpu.dma_semaphore, #tpu.memory_space<semaphore_mem>>
      %351 = tpu.memref_squeeze %350 : memref<1x!tpu.dma_semaphore, #tpu.memory_space<semaphore_mem>> -> memref<!tpu.dma_semaphore, #tpu.memory_space<semaphore_mem>>
      tpu.wait_dma2 semaphore(%351 : memref<!tpu.dma_semaphore, #tpu.memory_space<semaphore_mem>>) src(%348 : memref<1x128xf32, #tpu.memory_space<any>>) dst(%349 : memref<1x128xf32, #tpu.memory_space<vmem>>)
      %c16_i32_273 = arith.constant 16 : i32
      %c0_i32_274 = arith.constant 0 : i32
      %352 = tpu.memref_slice %arg3[%99, %c0_i32_274] : memref<1024x128xf32, #tpu.memory_space<any>> -> memref<1x128xf32, #tpu.memory_space<any>>
      %c16_i32_275 = arith.constant 16 : i32
      %c0_i32_276 = arith.constant 0 : i32
      %353 = tpu.memref_slice %arg7[%c16_i32_275, %c0_i32_276] : memref<32x128xf32, #tpu.memory_space<vmem>> -> memref<1x128xf32, #tpu.memory_space<vmem>>
      %354 = tpu.memref_slice %arg11[%c16_i32_273] : memref<32x!tpu.dma_semaphore, #tpu.memory_space<semaphore_mem>> -> memref<1x!tpu.dma_semaphore, #tpu.memory_space<semaphore_mem>>
      %355 = tpu.memref_squeeze %354 : memref<1x!tpu.dma_semaphore, #tpu.memory_space<semaphore_mem>> -> memref<!tpu.dma_semaphore, #tpu.memory_space<semaphore_mem>>
      tpu.wait_dma2 semaphore(%355 : memref<!tpu.dma_semaphore, #tpu.memory_space<semaphore_mem>>) src(%352 : memref<1x128xf32, #tpu.memory_space<any>>) dst(%353 : memref<1x128xf32, #tpu.memory_space<vmem>>)
      %c17_i32_277 = arith.constant 17 : i32
      %c0_i32_278 = arith.constant 0 : i32
      %356 = tpu.memref_slice %arg3[%103, %c0_i32_278] : memref<1024x128xf32, #tpu.memory_space<any>> -> memref<1x128xf32, #tpu.memory_space<any>>
      %c17_i32_279 = arith.constant 17 : i32
      %c0_i32_280 = arith.constant 0 : i32
      %357 = tpu.memref_slice %arg7[%c17_i32_279, %c0_i32_280] : memref<32x128xf32, #tpu.memory_space<vmem>> -> memref<1x128xf32, #tpu.memory_space<vmem>>
      %358 = tpu.memref_slice %arg11[%c17_i32_277] : memref<32x!tpu.dma_semaphore, #tpu.memory_space<semaphore_mem>> -> memref<1x!tpu.dma_semaphore, #tpu.memory_space<semaphore_mem>>
      %359 = tpu.memref_squeeze %358 : memref<1x!tpu.dma_semaphore, #tpu.memory_space<semaphore_mem>> -> memref<!tpu.dma_semaphore, #tpu.memory_space<semaphore_mem>>
      tpu.wait_dma2 semaphore(%359 : memref<!tpu.dma_semaphore, #tpu.memory_space<semaphore_mem>>) src(%356 : memref<1x128xf32, #tpu.memory_space<any>>) dst(%357 : memref<1x128xf32, #tpu.memory_space<vmem>>)
      %c18_i32_281 = arith.constant 18 : i32
      %c0_i32_282 = arith.constant 0 : i32
      %360 = tpu.memref_slice %arg3[%107, %c0_i32_282] : memref<1024x128xf32, #tpu.memory_space<any>> -> memref<1x128xf32, #tpu.memory_space<any>>
      %c18_i32_283 = arith.constant 18 : i32
      %c0_i32_284 = arith.constant 0 : i32
      %361 = tpu.memref_slice %arg7[%c18_i32_283, %c0_i32_284] : memref<32x128xf32, #tpu.memory_space<vmem>> -> memref<1x128xf32, #tpu.memory_space<vmem>>
      %362 = tpu.memref_slice %arg11[%c18_i32_281] : memref<32x!tpu.dma_semaphore, #tpu.memory_space<semaphore_mem>> -> memref<1x!tpu.dma_semaphore, #tpu.memory_space<semaphore_mem>>
      %363 = tpu.memref_squeeze %362 : memref<1x!tpu.dma_semaphore, #tpu.memory_space<semaphore_mem>> -> memref<!tpu.dma_semaphore, #tpu.memory_space<semaphore_mem>>
      tpu.wait_dma2 semaphore(%363 : memref<!tpu.dma_semaphore, #tpu.memory_space<semaphore_mem>>) src(%360 : memref<1x128xf32, #tpu.memory_space<any>>) dst(%361 : memref<1x128xf32, #tpu.memory_space<vmem>>)
      %c19_i32_285 = arith.constant 19 : i32
      %c0_i32_286 = arith.constant 0 : i32
      %364 = tpu.memref_slice %arg3[%111, %c0_i32_286] : memref<1024x128xf32, #tpu.memory_space<any>> -> memref<1x128xf32, #tpu.memory_space<any>>
      %c19_i32_287 = arith.constant 19 : i32
      %c0_i32_288 = arith.constant 0 : i32
      %365 = tpu.memref_slice %arg7[%c19_i32_287, %c0_i32_288] : memref<32x128xf32, #tpu.memory_space<vmem>> -> memref<1x128xf32, #tpu.memory_space<vmem>>
      %366 = tpu.memref_slice %arg11[%c19_i32_285] : memref<32x!tpu.dma_semaphore, #tpu.memory_space<semaphore_mem>> -> memref<1x!tpu.dma_semaphore, #tpu.memory_space<semaphore_mem>>
      %367 = tpu.memref_squeeze %366 : memref<1x!tpu.dma_semaphore, #tpu.memory_space<semaphore_mem>> -> memref<!tpu.dma_semaphore, #tpu.memory_space<semaphore_mem>>
      tpu.wait_dma2 semaphore(%367 : memref<!tpu.dma_semaphore, #tpu.memory_space<semaphore_mem>>) src(%364 : memref<1x128xf32, #tpu.memory_space<any>>) dst(%365 : memref<1x128xf32, #tpu.memory_space<vmem>>)
      %c20_i32_289 = arith.constant 20 : i32
      %c0_i32_290 = arith.constant 0 : i32
      %368 = tpu.memref_slice %arg3[%115, %c0_i32_290] : memref<1024x128xf32, #tpu.memory_space<any>> -> memref<1x128xf32, #tpu.memory_space<any>>
      %c20_i32_291 = arith.constant 20 : i32
      %c0_i32_292 = arith.constant 0 : i32
      %369 = tpu.memref_slice %arg7[%c20_i32_291, %c0_i32_292] : memref<32x128xf32, #tpu.memory_space<vmem>> -> memref<1x128xf32, #tpu.memory_space<vmem>>
      %370 = tpu.memref_slice %arg11[%c20_i32_289] : memref<32x!tpu.dma_semaphore, #tpu.memory_space<semaphore_mem>> -> memref<1x!tpu.dma_semaphore, #tpu.memory_space<semaphore_mem>>
      %371 = tpu.memref_squeeze %370 : memref<1x!tpu.dma_semaphore, #tpu.memory_space<semaphore_mem>> -> memref<!tpu.dma_semaphore, #tpu.memory_space<semaphore_mem>>
      tpu.wait_dma2 semaphore(%371 : memref<!tpu.dma_semaphore, #tpu.memory_space<semaphore_mem>>) src(%368 : memref<1x128xf32, #tpu.memory_space<any>>) dst(%369 : memref<1x128xf32, #tpu.memory_space<vmem>>)
      %c21_i32_293 = arith.constant 21 : i32
      %c0_i32_294 = arith.constant 0 : i32
      %372 = tpu.memref_slice %arg3[%119, %c0_i32_294] : memref<1024x128xf32, #tpu.memory_space<any>> -> memref<1x128xf32, #tpu.memory_space<any>>
      %c21_i32_295 = arith.constant 21 : i32
      %c0_i32_296 = arith.constant 0 : i32
      %373 = tpu.memref_slice %arg7[%c21_i32_295, %c0_i32_296] : memref<32x128xf32, #tpu.memory_space<vmem>> -> memref<1x128xf32, #tpu.memory_space<vmem>>
      %374 = tpu.memref_slice %arg11[%c21_i32_293] : memref<32x!tpu.dma_semaphore, #tpu.memory_space<semaphore_mem>> -> memref<1x!tpu.dma_semaphore, #tpu.memory_space<semaphore_mem>>
      %375 = tpu.memref_squeeze %374 : memref<1x!tpu.dma_semaphore, #tpu.memory_space<semaphore_mem>> -> memref<!tpu.dma_semaphore, #tpu.memory_space<semaphore_mem>>
      tpu.wait_dma2 semaphore(%375 : memref<!tpu.dma_semaphore, #tpu.memory_space<semaphore_mem>>) src(%372 : memref<1x128xf32, #tpu.memory_space<any>>) dst(%373 : memref<1x128xf32, #tpu.memory_space<vmem>>)
      %c22_i32_297 = arith.constant 22 : i32
      %c0_i32_298 = arith.constant 0 : i32
      %376 = tpu.memref_slice %arg3[%123, %c0_i32_298] : memref<1024x128xf32, #tpu.memory_space<any>> -> memref<1x128xf32, #tpu.memory_space<any>>
      %c22_i32_299 = arith.constant 22 : i32
      %c0_i32_300 = arith.constant 0 : i32
      %377 = tpu.memref_slice %arg7[%c22_i32_299, %c0_i32_300] : memref<32x128xf32, #tpu.memory_space<vmem>> -> memref<1x128xf32, #tpu.memory_space<vmem>>
      %378 = tpu.memref_slice %arg11[%c22_i32_297] : memref<32x!tpu.dma_semaphore, #tpu.memory_space<semaphore_mem>> -> memref<1x!tpu.dma_semaphore, #tpu.memory_space<semaphore_mem>>
      %379 = tpu.memref_squeeze %378 : memref<1x!tpu.dma_semaphore, #tpu.memory_space<semaphore_mem>> -> memref<!tpu.dma_semaphore, #tpu.memory_space<semaphore_mem>>
      tpu.wait_dma2 semaphore(%379 : memref<!tpu.dma_semaphore, #tpu.memory_space<semaphore_mem>>) src(%376 : memref<1x128xf32, #tpu.memory_space<any>>) dst(%377 : memref<1x128xf32, #tpu.memory_space<vmem>>)
      %c23_i32_301 = arith.constant 23 : i32
      %c0_i32_302 = arith.constant 0 : i32
      %380 = tpu.memref_slice %arg3[%127, %c0_i32_302] : memref<1024x128xf32, #tpu.memory_space<any>> -> memref<1x128xf32, #tpu.memory_space<any>>
      %c23_i32_303 = arith.constant 23 : i32
      %c0_i32_304 = arith.constant 0 : i32
      %381 = tpu.memref_slice %arg7[%c23_i32_303, %c0_i32_304] : memref<32x128xf32, #tpu.memory_space<vmem>> -> memref<1x128xf32, #tpu.memory_space<vmem>>
      %382 = tpu.memref_slice %arg11[%c23_i32_301] : memref<32x!tpu.dma_semaphore, #tpu.memory_space<semaphore_mem>> -> memref<1x!tpu.dma_semaphore, #tpu.memory_space<semaphore_mem>>
      %383 = tpu.memref_squeeze %382 : memref<1x!tpu.dma_semaphore, #tpu.memory_space<semaphore_mem>> -> memref<!tpu.dma_semaphore, #tpu.memory_space<semaphore_mem>>
      tpu.wait_dma2 semaphore(%383 : memref<!tpu.dma_semaphore, #tpu.memory_space<semaphore_mem>>) src(%380 : memref<1x128xf32, #tpu.memory_space<any>>) dst(%381 : memref<1x128xf32, #tpu.memory_space<vmem>>)
      %c24_i32_305 = arith.constant 24 : i32
      %c0_i32_306 = arith.constant 0 : i32
      %384 = tpu.memref_slice %arg3[%131, %c0_i32_306] : memref<1024x128xf32, #tpu.memory_space<any>> -> memref<1x128xf32, #tpu.memory_space<any>>
      %c24_i32_307 = arith.constant 24 : i32
      %c0_i32_308 = arith.constant 0 : i32
      %385 = tpu.memref_slice %arg7[%c24_i32_307, %c0_i32_308] : memref<32x128xf32, #tpu.memory_space<vmem>> -> memref<1x128xf32, #tpu.memory_space<vmem>>
      %386 = tpu.memref_slice %arg11[%c24_i32_305] : memref<32x!tpu.dma_semaphore, #tpu.memory_space<semaphore_mem>> -> memref<1x!tpu.dma_semaphore, #tpu.memory_space<semaphore_mem>>
      %387 = tpu.memref_squeeze %386 : memref<1x!tpu.dma_semaphore, #tpu.memory_space<semaphore_mem>> -> memref<!tpu.dma_semaphore, #tpu.memory_space<semaphore_mem>>
      tpu.wait_dma2 semaphore(%387 : memref<!tpu.dma_semaphore, #tpu.memory_space<semaphore_mem>>) src(%384 : memref<1x128xf32, #tpu.memory_space<any>>) dst(%385 : memref<1x128xf32, #tpu.memory_space<vmem>>)
      %c25_i32_309 = arith.constant 25 : i32
      %c0_i32_310 = arith.constant 0 : i32
      %388 = tpu.memref_slice %arg3[%135, %c0_i32_310] : memref<1024x128xf32, #tpu.memory_space<any>> -> memref<1x128xf32, #tpu.memory_space<any>>
      %c25_i32_311 = arith.constant 25 : i32
      %c0_i32_312 = arith.constant 0 : i32
      %389 = tpu.memref_slice %arg7[%c25_i32_311, %c0_i32_312] : memref<32x128xf32, #tpu.memory_space<vmem>> -> memref<1x128xf32, #tpu.memory_space<vmem>>
      %390 = tpu.memref_slice %arg11[%c25_i32_309] : memref<32x!tpu.dma_semaphore, #tpu.memory_space<semaphore_mem>> -> memref<1x!tpu.dma_semaphore, #tpu.memory_space<semaphore_mem>>
      %391 = tpu.memref_squeeze %390 : memref<1x!tpu.dma_semaphore, #tpu.memory_space<semaphore_mem>> -> memref<!tpu.dma_semaphore, #tpu.memory_space<semaphore_mem>>
      tpu.wait_dma2 semaphore(%391 : memref<!tpu.dma_semaphore, #tpu.memory_space<semaphore_mem>>) src(%388 : memref<1x128xf32, #tpu.memory_space<any>>) dst(%389 : memref<1x128xf32, #tpu.memory_space<vmem>>)
      %c26_i32_313 = arith.constant 26 : i32
      %c0_i32_314 = arith.constant 0 : i32
      %392 = tpu.memref_slice %arg3[%139, %c0_i32_314] : memref<1024x128xf32, #tpu.memory_space<any>> -> memref<1x128xf32, #tpu.memory_space<any>>
      %c26_i32_315 = arith.constant 26 : i32
      %c0_i32_316 = arith.constant 0 : i32
      %393 = tpu.memref_slice %arg7[%c26_i32_315, %c0_i32_316] : memref<32x128xf32, #tpu.memory_space<vmem>> -> memref<1x128xf32, #tpu.memory_space<vmem>>
      %394 = tpu.memref_slice %arg11[%c26_i32_313] : memref<32x!tpu.dma_semaphore, #tpu.memory_space<semaphore_mem>> -> memref<1x!tpu.dma_semaphore, #tpu.memory_space<semaphore_mem>>
      %395 = tpu.memref_squeeze %394 : memref<1x!tpu.dma_semaphore, #tpu.memory_space<semaphore_mem>> -> memref<!tpu.dma_semaphore, #tpu.memory_space<semaphore_mem>>
      tpu.wait_dma2 semaphore(%395 : memref<!tpu.dma_semaphore, #tpu.memory_space<semaphore_mem>>) src(%392 : memref<1x128xf32, #tpu.memory_space<any>>) dst(%393 : memref<1x128xf32, #tpu.memory_space<vmem>>)
      %c27_i32_317 = arith.constant 27 : i32
      %c0_i32_318 = arith.constant 0 : i32
      %396 = tpu.memref_slice %arg3[%143, %c0_i32_318] : memref<1024x128xf32, #tpu.memory_space<any>> -> memref<1x128xf32, #tpu.memory_space<any>>
      %c27_i32_319 = arith.constant 27 : i32
      %c0_i32_320 = arith.constant 0 : i32
      %397 = tpu.memref_slice %arg7[%c27_i32_319, %c0_i32_320] : memref<32x128xf32, #tpu.memory_space<vmem>> -> memref<1x128xf32, #tpu.memory_space<vmem>>
      %398 = tpu.memref_slice %arg11[%c27_i32_317] : memref<32x!tpu.dma_semaphore, #tpu.memory_space<semaphore_mem>> -> memref<1x!tpu.dma_semaphore, #tpu.memory_space<semaphore_mem>>
      %399 = tpu.memref_squeeze %398 : memref<1x!tpu.dma_semaphore, #tpu.memory_space<semaphore_mem>> -> memref<!tpu.dma_semaphore, #tpu.memory_space<semaphore_mem>>
      tpu.wait_dma2 semaphore(%399 : memref<!tpu.dma_semaphore, #tpu.memory_space<semaphore_mem>>) src(%396 : memref<1x128xf32, #tpu.memory_space<any>>) dst(%397 : memref<1x128xf32, #tpu.memory_space<vmem>>)
      %c28_i32_321 = arith.constant 28 : i32
      %c0_i32_322 = arith.constant 0 : i32
      %400 = tpu.memref_slice %arg3[%147, %c0_i32_322] : memref<1024x128xf32, #tpu.memory_space<any>> -> memref<1x128xf32, #tpu.memory_space<any>>
      %c28_i32_323 = arith.constant 28 : i32
      %c0_i32_324 = arith.constant 0 : i32
      %401 = tpu.memref_slice %arg7[%c28_i32_323, %c0_i32_324] : memref<32x128xf32, #tpu.memory_space<vmem>> -> memref<1x128xf32, #tpu.memory_space<vmem>>
      %402 = tpu.memref_slice %arg11[%c28_i32_321] : memref<32x!tpu.dma_semaphore, #tpu.memory_space<semaphore_mem>> -> memref<1x!tpu.dma_semaphore, #tpu.memory_space<semaphore_mem>>
      %403 = tpu.memref_squeeze %402 : memref<1x!tpu.dma_semaphore, #tpu.memory_space<semaphore_mem>> -> memref<!tpu.dma_semaphore, #tpu.memory_space<semaphore_mem>>
      tpu.wait_dma2 semaphore(%403 : memref<!tpu.dma_semaphore, #tpu.memory_space<semaphore_mem>>) src(%400 : memref<1x128xf32, #tpu.memory_space<any>>) dst(%401 : memref<1x128xf32, #tpu.memory_space<vmem>>)
      %c29_i32_325 = arith.constant 29 : i32
      %c0_i32_326 = arith.constant 0 : i32
      %404 = tpu.memref_slice %arg3[%151, %c0_i32_326] : memref<1024x128xf32, #tpu.memory_space<any>> -> memref<1x128xf32, #tpu.memory_space<any>>
      %c29_i32_327 = arith.constant 29 : i32
      %c0_i32_328 = arith.constant 0 : i32
      %405 = tpu.memref_slice %arg7[%c29_i32_327, %c0_i32_328] : memref<32x128xf32, #tpu.memory_space<vmem>> -> memref<1x128xf32, #tpu.memory_space<vmem>>
      %406 = tpu.memref_slice %arg11[%c29_i32_325] : memref<32x!tpu.dma_semaphore, #tpu.memory_space<semaphore_mem>> -> memref<1x!tpu.dma_semaphore, #tpu.memory_space<semaphore_mem>>
      %407 = tpu.memref_squeeze %406 : memref<1x!tpu.dma_semaphore, #tpu.memory_space<semaphore_mem>> -> memref<!tpu.dma_semaphore, #tpu.memory_space<semaphore_mem>>
      tpu.wait_dma2 semaphore(%407 : memref<!tpu.dma_semaphore, #tpu.memory_space<semaphore_mem>>) src(%404 : memref<1x128xf32, #tpu.memory_space<any>>) dst(%405 : memref<1x128xf32, #tpu.memory_space<vmem>>)
      %c30_i32_329 = arith.constant 30 : i32
      %c0_i32_330 = arith.constant 0 : i32
      %408 = tpu.memref_slice %arg3[%155, %c0_i32_330] : memref<1024x128xf32, #tpu.memory_space<any>> -> memref<1x128xf32, #tpu.memory_space<any>>
      %c30_i32_331 = arith.constant 30 : i32
      %c0_i32_332 = arith.constant 0 : i32
      %409 = tpu.memref_slice %arg7[%c30_i32_331, %c0_i32_332] : memref<32x128xf32, #tpu.memory_space<vmem>> -> memref<1x128xf32, #tpu.memory_space<vmem>>
      %410 = tpu.memref_slice %arg11[%c30_i32_329] : memref<32x!tpu.dma_semaphore, #tpu.memory_space<semaphore_mem>> -> memref<1x!tpu.dma_semaphore, #tpu.memory_space<semaphore_mem>>
      %411 = tpu.memref_squeeze %410 : memref<1x!tpu.dma_semaphore, #tpu.memory_space<semaphore_mem>> -> memref<!tpu.dma_semaphore, #tpu.memory_space<semaphore_mem>>
      tpu.wait_dma2 semaphore(%411 : memref<!tpu.dma_semaphore, #tpu.memory_space<semaphore_mem>>) src(%408 : memref<1x128xf32, #tpu.memory_space<any>>) dst(%409 : memref<1x128xf32, #tpu.memory_space<vmem>>)
      %c31_i32_333 = arith.constant 31 : i32
      %c0_i32_334 = arith.constant 0 : i32
      %412 = tpu.memref_slice %arg3[%159, %c0_i32_334] : memref<1024x128xf32, #tpu.memory_space<any>> -> memref<1x128xf32, #tpu.memory_space<any>>
      %c31_i32_335 = arith.constant 31 : i32
      %c0_i32_336 = arith.constant 0 : i32
      %413 = tpu.memref_slice %arg7[%c31_i32_335, %c0_i32_336] : memref<32x128xf32, #tpu.memory_space<vmem>> -> memref<1x128xf32, #tpu.memory_space<vmem>>
      %414 = tpu.memref_slice %arg11[%c31_i32_333] : memref<32x!tpu.dma_semaphore, #tpu.memory_space<semaphore_mem>> -> memref<1x!tpu.dma_semaphore, #tpu.memory_space<semaphore_mem>>
      %415 = tpu.memref_squeeze %414 : memref<1x!tpu.dma_semaphore, #tpu.memory_space<semaphore_mem>> -> memref<!tpu.dma_semaphore, #tpu.memory_space<semaphore_mem>>
      tpu.wait_dma2 semaphore(%415 : memref<!tpu.dma_semaphore, #tpu.memory_space<semaphore_mem>>) src(%412 : memref<1x128xf32, #tpu.memory_space<any>>) dst(%413 : memref<1x128xf32, #tpu.memory_space<vmem>>)
      %c0_337 = arith.constant 0 : index
      %c0_338 = arith.constant 0 : index
      %416 = vector.load %arg7[%c0_337, %c0_338] : memref<32x128xf32, #tpu.memory_space<vmem>>, vector<8x128xf32>
      %c8 = arith.constant 8 : index
      %c0_339 = arith.constant 0 : index
      %417 = vector.load %arg7[%c8, %c0_339] : memref<32x128xf32, #tpu.memory_space<vmem>>, vector<8x128xf32>
      %418 = arith.addf %416, %417 : vector<8x128xf32>
      %c16 = arith.constant 16 : index
      %c0_340 = arith.constant 0 : index
      %419 = vector.load %arg7[%c16, %c0_340] : memref<32x128xf32, #tpu.memory_space<vmem>>, vector<8x128xf32>
      %420 = arith.addf %418, %419 : vector<8x128xf32>
      %c24 = arith.constant 24 : index
      %c0_341 = arith.constant 0 : index
      %421 = vector.load %arg7[%c24, %c0_341] : memref<32x128xf32, #tpu.memory_space<vmem>>, vector<8x128xf32>
      %422 = arith.addf %420, %421 : vector<8x128xf32>
      %423 = arith.truncf %422 : vector<8x128xf32> to vector<8x128xbf16>
      %c0_342 = arith.constant 0 : index
      %c0_343 = arith.constant 0 : index
      %424 = vector.load %arg8[%c0_342, %c0_343] : memref<8x128xbf16, #tpu.memory_space<vmem>>, vector<8x128xbf16>
      tpu.vector_store %arg8[%c0_342, %c0_343], %423 {strides = array<i32>} : memref<8x128xbf16, #tpu.memory_space<vmem>>, vector<8x128xbf16>,
      %cst_344 = arith.constant 0xFF800000 : f32
      %425 = vector.broadcast %cst_344 : f32 to vector<8x1xf32>
      %c0_345 = arith.constant 0 : index
      %c0_346 = arith.constant 0 : index
      %426 = vector.load %arg9[%c0_345, %c0_346] : memref<8x1xf32, #tpu.memory_space<vmem>>, vector<8x1xf32>
      tpu.vector_store %arg9[%c0_345, %c0_346], %425 {strides = array<i32>} : memref<8x1xf32, #tpu.memory_space<vmem>>, vector<8x1xf32>,
      %cst_347 = arith.constant 0.000000e+00 : f32
      %427 = vector.broadcast %cst_347 : f32 to vector<8x1xf32>
      %c0_348 = arith.constant 0 : index
      %c0_349 = arith.constant 0 : index
      %428 = vector.load %arg10[%c0_348, %c0_349] : memref<8x1xf32, #tpu.memory_space<vmem>>, vector<8x1xf32>
      tpu.vector_store %arg10[%c0_348, %c0_349], %427 {strides = array<i32>} : memref<8x1xf32, #tpu.memory_space<vmem>>, vector<8x1xf32>,
    } else {
    }
    %c0 = arith.constant 0 : index
    %c0_1 = arith.constant 0 : index
    %3 = vector.load %arg8[%c0, %c0_1] : memref<8x128xbf16, #tpu.memory_space<vmem>>, vector<8x128xbf16>
    %c0_2 = arith.constant 0 : index
    %c0_3 = arith.constant 0 : index
    %4 = vector.load %arg4[%c0_2, %c0_3] : memref<128x512xbf16, #tpu.memory_space<vmem>>, vector<128x512xbf16>
    %cst = arith.constant dense<0.000000e+00> : vector<8x512xf32>
    %5 = tpu.matmul %3, %4, %cst {dimension_numbers = #tpu.dot_dimension_numbers<[1], [0], [0], [1], [0, 0, 1, 1], [], []>} : vector<8x128xbf16>, vector<128x512xbf16>, vector<8x512xf32> -> vector<8x512xf32>
    %c0_4 = arith.constant 0 : index
    %c0_5 = arith.constant 0 : index
    %6 = vector.load %arg5[%c0_4, %c0_5] : memref<1x512xf32, #tpu.memory_space<vmem>>, vector<1x512xf32>
    %7 = vector.broadcast %6 : vector<1x512xf32> to vector<8x512xf32>
    %8 = arith.addf %5, %7 : vector<8x512xf32>
    %c0_6 = arith.constant 0 : index
    %c0_7 = arith.constant 0 : index
    %9 = vector.load %arg9[%c0_6, %c0_7] : memref<8x1xf32, #tpu.memory_space<vmem>>, vector<8x1xf32>
    %cst_8 = arith.constant dense<0xFF800000> : vector<8xf32>
    %10 = vector.multi_reduction <maximumf>, %8, %cst_8 [1] : vector<8x512xf32> to vector<8xf32>
    %11 = vector.shape_cast %10 : vector<8xf32> to vector<8x1xf32>
    %12 = arith.maximumf %9, %11 : vector<8x1xf32>
    %c0_9 = arith.constant 0 : index
    %c0_10 = arith.constant 0 : index
    %13 = vector.load %arg10[%c0_9, %c0_10] : memref<8x1xf32, #tpu.memory_space<vmem>>, vector<8x1xf32>
    %14 = arith.subf %9, %12 : vector<8x1xf32>
    %15 = math.exp %14 : vector<8x1xf32>
    %16 = arith.mulf %13, %15 : vector<8x1xf32>
    %17 = vector.broadcast %12 : vector<8x1xf32> to vector<8x512xf32>
    %18 = arith.subf %8, %17 : vector<8x512xf32>
    %19 = math.exp %18 : vector<8x512xf32>
    %cst_11 = arith.constant dense<0.000000e+00> : vector<8xf32>
    %20 = vector.multi_reduction <add>, %19, %cst_11 [1] : vector<8x512xf32> to vector<8xf32>
    %21 = vector.shape_cast %20 : vector<8xf32> to vector<8x1xf32>
    %22 = arith.addf %16, %21 : vector<8x1xf32>
    %c0_12 = arith.constant 0 : index
    %c0_13 = arith.constant 0 : index
    %23 = vector.load %arg10[%c0_12, %c0_13] : memref<8x1xf32, #tpu.memory_space<vmem>>, vector<8x1xf32>
    tpu.vector_store %arg10[%c0_12, %c0_13], %22 {strides = array<i32>} : memref<8x1xf32, #tpu.memory_space<vmem>>, vector<8x1xf32>,
    %c0_14 = arith.constant 0 : index
    %c0_15 = arith.constant 0 : index
    %24 = vector.load %arg9[%c0_14, %c0_15] : memref<8x1xf32, #tpu.memory_space<vmem>>, vector<8x1xf32>
    tpu.vector_store %arg9[%c0_14, %c0_15], %12 {strides = array<i32>} : memref<8x1xf32, #tpu.memory_space<vmem>>, vector<8x1xf32>,
    %c512_i32 = arith.constant 512 : i32
    %25 = arith.muli %arg1, %c512_i32 : i32
    %26 = tpu.assume_multiple %25, 512 : i32
    %c0_16 = arith.constant 0 : index
    %27 = arith.index_cast %26 : i32 to index
    %28 = vector.load %arg6[%c0_16, %27] : memref<8x1024xf32, #tpu.memory_space<vmem>>, vector<8x512xf32>
    tpu.vector_store %arg6[%c0_16, %27], %8 {strides = array<i32>} : memref<8x1024xf32, #tpu.memory_space<vmem>>, vector<8x512xf32>,
    %c1_i32 = arith.constant 1 : i32
    %29 = arith.cmpi eq, %arg1, %c1_i32 : i32
    %30 = arith.extui %29 : i1 to i32
    %c0_i32_17 = arith.constant 0 : i32
    %31 = arith.cmpi ne, %30, %c0_i32_17 : i32
    scf.if %31 {
      %c0_18 = arith.constant 0 : index
      %c0_19 = arith.constant 0 : index
      %32 = vector.load %arg9[%c0_18, %c0_19] : memref<8x1xf32, #tpu.memory_space<vmem>>, vector<8x1xf32>
      %c0_20 = arith.constant 0 : index
      %c0_21 = arith.constant 0 : index
      %33 = vector.load %arg10[%c0_20, %c0_21] : memref<8x1xf32, #tpu.memory_space<vmem>>, vector<8x1xf32>
      %34 = math.log %33 : vector<8x1xf32>
      %35 = arith.addf %32, %34 : vector<8x1xf32>
      %c0_22 = arith.constant 0 : index
      %c0_23 = arith.constant 0 : index
      %36 = vector.load %arg6[%c0_22, %c0_23] : memref<8x1024xf32, #tpu.memory_space<vmem>>, vector<8x1024xf32>
      %37 = vector.broadcast %35 : vector<8x1xf32> to vector<8x1024xf32>
      %38 = arith.subf %36, %37 : vector<8x1024xf32>
      %c0_24 = arith.constant 0 : index
      %c0_25 = arith.constant 0 : index
      %39 = vector.load %arg6[%c0_24, %c0_25] : memref<8x1024xf32, #tpu.memory_space<vmem>>, vector<8x1024xf32>
      tpu.vector_store %arg6[%c0_24, %c0_25], %38 {strides = array<i32>} : memref<8x1024xf32, #tpu.memory_space<vmem>>, vector<8x1024xf32>,
    } else {
    }
    return
  }
  func.func @transform_1(%arg0: i32, %arg1: i32, %arg2: memref<8x4xi32, #tpu.memory_space<smem>>) -> (i32, i32) {
    %c0_i32 = arith.constant 0 : i32
    %c0_i32_0 = arith.constant 0 : i32
    return %c0_i32, %arg1 : i32, i32
  }
  func.func @transform_2(%arg0: i32, %arg1: i32, %arg2: memref<8x4xi32, #tpu.memory_space<smem>>) -> (i32, i32) {
    %c0_i32 = arith.constant 0 : i32
    %c0_i32_0 = arith.constant 0 : i32
    return %c0_i32, %arg1 : i32, i32
  }
  func.func @transform_3(%arg0: i32, %arg1: i32, %arg2: memref<8x4xi32, #tpu.memory_space<smem>>) -> (i32, i32) {
    %c0_i32 = arith.constant 0 : i32
    %c0_i32_0 = arith.constant 0 : i32
    return %arg0, %c0_i32 : i32, i32
  }
}

</mosaic_0001>

<llo_original>
// kernel: cbow_forward.1
$region0: #{cbow_forward.1}
  #allocation0 [shape = 'u32[]', space=smem, size = 0x4, offset = 0x4, fixed_abs, tag = 'smem constant byte address 0x4 - core index']
  #allocation1 [shape = 'u32[72,128]{1,0:T(1,128)}', space=vmem, size = 0x9000, scoped, tag = 'internal scratch']
  #allocation2 [shape = 'f32[32,128]{1,0:T(8,128)}', space=vmem, size = 0x4000, scoped, tag = 'scratch operand']
  #allocation3 [shape = 'bf16[8,128]{1,0:T(8,128)(2,1)}', space=vmem, size = 0x800, scoped, tag = 'scratch operand']
  #allocation4 [shape = 'f32[8,1]{1,0:T(8,128)}', space=vmem, size = 0x1000, scoped, tag = 'scratch operand']
  #allocation5 [shape = 'f32[8,1]{1,0:T(8,128)}', space=vmem, size = 0x1000, scoped, tag = 'scratch operand']
  #allocation6 [shape = 's32[32]{0}', space=sflag, size = 0x80, scoped, tag = 'scratch operand']
  #allocation7 [shape = 's32[1]{0}', space=sflag, size = 0x4, scoped, tag = 'scoped memory for cbow_forward.1']
  #allocation8 [shape = 'u8[4096]{0}', space=smem, size = 0x1000, scoped, tag = 'prefetched SMEM operand 0']
  #allocation13 [shape = 's32[]', space=sflag, size = 0x4, offset = 0, fixed_abs, tag = 'sflag constant byte address 0x0 - dummy sync flag']
  #allocation14 [shape = 's32[]', space=sflag, size = 0x4, offset = 0, fixed_abs, tag = 'sflag constant byte address 0x0 - dummy sync flag']
  #allocation15 [shape = 'u32[]', space=smem, size = 0x4, offset = 0x44, fixed_abs, tag = 'smem constant byte address 0x44 - assertion arg 0']
  #allocation16 [shape = 'u32[]', space=smem, size = 0x4, offset = 0x48, fixed_abs, tag = 'smem constant byte address 0x48 - assertion arg 1']
  #allocation17 [shape = 's32[]', space=sflag, size = 0x4, offset = 0, fixed_abs, tag = 'sflag constant byte address 0x0 - dummy sync flag']
  #allocation18 [shape = 's32[]', space=sflag, size = 0x4, offset = 0, fixed_abs, tag = 'sflag constant byte address 0x0 - dummy sync flag']
  #allocation19 [shape = 's32[]', space=sflag, size = 0x4, offset = 0, fixed_abs, tag = 'sflag constant byte address 0x0 - dummy sync flag']
  #allocation20 [shape = 's32[]', space=sflag, size = 0x4, offset = 0, fixed_abs, tag = 'sflag constant byte address 0x0 - dummy sync flag']
  #allocation21 [shape = 's32[]', space=sflag, size = 0x4, offset = 0, fixed_abs, tag = 'sflag constant byte address 0x0 - dummy sync flag']
  #allocation22 [shape = 's32[]', space=sflag, size = 0x4, offset = 0, fixed_abs, tag = 'sflag constant byte address 0x0 - dummy sync flag']
  #allocation23 [shape = 's32[]', space=sflag, size = 0x4, offset = 0, fixed_abs, tag = 'sflag constant byte address 0x0 - dummy sync flag']
  #allocation24 [shape = 's32[]', space=sflag, size = 0x4, offset = 0, fixed_abs, tag = 'sflag constant byte address 0x0 - dummy sync flag']
  #allocation25 [shape = 's32[]', space=sflag, size = 0x4, offset = 0, fixed_abs, tag = 'sflag constant byte address 0x0 - dummy sync flag']
  #allocation26 [shape = 's32[]', space=sflag, size = 0x4, offset = 0, fixed_abs, tag = 'sflag constant byte address 0x0 - dummy sync flag']
  #allocation27 [shape = 's32[]', space=sflag, size = 0x4, offset = 0, fixed_abs, tag = 'sflag constant byte address 0x0 - dummy sync flag']
  #allocation28 [shape = 's32[]', space=sflag, size = 0x4, offset = 0, fixed_abs, tag = 'sflag constant byte address 0x0 - dummy sync flag']
  #allocation29 [shape = 's32[]', space=sflag, size = 0x4, offset = 0, fixed_abs, tag = 'sflag constant byte address 0x0 - dummy sync flag']
  #allocation30 [shape = 's32[]', space=sflag, size = 0x4, offset = 0, fixed_abs, tag = 'sflag constant byte address 0x0 - dummy sync flag']
  #allocation31 [shape = 's32[]', space=sflag, size = 0x4, offset = 0, fixed_abs, tag = 'sflag constant byte address 0x0 - dummy sync flag']
  #allocation32 [shape = 's32[]', space=sflag, size = 0x4, offset = 0, fixed_abs, tag = 'sflag constant byte address 0x0 - dummy sync flag']
  #allocation33 [shape = 's32[]', space=sflag, size = 0x4, offset = 0, fixed_abs, tag = 'sflag constant byte address 0x0 - dummy sync flag']
  #allocation34 [shape = 's32[]', space=sflag, size = 0x4, offset = 0, fixed_abs, tag = 'sflag constant byte address 0x0 - dummy sync flag']
  #allocation35 [shape = 's32[]', space=sflag, size = 0x4, offset = 0, fixed_abs, tag = 'sflag constant byte address 0x0 - dummy sync flag']
  #allocation36 [shape = 's32[]', space=sflag, size = 0x4, offset = 0, fixed_abs, tag = 'sflag constant byte address 0x0 - dummy sync flag']
  #allocation37 [shape = 's32[]', space=sflag, size = 0x4, offset = 0, fixed_abs, tag = 'sflag constant byte address 0x0 - dummy sync flag']
  #allocation38 [shape = 's32[]', space=sflag, size = 0x4, offset = 0, fixed_abs, tag = 'sflag constant byte address 0x0 - dummy sync flag']
  #allocation39 [shape = 's32[]', space=sflag, size = 0x4, offset = 0, fixed_abs, tag = 'sflag constant byte address 0x0 - dummy sync flag']
  #allocation40 [shape = 's32[]', space=sflag, size = 0x4, offset = 0, fixed_abs, tag = 'sflag constant byte address 0x0 - dummy sync flag']
  #allocation41 [shape = 's32[]', space=sflag, size = 0x4, offset = 0, fixed_abs, tag = 'sflag constant byte address 0x0 - dummy sync flag']
  #allocation42 [shape = 's32[]', space=sflag, size = 0x4, offset = 0, fixed_abs, tag = 'sflag constant byte address 0x0 - dummy sync flag']
  #allocation43 [shape = 's32[]', space=sflag, size = 0x4, offset = 0, fixed_abs, tag = 'sflag constant byte address 0x0 - dummy sync flag']
  #allocation44 [shape = 's32[]', space=sflag, size = 0x4, offset = 0, fixed_abs, tag = 'sflag constant byte address 0x0 - dummy sync flag']
  #allocation45 [shape = 's32[]', space=sflag, size = 0x4, offset = 0, fixed_abs, tag = 'sflag constant byte address 0x0 - dummy sync flag']
  #allocation46 [shape = 's32[]', space=sflag, size = 0x4, offset = 0, fixed_abs, tag = 'sflag constant byte address 0x0 - dummy sync flag']
  #allocation47 [shape = 's32[]', space=sflag, size = 0x4, offset = 0, fixed_abs, tag = 'sflag constant byte address 0x0 - dummy sync flag']
  #allocation48 [shape = 's32[]', space=sflag, size = 0x4, offset = 0, fixed_abs, tag = 'sflag constant byte address 0x0 - dummy sync flag']
  #allocation49 [shape = 's32[]', space=sflag, size = 0x4, offset = 0, fixed_abs, tag = 'sflag constant byte address 0x0 - dummy sync flag']
  #allocation50 [shape = 's32[]', space=sflag, size = 0x4, offset = 0, fixed_abs, tag = 'sflag constant byte address 0x0 - dummy sync flag']
  #allocation51 [shape = 's32[]', space=sflag, size = 0x4, offset = 0, fixed_abs, tag = 'sflag constant byte address 0x0 - dummy sync flag']
  #allocation52 [shape = 's32[]', space=sflag, size = 0x4, offset = 0, fixed_abs, tag = 'sflag constant byte address 0x0 - dummy sync flag']
  #allocation53 [shape = 's32[]', space=sflag, size = 0x4, offset = 0, fixed_abs, tag = 'sflag constant byte address 0x0 - dummy sync flag']
  #allocation54 [shape = 's32[]', space=sflag, size = 0x4, offset = 0, fixed_abs, tag = 'sflag constant byte address 0x0 - dummy sync flag']
  #allocation55 [shape = 's32[]', space=sflag, size = 0x4, offset = 0, fixed_abs, tag = 'sflag constant byte address 0x0 - dummy sync flag']
  #allocation56 [shape = 's32[]', space=sflag, size = 0x4, offset = 0, fixed_abs, tag = 'sflag constant byte address 0x0 - dummy sync flag']
  #allocation57 [shape = 's32[]', space=sflag, size = 0x4, offset = 0, fixed_abs, tag = 'sflag constant byte address 0x0 - dummy sync flag']
  #allocation58 [shape = 's32[]', space=sflag, size = 0x4, offset = 0, fixed_abs, tag = 'sflag constant byte address 0x0 - dummy sync flag']
  #allocation59 [shape = 's32[]', space=sflag, size = 0x4, offset = 0, fixed_abs, tag = 'sflag constant byte address 0x0 - dummy sync flag']
  #allocation60 [shape = 's32[]', space=sflag, size = 0x4, offset = 0, fixed_abs, tag = 'sflag constant byte address 0x0 - dummy sync flag']
  #allocation61 [shape = 's32[]', space=sflag, size = 0x4, offset = 0, fixed_abs, tag = 'sflag constant byte address 0x0 - dummy sync flag']
  #allocation62 [shape = 's32[]', space=sflag, size = 0x4, offset = 0, fixed_abs, tag = 'sflag constant byte address 0x0 - dummy sync flag']
  #allocation63 [shape = 's32[]', space=sflag, size = 0x4, offset = 0, fixed_abs, tag = 'sflag constant byte address 0x0 - dummy sync flag']
  #allocation64 [shape = 's32[]', space=sflag, size = 0x4, offset = 0, fixed_abs, tag = 'sflag constant byte address 0x0 - dummy sync flag']
  #allocation65 [shape = 's32[]', space=sflag, size = 0x4, offset = 0, fixed_abs, tag = 'sflag constant byte address 0x0 - dummy sync flag']
  #allocation66 [shape = 's32[]', space=sflag, size = 0x4, offset = 0, fixed_abs, tag = 'sflag constant byte address 0x0 - dummy sync flag']
  #allocation67 [shape = 's32[]', space=sflag, size = 0x4, offset = 0, fixed_abs, tag = 'sflag constant byte address 0x0 - dummy sync flag']
  #allocation68 [shape = 's32[]', space=sflag, size = 0x4, offset = 0, fixed_abs, tag = 'sflag constant byte address 0x0 - dummy sync flag']
  #allocation69 [shape = 's32[]', space=sflag, size = 0x4, offset = 0, fixed_abs, tag = 'sflag constant byte address 0x0 - dummy sync flag']
  #allocation70 [shape = 's32[]', space=sflag, size = 0x4, offset = 0, fixed_abs, tag = 'sflag constant byte address 0x0 - dummy sync flag']
  #allocation71 [shape = 's32[]', space=sflag, size = 0x4, offset = 0, fixed_abs, tag = 'sflag constant byte address 0x0 - dummy sync flag']
  #allocation72 [shape = 's32[]', space=sflag, size = 0x4, offset = 0, fixed_abs, tag = 'sflag constant byte address 0x0 - dummy sync flag']
  #allocation73 [shape = 's32[]', space=sflag, size = 0x4, offset = 0, fixed_abs, tag = 'sflag constant byte address 0x0 - dummy sync flag']
  #allocation74 [shape = 's32[]', space=sflag, size = 0x4, offset = 0, fixed_abs, tag = 'sflag constant byte address 0x0 - dummy sync flag']
  #allocation75 [shape = 's32[]', space=sflag, size = 0x4, offset = 0, fixed_abs, tag = 'sflag constant byte address 0x0 - dummy sync flag']
  #allocation76 [shape = 's32[]', space=sflag, size = 0x4, offset = 0, fixed_abs, tag = 'sflag constant byte address 0x0 - dummy sync flag']
  #allocation77 [shape = 's32[]', space=sflag, size = 0x4, offset = 0, fixed_abs, tag = 'sflag constant byte address 0x0 - dummy sync flag']
  #allocation78 [shape = 's32[]', space=sflag, size = 0x4, offset = 0, fixed_abs, tag = 'sflag constant byte address 0x0 - dummy sync flag']
  %s0 = inlined_call_operand.vmem [shape: s32[8,4], index: 0, kind: input, shape index: {}]
  %s1 = inlined_call_operand.hbm [shape: f32[1024,128], index: 1, kind: input, shape index: {}]
  %s2 = inlined_call_operand.hbm [shape: bf16[128,1024], index: 2, kind: input, shape index: {}]
  %s3 = inlined_call_operand.vmem [shape: f32[1,1024], index: 3, kind: input, shape index: {}]
  %s4 = inlined_call_operand.hbm [shape: f32[8,1024], index: 4, kind: output, shape index: {}]
  %s5 = sld [smem:[#allocation0]]
  $region181: #{cbow_forward.1} parent=0
    _
  %s7 = ssub.s32 1, %s5
  %s8 = scalar_select 0, %s7, %s5
  %s10 = sshll.u32 %s0, 4
  %s11 = int_to_ptr.vmem [resolvable:$true] %s10
  %13 = dma.vmem_to_smem %s11, 128, [#allocation8], [#allocation7]
  %15 = dma.done [#allocation7], 128
  %16 = sfence
  $region1: #{cbow_forward.1} parent=0
    #allocation9 [shape = 'u8[262144]{0}', space=vmem, size = 0x40000, scoped, tag = 'input window, operand 2']
    #allocation10 [shape = 's32[2]{0}', space=sflag, size = 0x8, scoped, tag = 'scoped memory for cbow_forward.1']
    #allocation11 [shape = 's32[2]{0}', space=sflag, size = 0x8, scoped, tag = 'scoped memory for cbow_forward.1']
    #allocation12 [shape = 'u8[32768]{0}', space=vmem, size = 0x8000, scoped, tag = 'output window, operand 0, single buffered']
    %17 = vsyncpa [#allocation10], 0
    %s18 = scalar_lea.sflag [#allocation10], 1
    %19 = vsyncpa %s18, 0
    %20 = vsyncpa [#allocation11], 0
    loop: start=0, step=1, limit=4
    $region2: #{cbow_forward.1} parent=1 // loop_pre_header
      _
    $region3: #{cbow_forward.1} parent=1 // loop_header
      %s22 = sphi 0, %s26
      %p23 = scmp.ge.s32.totalorder %s22, 4
      %s29 = sphi 0, %s41
      %s30 = sphi 0, %s37
      %s31 = sphi 0, %s29
      %s32 = sphi 0, %s30
      %s33 = sphi 0, %s31
      %s34 = sphi 0, %s32
      %s44 = sphi 0, %s46
      %s47 = sphi 0, %s44
      %s48 = sphi 0, %s47
      %s64 = sphi 0, %s48
      %s70 = sphi 0, %s72
      %s73 = sphi 0, %s70
      %s74 = sphi 0, %s73
      %s90 = sphi 0, %s74
      %s96 = sphi 0, %s98
      %s99 = sphi 0, %s96
      %s100 = sphi 0, %s99
      %s116 = sphi 0, %s100
    $region4: #{cbow_forward.1} parent=1 // loop_header_branch
      %25 = sbr.rel (%p23) target = $region8
    $region5: #{cbow_forward.1} parent=1 // loop_body
      %s27 = ssub.s32 %s22, 1
      %s28 = ssub.s32 %s22, 2
      %s35 = sadd.s32 1, %s30
      %p36 = scmp.ge.s32.totalorder %s35, 2
      %s37 = scalar_select %p36, 0, %s35
      %s38 = sadd.s32 1, %s29
      %s39 = scalar_select %p36, %s38, %s29
      %p40 = scmp.ge.s32.totalorder %s39, 1
      %s41 = scalar_select %p40, 0, %s39
      %s42 = ssub.s32 %s30, %s37
      %p43 = scmp.eq.s32.totalorder %s42, 0
      %s45 = sadd.s32 %s44, 1
      %s46 = scalar_select %p43, %s44, %s45
      %p49 = pneg %p43
      %p50 = scmp.eq.s32.totalorder %s22, 1
      %p51 = por %p49, %p50
      %p52 = scmp.ne.s32.totalorder %s44, %s47
      %p53 = scmp.eq.s32.totalorder %s22, 0
      %p54 = por %p52, %p53
      %p55 = scmp.ne.s32.totalorder %s44, %s47
      %p56 = scmp.eq.s32.totalorder %s27, 1
      %p57 = por %p55, %p56
      %p58 = scmp.ne.s32.totalorder %s47, %s48
      %p59 = scmp.eq.s32.totalorder %s27, 0
      %p60 = por %p58, %p59
      %p61 = scmp.ne.s32.totalorder %s47, %s48
      %p62 = scmp.eq.s32.totalorder %s28, 1
      %p63 = por %p61, %p62
      %p65 = scmp.ne.s32.totalorder %s48, %s64
      %p66 = scmp.eq.s32.totalorder %s28, 0
      %p67 = por %p65, %p66
      %s68 = ssub.s32 %s30, %s37
      %p69 = scmp.eq.s32.totalorder %s68, 0
      %s71 = sadd.s32 %s70, 1
      %s72 = scalar_select %p69, %s70, %s71
      %p75 = pneg %p69
      %p76 = scmp.eq.s32.totalorder %s22, 1
      %p77 = por %p75, %p76
      %p78 = scmp.ne.s32.totalorder %s70, %s73
      %p79 = scmp.eq.s32.totalorder %s22, 0
      %p80 = por %p78, %p79
      %p81 = scmp.ne.s32.totalorder %s70, %s73
      %p82 = scmp.eq.s32.totalorder %s27, 1
      %p83 = por %p81, %p82
      %p84 = scmp.ne.s32.totalorder %s73, %s74
      %p85 = scmp.eq.s32.totalorder %s27, 0
      %p86 = por %p84, %p85
      %p87 = scmp.ne.s32.totalorder %s73, %s74
      %p88 = scmp.eq.s32.totalorder %s28, 1
      %p89 = por %p87, %p88
      %p91 = scmp.ne.s32.totalorder %s74, %s90
      %p92 = scmp.eq.s32.totalorder %s28, 0
      %p93 = por %p91, %p92
      %s94 = ssub.s32 %s29, %s41
      %p95 = scmp.eq.s32.totalorder %s94, 0
      %s97 = sadd.s32 %s96, 1
      %s98 = scalar_select %p95, %s96, %s97
      %p101 = pneg %p95
      %p102 = scmp.eq.s32.totalorder %s22, 1
      %p103 = por %p101, %p102
      %p104 = scmp.ne.s32.totalorder %s96, %s99
      %p105 = scmp.eq.s32.totalorder %s22, 0
      %p106 = por %p104, %p105
      %p107 = scmp.ne.s32.totalorder %s96, %s99
      %p108 = scmp.eq.s32.totalorder %s27, 1
      %p109 = por %p107, %p108
      %p110 = scmp.ne.s32.totalorder %s99, %s100
      %p111 = scmp.eq.s32.totalorder %s27, 0
      %p112 = por %p110, %p111
      %p113 = scmp.ne.s32.totalorder %s99, %s100
      %p114 = scmp.eq.s32.totalorder %s28, 1
      %p115 = por %p113, %p114
      %p117 = scmp.ne.s32.totalorder %s100, %s116
      %p118 = scmp.eq.s32.totalorder %s28, 0
      %p119 = por %p117, %p118
      %p120 = scmp.le.s32.totalorder 1, %s22
      %p121 = scmp.lt.s32.totalorder %s22, 3
      %p122 = pnand %p120, %p121
      %p123 = pneg %p122
      // Predicated region
      $region9: #{cbow_forward.1} parent=5 // pred_check
        _
      $region10: #{cbow_forward.1} parent=5 // pred_check_branch
        %125 = sbr.rel (%p122) target = $region12
      $region11: #{cbow_forward.1} parent=5 // pred_region
        %s126 = ssub.s32 %s22, 1
      $region12: #{cbow_forward.1} parent=5 // pred_fallthru
        _
      %p127 = scmp.lt.s32.totalorder %s22, 2
      // Predicated region
      $region13: #{cbow_forward.1} parent=5 // pred_check
        %p128 = pneg %p127
      $region14: #{cbow_forward.1} parent=5 // pred_check_branch
        %130 = sbr.rel (%p128) target = $region16
      $region15: #{cbow_forward.1} parent=5 // pred_region
        // Predicated region
        $region17: #{cbow_forward.1} parent=15 // pred_check
          %p131 = pneg %p54
        $region18: #{cbow_forward.1} parent=15 // pred_check_branch
          %133 = sbr.rel (%p131) target = $region20
        $region19: #{cbow_forward.1} parent=15 // pred_region
          %s134 = sand.u32 %s44, 1
          %s135 = scalar_lea.sflag [#allocation10], %s134
          %s136 = sand.u32 %s44, 1
          %s137 = smul.addr %s136, 256
          %s138 = scalar_lea.vmem [#allocation9], %s137
          %s139 = smul.u32 4, %s30
          %141 = vsyncadd %s135, 0
          %s142 = smul.addr %s139, 4
          %s143 = scalar_lea.hbm %s2, %s142
          %s144 = sshll.u32 %s143, 4
          %s145 = int_to_ptr.hbm [resolvable:$true] %s144
          %s146 = sshll.u32 %s138, 4
          %s147 = int_to_ptr.vmem [resolvable:$true] %s146
          %152 = dma.hbm_to_vmem [thread:$0]  %s145, 4096, %s147, %s135, 512, 256, 16
        $region20: #{cbow_forward.1} parent=15 // pred_fallthru
          _
        // Predicated region
        $region21: #{cbow_forward.1} parent=15 // pred_check
          %p153 = pneg %p80
        $region22: #{cbow_forward.1} parent=15 // pred_check_branch
          %155 = sbr.rel (%p153) target = $region24
        $region23: #{cbow_forward.1} parent=15 // pred_region
          %s156 = smul.u32 4, %s30
          %p157 = scmp.lt.s32.totalorder %s156, 7
          %s158 = scalar_select %p157, %s156, 7
          %s159 = scalar_lea.vmem %s3, %s158
          %s160 = smul.u32 4, %s30
        $region24: #{cbow_forward.1} parent=15 // pred_fallthru
          _
      $region16: #{cbow_forward.1} parent=5 // pred_fallthru
        _
      %p161 = scmp.le.s32.totalorder 1, %s22
      %p162 = scmp.lt.s32.totalorder %s22, 3
      %p163 = pnand %p161, %p162
      %p164 = pneg %p163
      // Predicated region
      $region25: #{cbow_forward.1} parent=5 // pred_check
        _
      $region26: #{cbow_forward.1} parent=5 // pred_check_branch
        %166 = sbr.rel (%p163) target = $region28
      $region27: #{cbow_forward.1} parent=5 // pred_region
        %s167 = ssub.s32 %s22, 1
        %s168 = sand.u32 %s47, 1
        %s169 = scalar_lea.sflag [#allocation10], %s168
        %s170 = sand.u32 %s47, 1
        %s171 = smul.addr %s170, 256
        %s172 = scalar_lea.vmem [#allocation9], %s171
        // Predicated region
        $region29: #{cbow_forward.1} parent=27 // pred_check
          %p173 = pneg %p60
        $region30: #{cbow_forward.1} parent=27 // pred_check_branch
          %175 = sbr.rel (%p173) target = $region32
        $region31: #{cbow_forward.1} parent=27 // pred_region
          %177 = dma.done %s169, 4096
        $region32: #{cbow_forward.1} parent=27 // pred_fallthru
          _
        %s178 = sand.u32 %s47, 1
        %s179 = scalar_lea.sflag [#allocation10], %s178
        %s180 = sand.u32 %s47, 1
        %s181 = smul.addr %s180, 256
        %s182 = scalar_lea.vmem [#allocation9], %s181
        %p183 = pneg %p60
        %p184 = pneg %p57
        %s185 = smul.u32 4, %s32
        %p186 = scmp.lt.s32.totalorder %s185, 7
        %s187 = scalar_select %p186, %s185, 7
        %s188 = scalar_lea.vmem %s3, %s187
        %p189 = pneg %p86
        %p190 = pneg %p83
        %p191 = pneg %p112
        %p192 = pneg %p109
        %s193 = smul.u32 4, %s32
        %s194 = smul.u32 4, %s32
        %p195 = scmp.lt.s32.totalorder %s194, 7
        %s196 = scalar_select %p195, %s194, 7
        %s197 = scalar_lea.vmem %s3, %s196
        %s198 = smul.u32 4, %s32
        %p199 = scmp.eq.s32.totalorder %s32, 0
        // Predicated region
        $region33: #{cbow_forward.1} parent=27 // pred_check
          %p200 = pneg %p199
        $region34: #{cbow_forward.1} parent=27 // pred_check_branch
          %202 = sbr.rel (%p200) target = $region36
        $region35: #{cbow_forward.1} parent=27 // pred_region
          %s203 = smul.u32 %s31, 8
          %s204 = smul.u32 %s203, 128
          %s205 = sld [smem:[#allocation8 + %s204]]
          %s206 = sadd.s32 %s203, 1
          %s207 = smul.u32 %s206, 128
          %s208 = sld [smem:[#allocation8 + %s207]]
          %s209 = sadd.s32 %s203, 2
          %s210 = smul.u32 %s209, 128
          %s211 = sld [smem:[#allocation8 + %s210]]
          %s212 = sadd.s32 %s203, 3
          %s213 = smul.u32 %s212, 128
          %s214 = sld [smem:[#allocation8 + %s213]]
          %s215 = sadd.s32 %s203, 4
          %s216 = smul.u32 %s215, 128
          %s217 = sld [smem:[#allocation8 + %s216]]
          %s218 = sadd.s32 %s203, 5
          %s219 = smul.u32 %s218, 128
          %s220 = sld [smem:[#allocation8 + %s219]]
          %s221 = sadd.s32 %s203, 6
          %s222 = smul.u32 %s221, 128
          %s223 = sld [smem:[#allocation8 + %s222]]
          %s224 = sadd.s32 %s203, 7
          %s225 = smul.u32 %s224, 128
          %s226 = sld [smem:[#allocation8 + %s225]]
          %s227 = sadd.s32 %s204, 1
          %s228 = sld [smem:[#allocation8 + %s227]]
          %s229 = sadd.s32 %s207, 1
          %s230 = sld [smem:[#allocation8 + %s229]]
          %s231 = sadd.s32 %s210, 1
          %s232 = sld [smem:[#allocation8 + %s231]]
          %s233 = sadd.s32 %s213, 1
          %s234 = sld [smem:[#allocation8 + %s233]]
          %s235 = sadd.s32 %s216, 1
          %s236 = sld [smem:[#allocation8 + %s235]]
          %s237 = sadd.s32 %s219, 1
          %s238 = sld [smem:[#allocation8 + %s237]]
          %s239 = sadd.s32 %s222, 1
          %s240 = sld [smem:[#allocation8 + %s239]]
          %s241 = sadd.s32 %s225, 1
          %s242 = sld [smem:[#allocation8 + %s241]]
          %s243 = sadd.s32 %s204, 2
          %s244 = sld [smem:[#allocation8 + %s243]]
          %s245 = sadd.s32 %s207, 2
          %s246 = sld [smem:[#allocation8 + %s245]]
          %s247 = sadd.s32 %s210, 2
          %s248 = sld [smem:[#allocation8 + %s247]]
          %s249 = sadd.s32 %s213, 2
          %s250 = sld [smem:[#allocation8 + %s249]]
          %s251 = sadd.s32 %s216, 2
          %s252 = sld [smem:[#allocation8 + %s251]]
          %s253 = sadd.s32 %s219, 2
          %s254 = sld [smem:[#allocation8 + %s253]]
          %s255 = sadd.s32 %s222, 2
          %s256 = sld [smem:[#allocation8 + %s255]]
          %s257 = sadd.s32 %s225, 2
          %s258 = sld [smem:[#allocation8 + %s257]]
          %s259 = sadd.s32 %s204, 3
          %s260 = sld [smem:[#allocation8 + %s259]]
          %s261 = sadd.s32 %s207, 3
          %s262 = sld [smem:[#allocation8 + %s261]]
          %s263 = sadd.s32 %s210, 3
          %s264 = sld [smem:[#allocation8 + %s263]]
          %s265 = sadd.s32 %s213, 3
          %s266 = sld [smem:[#allocation8 + %s265]]
          %s267 = sadd.s32 %s216, 3
          %s268 = sld [smem:[#allocation8 + %s267]]
          %s269 = sadd.s32 %s219, 3
          %s270 = sld [smem:[#allocation8 + %s269]]
          %s271 = sadd.s32 %s222, 3
          %s272 = sld [smem:[#allocation8 + %s271]]
          %s273 = sadd.s32 %s225, 3
          %s274 = sld [smem:[#allocation8 + %s273]]
          %s275 = scalar_lea.hbm %s1, %s205
          // Predicated region
          $region37: #{cbow_forward.1} parent=35 // pred_check
            _
          $region38: #{cbow_forward.1} parent=35 // pred_check_branch
            %277 = sbr.rel target = $region40
          $region39: #{cbow_forward.1} parent=35 // pred_region
            %278 = sst [smem:[#allocation15]] [#allocation14]
            %279 = sst [smem:[#allocation16]] [#allocation13]
          $region40: #{cbow_forward.1} parent=35 // pred_fallthru
            _
          %281 = shalt.err (0)
          %s283 = sshll.u32 %s275, 4
          %s284 = int_to_ptr.hbm [resolvable:$true] %s283
          %s285 = sshll.u32 [#allocation2], 4
          %s286 = int_to_ptr.vmem [resolvable:$true] %s285
          %288 = dma.hbm_to_vmem [thread:$0]  %s284, 16, %s286, [#allocation6]
          %s289 = scalar_lea.hbm %s1, %s208
          %s290 = scalar_lea.vmem [#allocation2], 1
          %s291 = scalar_lea.sflag [#allocation6], 1
          // Predicated region
          $region41: #{cbow_forward.1} parent=35 // pred_check
            _
          $region42: #{cbow_forward.1} parent=35 // pred_check_branch
            %293 = sbr.rel target = $region44
          $region43: #{cbow_forward.1} parent=35 // pred_region
            %294 = sst [smem:[#allocation15]] [#allocation18]
            %295 = sst [smem:[#allocation16]] [#allocation17]
          $region44: #{cbow_forward.1} parent=35 // pred_fallthru
            _
          %297 = shalt.err (0)
          %s299 = sshll.u32 %s289, 4
          %s300 = int_to_ptr.hbm [resolvable:$true] %s299
          %s301 = sshll.u32 %s290, 4
          %s302 = int_to_ptr.vmem [resolvable:$true] %s301
          %304 = dma.hbm_to_vmem [thread:$0]  %s300, 16, %s302, %s291
          %s305 = scalar_lea.hbm %s1, %s211
          %s306 = scalar_lea.vmem [#allocation2], 2
          %s307 = scalar_lea.sflag [#allocation6], 2
          // Predicated region
          $region45: #{cbow_forward.1} parent=35 // pred_check
            _
          $region46: #{cbow_forward.1} parent=35 // pred_check_branch
            %309 = sbr.rel target = $region48
          $region47: #{cbow_forward.1} parent=35 // pred_region
            %310 = sst [smem:[#allocation15]] [#allocation20]
            %311 = sst [smem:[#allocation16]] [#allocation19]
          $region48: #{cbow_forward.1} parent=35 // pred_fallthru
            _
          %313 = shalt.err (0)
          %s315 = sshll.u32 %s305, 4
          %s316 = int_to_ptr.hbm [resolvable:$true] %s315
          %s317 = sshll.u32 %s306, 4
          %s318 = int_to_ptr.vmem [resolvable:$true] %s317
          %320 = dma.hbm_to_vmem [thread:$0]  %s316, 16, %s318, %s307
          %s321 = scalar_lea.hbm %s1, %s214
          %s322 = scalar_lea.vmem [#allocation2], 3
          %s323 = scalar_lea.sflag [#allocation6], 3
          // Predicated region
          $region49: #{cbow_forward.1} parent=35 // pred_check
            _
          $region50: #{cbow_forward.1} parent=35 // pred_check_branch
            %325 = sbr.rel target = $region52
          $region51: #{cbow_forward.1} parent=35 // pred_region
            %326 = sst [smem:[#allocation15]] [#allocation22]
            %327 = sst [smem:[#allocation16]] [#allocation21]
          $region52: #{cbow_forward.1} parent=35 // pred_fallthru
            _
          %329 = shalt.err (0)
          %s331 = sshll.u32 %s321, 4
          %s332 = int_to_ptr.hbm [resolvable:$true] %s331
          %s333 = sshll.u32 %s322, 4
          %s334 = int_to_ptr.vmem [resolvable:$true] %s333
          %336 = dma.hbm_to_vmem [thread:$0]  %s332, 16, %s334, %s323
          %s337 = scalar_lea.hbm %s1, %s217
          %s338 = scalar_lea.vmem [#allocation2], 4
          %s339 = scalar_lea.sflag [#allocation6], 4
          // Predicated region
          $region53: #{cbow_forward.1} parent=35 // pred_check
            _
          $region54: #{cbow_forward.1} parent=35 // pred_check_branch
            %341 = sbr.rel target = $region56
          $region55: #{cbow_forward.1} parent=35 // pred_region
            %342 = sst [smem:[#allocation15]] [#allocation24]
            %343 = sst [smem:[#allocation16]] [#allocation23]
          $region56: #{cbow_forward.1} parent=35 // pred_fallthru
            _
          %345 = shalt.err (0)
          %s347 = sshll.u32 %s337, 4
          %s348 = int_to_ptr.hbm [resolvable:$true] %s347
          %s349 = sshll.u32 %s338, 4
          %s350 = int_to_ptr.vmem [resolvable:$true] %s349
          %352 = dma.hbm_to_vmem [thread:$0]  %s348, 16, %s350, %s339
          %s353 = scalar_lea.hbm %s1, %s220
          %s354 = scalar_lea.vmem [#allocation2], 5
          %s355 = scalar_lea.sflag [#allocation6], 5
          // Predicated region
          $region57: #{cbow_forward.1} parent=35 // pred_check
            _
          $region58: #{cbow_forward.1} parent=35 // pred_check_branch
            %357 = sbr.rel target = $region60
          $region59: #{cbow_forward.1} parent=35 // pred_region
            %358 = sst [smem:[#allocation15]] [#allocation26]
            %359 = sst [smem:[#allocation16]] [#allocation25]
          $region60: #{cbow_forward.1} parent=35 // pred_fallthru
            _
          %361 = shalt.err (0)
          %s363 = sshll.u32 %s353, 4
          %s364 = int_to_ptr.hbm [resolvable:$true] %s363
          %s365 = sshll.u32 %s354, 4
          %s366 = int_to_ptr.vmem [resolvable:$true] %s365
          %368 = dma.hbm_to_vmem [thread:$0]  %s364, 16, %s366, %s355
          %s369 = scalar_lea.hbm %s1, %s223
          %s370 = scalar_lea.vmem [#allocation2], 6
          %s371 = scalar_lea.sflag [#allocation6], 6
          // Predicated region
          $region61: #{cbow_forward.1} parent=35 // pred_check
            _
          $region62: #{cbow_forward.1} parent=35 // pred_check_branch
            %373 = sbr.rel target = $region64
          $region63: #{cbow_forward.1} parent=35 // pred_region
            %374 = sst [smem:[#allocation15]] [#allocation28]
            %375 = sst [smem:[#allocation16]] [#allocation27]
          $region64: #{cbow_forward.1} parent=35 // pred_fallthru
            _
          %377 = shalt.err (0)
          %s379 = sshll.u32 %s369, 4
          %s380 = int_to_ptr.hbm [resolvable:$true] %s379
          %s381 = sshll.u32 %s370, 4
          %s382 = int_to_ptr.vmem [resolvable:$true] %s381
          %384 = dma.hbm_to_vmem [thread:$0]  %s380, 16, %s382, %s371
          %s385 = scalar_lea.hbm %s1, %s226
          %s386 = scalar_lea.vmem [#allocation2], 7
          %s387 = scalar_lea.sflag [#allocation6], 7
          // Predicated region
          $region65: #{cbow_forward.1} parent=35 // pred_check
            _
          $region66: #{cbow_forward.1} parent=35 // pred_check_branch
            %389 = sbr.rel target = $region68
          $region67: #{cbow_forward.1} parent=35 // pred_region
            %390 = sst [smem:[#allocation15]] [#allocation30]
            %391 = sst [smem:[#allocation16]] [#allocation29]
          $region68: #{cbow_forward.1} parent=35 // pred_fallthru
            _
          %393 = shalt.err (0)
          %s395 = sshll.u32 %s385, 4
          %s396 = int_to_ptr.hbm [resolvable:$true] %s395
          %s397 = sshll.u32 %s386, 4
          %s398 = int_to_ptr.vmem [resolvable:$true] %s397
          %400 = dma.hbm_to_vmem [thread:$0]  %s396, 16, %s398, %s387
          %s401 = scalar_lea.hbm %s1, %s228
          %s402 = scalar_lea.vmem [#allocation2], 8
          %s403 = scalar_lea.sflag [#allocation6], 8
          // Predicated region
          $region69: #{cbow_forward.1} parent=35 // pred_check
            _
          $region70: #{cbow_forward.1} parent=35 // pred_check_branch
            %405 = sbr.rel target = $region72
          $region71: #{cbow_forward.1} parent=35 // pred_region
            %406 = sst [smem:[#allocation15]] [#allocation32]
            %407 = sst [smem:[#allocation16]] [#allocation31]
          $region72: #{cbow_forward.1} parent=35 // pred_fallthru
            _
          %409 = shalt.err (0)
          %s411 = sshll.u32 %s401, 4
          %s412 = int_to_ptr.hbm [resolvable:$true] %s411
          %s413 = sshll.u32 %s402, 4
          %s414 = int_to_ptr.vmem [resolvable:$true] %s413
          %416 = dma.hbm_to_vmem [thread:$0]  %s412, 16, %s414, %s403
          %s417 = scalar_lea.hbm %s1, %s230
          %s418 = scalar_lea.vmem [#allocation2], 9
          %s419 = scalar_lea.sflag [#allocation6], 9
          // Predicated region
          $region73: #{cbow_forward.1} parent=35 // pred_check
            _
          $region74: #{cbow_forward.1} parent=35 // pred_check_branch
            %421 = sbr.rel target = $region76
          $region75: #{cbow_forward.1} parent=35 // pred_region
            %422 = sst [smem:[#allocation15]] [#allocation34]
            %423 = sst [smem:[#allocation16]] [#allocation33]
          $region76: #{cbow_forward.1} parent=35 // pred_fallthru
            _
          %425 = shalt.err (0)
          %s427 = sshll.u32 %s417, 4
          %s428 = int_to_ptr.hbm [resolvable:$true] %s427
          %s429 = sshll.u32 %s418, 4
          %s430 = int_to_ptr.vmem [resolvable:$true] %s429
          %432 = dma.hbm_to_vmem [thread:$0]  %s428, 16, %s430, %s419
          %s433 = scalar_lea.hbm %s1, %s232
          %s434 = scalar_lea.vmem [#allocation2], 10
          %s435 = scalar_lea.sflag [#allocation6], 10
          // Predicated region
          $region77: #{cbow_forward.1} parent=35 // pred_check
            _
          $region78: #{cbow_forward.1} parent=35 // pred_check_branch
            %437 = sbr.rel target = $region80
          $region79: #{cbow_forward.1} parent=35 // pred_region
            %438 = sst [smem:[#allocation15]] [#allocation36]
            %439 = sst [smem:[#allocation16]] [#allocation35]
          $region80: #{cbow_forward.1} parent=35 // pred_fallthru
            _
          %441 = shalt.err (0)
          %s443 = sshll.u32 %s433, 4
          %s444 = int_to_ptr.hbm [resolvable:$true] %s443
          %s445 = sshll.u32 %s434, 4
          %s446 = int_to_ptr.vmem [resolvable:$true] %s445
          %448 = dma.hbm_to_vmem [thread:$0]  %s444, 16, %s446, %s435
          %s449 = scalar_lea.hbm %s1, %s234
          %s450 = scalar_lea.vmem [#allocation2], 11
          %s451 = scalar_lea.sflag [#allocation6], 11
          // Predicated region
          $region81: #{cbow_forward.1} parent=35 // pred_check
            _
          $region82: #{cbow_forward.1} parent=35 // pred_check_branch
            %453 = sbr.rel target = $region84
          $region83: #{cbow_forward.1} parent=35 // pred_region
            %454 = sst [smem:[#allocation15]] [#allocation38]
            %455 = sst [smem:[#allocation16]] [#allocation37]
          $region84: #{cbow_forward.1} parent=35 // pred_fallthru
            _
          %457 = shalt.err (0)
          %s459 = sshll.u32 %s449, 4
          %s460 = int_to_ptr.hbm [resolvable:$true] %s459
          %s461 = sshll.u32 %s450, 4
          %s462 = int_to_ptr.vmem [resolvable:$true] %s461
          %464 = dma.hbm_to_vmem [thread:$0]  %s460, 16, %s462, %s451
          %s465 = scalar_lea.hbm %s1, %s236
          %s466 = scalar_lea.vmem [#allocation2], 12
          %s467 = scalar_lea.sflag [#allocation6], 12
          // Predicated region
          $region85: #{cbow_forward.1} parent=35 // pred_check
            _
          $region86: #{cbow_forward.1} parent=35 // pred_check_branch
            %469 = sbr.rel target = $region88
          $region87: #{cbow_forward.1} parent=35 // pred_region
            %470 = sst [smem:[#allocation15]] [#allocation40]
            %471 = sst [smem:[#allocation16]] [#allocation39]
          $region88: #{cbow_forward.1} parent=35 // pred_fallthru
            _
          %473 = shalt.err (0)
          %s475 = sshll.u32 %s465, 4
          %s476 = int_to_ptr.hbm [resolvable:$true] %s475
          %s477 = sshll.u32 %s466, 4
          %s478 = int_to_ptr.vmem [resolvable:$true] %s477
          %480 = dma.hbm_to_vmem [thread:$0]  %s476, 16, %s478, %s467
          %s481 = scalar_lea.hbm %s1, %s238
          %s482 = scalar_lea.vmem [#allocation2], 13
          %s483 = scalar_lea.sflag [#allocation6], 13
          // Predicated region
          $region89: #{cbow_forward.1} parent=35 // pred_check
            _
          $region90: #{cbow_forward.1} parent=35 // pred_check_branch
            %485 = sbr.rel target = $region92
          $region91: #{cbow_forward.1} parent=35 // pred_region
            %486 = sst [smem:[#allocation15]] [#allocation42]
            %487 = sst [smem:[#allocation16]] [#allocation41]
          $region92: #{cbow_forward.1} parent=35 // pred_fallthru
            _
          %489 = shalt.err (0)
          %s491 = sshll.u32 %s481, 4
          %s492 = int_to_ptr.hbm [resolvable:$true] %s491
          %s493 = sshll.u32 %s482, 4
          %s494 = int_to_ptr.vmem [resolvable:$true] %s493
          %496 = dma.hbm_to_vmem [thread:$0]  %s492, 16, %s494, %s483
          %s497 = scalar_lea.hbm %s1, %s240
          %s498 = scalar_lea.vmem [#allocation2], 14
          %s499 = scalar_lea.sflag [#allocation6], 14
          // Predicated region
          $region93: #{cbow_forward.1} parent=35 // pred_check
            _
          $region94: #{cbow_forward.1} parent=35 // pred_check_branch
            %501 = sbr.rel target = $region96
          $region95: #{cbow_forward.1} parent=35 // pred_region
            %502 = sst [smem:[#allocation15]] [#allocation44]
            %503 = sst [smem:[#allocation16]] [#allocation43]
          $region96: #{cbow_forward.1} parent=35 // pred_fallthru
            _
          %505 = shalt.err (0)
          %s507 = sshll.u32 %s497, 4
          %s508 = int_to_ptr.hbm [resolvable:$true] %s507
          %s509 = sshll.u32 %s498, 4
          %s510 = int_to_ptr.vmem [resolvable:$true] %s509
          %512 = dma.hbm_to_vmem [thread:$0]  %s508, 16, %s510, %s499
          %s513 = scalar_lea.hbm %s1, %s242
          %s514 = scalar_lea.vmem [#allocation2], 15
          %s515 = scalar_lea.sflag [#allocation6], 15
          // Predicated region
          $region97: #{cbow_forward.1} parent=35 // pred_check
            _
          $region98: #{cbow_forward.1} parent=35 // pred_check_branch
            %517 = sbr.rel target = $region100
          $region99: #{cbow_forward.1} parent=35 // pred_region
            %518 = sst [smem:[#allocation15]] [#allocation46]
            %519 = sst [smem:[#allocation16]] [#allocation45]
          $region100: #{cbow_forward.1} parent=35 // pred_fallthru
            _
          %521 = shalt.err (0)
          %s523 = sshll.u32 %s513, 4
          %s524 = int_to_ptr.hbm [resolvable:$true] %s523
          %s525 = sshll.u32 %s514, 4
          %s526 = int_to_ptr.vmem [resolvable:$true] %s525
          %528 = dma.hbm_to_vmem [thread:$0]  %s524, 16, %s526, %s515
          %s529 = scalar_lea.hbm %s1, %s244
          %s530 = scalar_lea.vmem [#allocation2], 16
          %s531 = scalar_lea.sflag [#allocation6], 16
          // Predicated region
          $region101: #{cbow_forward.1} parent=35 // pred_check
            _
          $region102: #{cbow_forward.1} parent=35 // pred_check_branch
            %533 = sbr.rel target = $region104
          $region103: #{cbow_forward.1} parent=35 // pred_region
            %534 = sst [smem:[#allocation15]] [#allocation48]
            %535 = sst [smem:[#allocation16]] [#allocation47]
          $region104: #{cbow_forward.1} parent=35 // pred_fallthru
            _
          %537 = shalt.err (0)
          %s539 = sshll.u32 %s529, 4
          %s540 = int_to_ptr.hbm [resolvable:$true] %s539
          %s541 = sshll.u32 %s530, 4
          %s542 = int_to_ptr.vmem [resolvable:$true] %s541
          %544 = dma.hbm_to_vmem [thread:$0]  %s540, 16, %s542, %s531
          %s545 = scalar_lea.hbm %s1, %s246
          %s546 = scalar_lea.vmem [#allocation2], 17
          %s547 = scalar_lea.sflag [#allocation6], 17
          // Predicated region
          $region105: #{cbow_forward.1} parent=35 // pred_check
            _
          $region106: #{cbow_forward.1} parent=35 // pred_check_branch
            %549 = sbr.rel target = $region108
          $region107: #{cbow_forward.1} parent=35 // pred_region
            %550 = sst [smem:[#allocation15]] [#allocation50]
            %551 = sst [smem:[#allocation16]] [#allocation49]
          $region108: #{cbow_forward.1} parent=35 // pred_fallthru
            _
          %553 = shalt.err (0)
          %s555 = sshll.u32 %s545, 4
          %s556 = int_to_ptr.hbm [resolvable:$true] %s555
          %s557 = sshll.u32 %s546, 4
          %s558 = int_to_ptr.vmem [resolvable:$true] %s557
          %560 = dma.hbm_to_vmem [thread:$0]  %s556, 16, %s558, %s547
          %s561 = scalar_lea.hbm %s1, %s248
          %s562 = scalar_lea.vmem [#allocation2], 18
          %s563 = scalar_lea.sflag [#allocation6], 18
          // Predicated region
          $region109: #{cbow_forward.1} parent=35 // pred_check
            _
          $region110: #{cbow_forward.1} parent=35 // pred_check_branch
            %565 = sbr.rel target = $region112
          $region111: #{cbow_forward.1} parent=35 // pred_region
            %566 = sst [smem:[#allocation15]] [#allocation52]
            %567 = sst [smem:[#allocation16]] [#allocation51]
          $region112: #{cbow_forward.1} parent=35 // pred_fallthru
            _
          %569 = shalt.err (0)
          %s571 = sshll.u32 %s561, 4
          %s572 = int_to_ptr.hbm [resolvable:$true] %s571
          %s573 = sshll.u32 %s562, 4
          %s574 = int_to_ptr.vmem [resolvable:$true] %s573
          %576 = dma.hbm_to_vmem [thread:$0]  %s572, 16, %s574, %s563
          %s577 = scalar_lea.hbm %s1, %s250
          %s578 = scalar_lea.vmem [#allocation2], 19
          %s579 = scalar_lea.sflag [#allocation6], 19
          // Predicated region
          $region113: #{cbow_forward.1} parent=35 // pred_check
            _
          $region114: #{cbow_forward.1} parent=35 // pred_check_branch
            %581 = sbr.rel target = $region116
          $region115: #{cbow_forward.1} parent=35 // pred_region
            %582 = sst [smem:[#allocation15]] [#allocation54]
            %583 = sst [smem:[#allocation16]] [#allocation53]
          $region116: #{cbow_forward.1} parent=35 // pred_fallthru
            _
          %585 = shalt.err (0)
          %s587 = sshll.u32 %s577, 4
          %s588 = int_to_ptr.hbm [resolvable:$true] %s587
          %s589 = sshll.u32 %s578, 4
          %s590 = int_to_ptr.vmem [resolvable:$true] %s589
          %592 = dma.hbm_to_vmem [thread:$0]  %s588, 16, %s590, %s579
          %s593 = scalar_lea.hbm %s1, %s252
          %s594 = scalar_lea.vmem [#allocation2], 20
          %s595 = scalar_lea.sflag [#allocation6], 20
          // Predicated region
          $region117: #{cbow_forward.1} parent=35 // pred_check
            _
          $region118: #{cbow_forward.1} parent=35 // pred_check_branch
            %597 = sbr.rel target = $region120
          $region119: #{cbow_forward.1} parent=35 // pred_region
            %598 = sst [smem:[#allocation15]] [#allocation56]
            %599 = sst [smem:[#allocation16]] [#allocation55]
          $region120: #{cbow_forward.1} parent=35 // pred_fallthru
            _
          %601 = shalt.err (0)
          %s603 = sshll.u32 %s593, 4
          %s604 = int_to_ptr.hbm [resolvable:$true] %s603
          %s605 = sshll.u32 %s594, 4
          %s606 = int_to_ptr.vmem [resolvable:$true] %s605
          %608 = dma.hbm_to_vmem [thread:$0]  %s604, 16, %s606, %s595
          %s609 = scalar_lea.hbm %s1, %s254
          %s610 = scalar_lea.vmem [#allocation2], 21
          %s611 = scalar_lea.sflag [#allocation6], 21
          // Predicated region
          $region121: #{cbow_forward.1} parent=35 // pred_check
            _
          $region122: #{cbow_forward.1} parent=35 // pred_check_branch
            %613 = sbr.rel target = $region124
          $region123: #{cbow_forward.1} parent=35 // pred_region
            %614 = sst [smem:[#allocation15]] [#allocation58]
            %615 = sst [smem:[#allocation16]] [#allocation57]
          $region124: #{cbow_forward.1} parent=35 // pred_fallthru
            _
          %617 = shalt.err (0)
          %s619 = sshll.u32 %s609, 4
          %s620 = int_to_ptr.hbm [resolvable:$true] %s619
          %s621 = sshll.u32 %s610, 4
          %s622 = int_to_ptr.vmem [resolvable:$true] %s621
          %624 = dma.hbm_to_vmem [thread:$0]  %s620, 16, %s622, %s611
          %s625 = scalar_lea.hbm %s1, %s256
          %s626 = scalar_lea.vmem [#allocation2], 22
          %s627 = scalar_lea.sflag [#allocation6], 22
          // Predicated region
          $region125: #{cbow_forward.1} parent=35 // pred_check
            _
          $region126: #{cbow_forward.1} parent=35 // pred_check_branch
            %629 = sbr.rel target = $region128
          $region127: #{cbow_forward.1} parent=35 // pred_region
            %630 = sst [smem:[#allocation15]] [#allocation60]
            %631 = sst [smem:[#allocation16]] [#allocation59]
          $region128: #{cbow_forward.1} parent=35 // pred_fallthru
            _
          %633 = shalt.err (0)
          %s635 = sshll.u32 %s625, 4
          %s636 = int_to_ptr.hbm [resolvable:$true] %s635
          %s637 = sshll.u32 %s626, 4
          %s638 = int_to_ptr.vmem [resolvable:$true] %s637
          %640 = dma.hbm_to_vmem [thread:$0]  %s636, 16, %s638, %s627
          %s641 = scalar_lea.hbm %s1, %s258
          %s642 = scalar_lea.vmem [#allocation2], 23
          %s643 = scalar_lea.sflag [#allocation6], 23
          // Predicated region
          $region129: #{cbow_forward.1} parent=35 // pred_check
            _
          $region130: #{cbow_forward.1} parent=35 // pred_check_branch
            %645 = sbr.rel target = $region132
          $region131: #{cbow_forward.1} parent=35 // pred_region
            %646 = sst [smem:[#allocation15]] [#allocation62]
            %647 = sst [smem:[#allocation16]] [#allocation61]
          $region132: #{cbow_forward.1} parent=35 // pred_fallthru
            _
          %649 = shalt.err (0)
          %s651 = sshll.u32 %s641, 4
          %s652 = int_to_ptr.hbm [resolvable:$true] %s651
          %s653 = sshll.u32 %s642, 4
          %s654 = int_to_ptr.vmem [resolvable:$true] %s653
          %656 = dma.hbm_to_vmem [thread:$0]  %s652, 16, %s654, %s643
          %s657 = scalar_lea.hbm %s1, %s260
          %s658 = scalar_lea.vmem [#allocation2], 24
          %s659 = scalar_lea.sflag [#allocation6], 24
          // Predicated region
          $region133: #{cbow_forward.1} parent=35 // pred_check
            _
          $region134: #{cbow_forward.1} parent=35 // pred_check_branch
            %661 = sbr.rel target = $region136
          $region135: #{cbow_forward.1} parent=35 // pred_region
            %662 = sst [smem:[#allocation15]] [#allocation64]
            %663 = sst [smem:[#allocation16]] [#allocation63]
          $region136: #{cbow_forward.1} parent=35 // pred_fallthru
            _
          %665 = shalt.err (0)
          %s667 = sshll.u32 %s657, 4
          %s668 = int_to_ptr.hbm [resolvable:$true] %s667
          %s669 = sshll.u32 %s658, 4
          %s670 = int_to_ptr.vmem [resolvable:$true] %s669
          %672 = dma.hbm_to_vmem [thread:$0]  %s668, 16, %s670, %s659
          %s673 = scalar_lea.hbm %s1, %s262
          %s674 = scalar_lea.vmem [#allocation2], 25
          %s675 = scalar_lea.sflag [#allocation6], 25
          // Predicated region
          $region137: #{cbow_forward.1} parent=35 // pred_check
            _
          $region138: #{cbow_forward.1} parent=35 // pred_check_branch
            %677 = sbr.rel target = $region140
          $region139: #{cbow_forward.1} parent=35 // pred_region
            %678 = sst [smem:[#allocation15]] [#allocation66]
            %679 = sst [smem:[#allocation16]] [#allocation65]
          $region140: #{cbow_forward.1} parent=35 // pred_fallthru
            _
          %681 = shalt.err (0)
          %s683 = sshll.u32 %s673, 4
          %s684 = int_to_ptr.hbm [resolvable:$true] %s683
          %s685 = sshll.u32 %s674, 4
          %s686 = int_to_ptr.vmem [resolvable:$true] %s685
          %688 = dma.hbm_to_vmem [thread:$0]  %s684, 16, %s686, %s675
          %s689 = scalar_lea.hbm %s1, %s264
          %s690 = scalar_lea.vmem [#allocation2], 26
          %s691 = scalar_lea.sflag [#allocation6], 26
          // Predicated region
          $region141: #{cbow_forward.1} parent=35 // pred_check
            _
          $region142: #{cbow_forward.1} parent=35 // pred_check_branch
            %693 = sbr.rel target = $region144
          $region143: #{cbow_forward.1} parent=35 // pred_region
            %694 = sst [smem:[#allocation15]] [#allocation68]
            %695 = sst [smem:[#allocation16]] [#allocation67]
          $region144: #{cbow_forward.1} parent=35 // pred_fallthru
            _
          %697 = shalt.err (0)
          %s699 = sshll.u32 %s689, 4
          %s700 = int_to_ptr.hbm [resolvable:$true] %s699
          %s701 = sshll.u32 %s690, 4
          %s702 = int_to_ptr.vmem [resolvable:$true] %s701
          %704 = dma.hbm_to_vmem [thread:$0]  %s700, 16, %s702, %s691
          %s705 = scalar_lea.hbm %s1, %s266
          %s706 = scalar_lea.vmem [#allocation2], 27
          %s707 = scalar_lea.sflag [#allocation6], 27
          // Predicated region
          $region145: #{cbow_forward.1} parent=35 // pred_check
            _
          $region146: #{cbow_forward.1} parent=35 // pred_check_branch
            %709 = sbr.rel target = $region148
          $region147: #{cbow_forward.1} parent=35 // pred_region
            %710 = sst [smem:[#allocation15]] [#allocation70]
            %711 = sst [smem:[#allocation16]] [#allocation69]
          $region148: #{cbow_forward.1} parent=35 // pred_fallthru
            _
          %713 = shalt.err (0)
          %s715 = sshll.u32 %s705, 4
          %s716 = int_to_ptr.hbm [resolvable:$true] %s715
          %s717 = sshll.u32 %s706, 4
          %s718 = int_to_ptr.vmem [resolvable:$true] %s717
          %720 = dma.hbm_to_vmem [thread:$0]  %s716, 16, %s718, %s707
          %s721 = scalar_lea.hbm %s1, %s268
          %s722 = scalar_lea.vmem [#allocation2], 28
          %s723 = scalar_lea.sflag [#allocation6], 28
          // Predicated region
          $region149: #{cbow_forward.1} parent=35 // pred_check
            _
          $region150: #{cbow_forward.1} parent=35 // pred_check_branch
            %725 = sbr.rel target = $region152
          $region151: #{cbow_forward.1} parent=35 // pred_region
            %726 = sst [smem:[#allocation15]] [#allocation72]
            %727 = sst [smem:[#allocation16]] [#allocation71]
          $region152: #{cbow_forward.1} parent=35 // pred_fallthru
            _
          %729 = shalt.err (0)
          %s731 = sshll.u32 %s721, 4
          %s732 = int_to_ptr.hbm [resolvable:$true] %s731
          %s733 = sshll.u32 %s722, 4
          %s734 = int_to_ptr.vmem [resolvable:$true] %s733
          %736 = dma.hbm_to_vmem [thread:$0]  %s732, 16, %s734, %s723
          %s737 = scalar_lea.hbm %s1, %s270
          %s738 = scalar_lea.vmem [#allocation2], 29
          %s739 = scalar_lea.sflag [#allocation6], 29
          // Predicated region
          $region153: #{cbow_forward.1} parent=35 // pred_check
            _
          $region154: #{cbow_forward.1} parent=35 // pred_check_branch
            %741 = sbr.rel target = $region156
          $region155: #{cbow_forward.1} parent=35 // pred_region
            %742 = sst [smem:[#allocation15]] [#allocation74]
            %743 = sst [smem:[#allocation16]] [#allocation73]
          $region156: #{cbow_forward.1} parent=35 // pred_fallthru
            _
          %745 = shalt.err (0)
          %s747 = sshll.u32 %s737, 4
          %s748 = int_to_ptr.hbm [resolvable:$true] %s747
          %s749 = sshll.u32 %s738, 4
          %s750 = int_to_ptr.vmem [resolvable:$true] %s749
          %752 = dma.hbm_to_vmem [thread:$0]  %s748, 16, %s750, %s739
          %s753 = scalar_lea.hbm %s1, %s272
          %s754 = scalar_lea.vmem [#allocation2], 30
          %s755 = scalar_lea.sflag [#allocation6], 30
          // Predicated region
          $region157: #{cbow_forward.1} parent=35 // pred_check
            _
          $region158: #{cbow_forward.1} parent=35 // pred_check_branch
            %757 = sbr.rel target = $region160
          $region159: #{cbow_forward.1} parent=35 // pred_region
            %758 = sst [smem:[#allocation15]] [#allocation76]
            %759 = sst [smem:[#allocation16]] [#allocation75]
          $region160: #{cbow_forward.1} parent=35 // pred_fallthru
            _
          %761 = shalt.err (0)
          %s763 = sshll.u32 %s753, 4
          %s764 = int_to_ptr.hbm [resolvable:$true] %s763
          %s765 = sshll.u32 %s754, 4
          %s766 = int_to_ptr.vmem [resolvable:$true] %s765
          %768 = dma.hbm_to_vmem [thread:$0]  %s764, 16, %s766, %s755
          %s769 = scalar_lea.hbm %s1, %s274
          %s770 = scalar_lea.vmem [#allocation2], 31
          %s771 = scalar_lea.sflag [#allocation6], 31
          // Predicated region
          $region161: #{cbow_forward.1} parent=35 // pred_check
            _
          $region162: #{cbow_forward.1} parent=35 // pred_check_branch
            %773 = sbr.rel target = $region164
          $region163: #{cbow_forward.1} parent=35 // pred_region
            %774 = sst [smem:[#allocation15]] [#allocation78]
            %775 = sst [smem:[#allocation16]] [#allocation77]
          $region164: #{cbow_forward.1} parent=35 // pred_fallthru
            _
          %777 = shalt.err (0)
          %s779 = sshll.u32 %s769, 4
          %s780 = int_to_ptr.hbm [resolvable:$true] %s779
          %s781 = sshll.u32 %s770, 4
          %s782 = int_to_ptr.vmem [resolvable:$true] %s781
          %784 = dma.hbm_to_vmem [thread:$0]  %s780, 16, %s782, %s771
          %s785 = smul.u32 1, 1
          %s786 = sshll.u32 %s785, 4
          %787 = dma.done [#allocation6], %s786
          %s788 = sshll.u32 %s785, 4
          %789 = dma.done %s291, %s788
          %s790 = sshll.u32 %s785, 4
          %791 = dma.done %s307, %s790
          %s792 = sshll.u32 %s785, 4
          %793 = dma.done %s323, %s792
          %s794 = sshll.u32 %s785, 4
          %795 = dma.done %s339, %s794
          %s796 = sshll.u32 %s785, 4
          %797 = dma.done %s355, %s796
          %s798 = sshll.u32 %s785, 4
          %799 = dma.done %s371, %s798
          %s800 = sshll.u32 %s785, 4
          %801 = dma.done %s387, %s800
          %s802 = sshll.u32 %s785, 4
          %803 = dma.done %s403, %s802
          %s804 = sshll.u32 %s785, 4
          %805 = dma.done %s419, %s804
          %s806 = sshll.u32 %s785, 4
          %807 = dma.done %s435, %s806
          %s808 = sshll.u32 %s785, 4
          %809 = dma.done %s451, %s808
          %s810 = sshll.u32 %s785, 4
          %811 = dma.done %s467, %s810
          %s812 = sshll.u32 %s785, 4
          %813 = dma.done %s483, %s812
          %s814 = sshll.u32 %s785, 4
          %815 = dma.done %s499, %s814
          %s816 = sshll.u32 %s785, 4
          %817 = dma.done %s515, %s816
          %s818 = sshll.u32 %s785, 4
          %819 = dma.done %s531, %s818
          %s820 = sshll.u32 %s785, 4
          %821 = dma.done %s547, %s820
          %s822 = sshll.u32 %s785, 4
          %823 = dma.done %s563, %s822
          %s824 = sshll.u32 %s785, 4
          %825 = dma.done %s579, %s824
          %s826 = sshll.u32 %s785, 4
          %827 = dma.done %s595, %s826
          %s828 = sshll.u32 %s785, 4
          %829 = dma.done %s611, %s828
          %s830 = sshll.u32 %s785, 4
          %831 = dma.done %s627, %s830
          %s832 = sshll.u32 %s785, 4
          %833 = dma.done %s643, %s832
          %s834 = sshll.u32 %s785, 4
          %835 = dma.done %s659, %s834
          %s836 = sshll.u32 %s785, 4
          %837 = dma.done %s675, %s836
          %s838 = sshll.u32 %s785, 4
          %839 = dma.done %s691, %s838
          %s840 = sshll.u32 %s785, 4
          %841 = dma.done %s707, %s840
          %s842 = sshll.u32 %s785, 4
          %843 = dma.done %s723, %s842
          %s844 = sshll.u32 %s785, 4
          %845 = dma.done %s739, %s844
          %s846 = sshll.u32 %s785, 4
          %847 = dma.done %s755, %s846
          %s848 = sshll.u32 %s785, 4
          %849 = dma.done %s771, %s848
          %v850 = vld [vmem:[#allocation2] sm:$0xff]
          %v851 = vld [vmem:[#allocation2 + $0x8] sm:$0xff]
          %v852 = vadd.f32 %v850, %v851
          %v853 = vld [vmem:[#allocation2 + $0x10] sm:$0xff]
          %v854 = vadd.f32 %v852, %v853
          %v855 = vld [vmem:[#allocation2 + $0x18] sm:$0xff]
          %v856 = vadd.f32 %v854, %v855
          %v857 = vpack.c.bf16 %v856, %v856
          %858 = vst [vmem:[#allocation3] sm:$0xf] %v857
          %vm859 = vcmask 7168
          %860 = vst.msk [vmem:[#allocation4] sm:$0xff] %vm859, -inf
          %861 = vst.msk [vmem:[#allocation5] sm:$0xff] %vm859, 0.0
        $region36: #{cbow_forward.1} parent=27 // pred_fallthru
          _
        %v862 = vld [vmem:[#allocation3] sm:$0xf]
        %v863 = vld [vmem:[%s172] sm:$0xff]
        %v864 = vld [vmem:[%s172 + $0x8] sm:$0xff]
        %v865 = vld [vmem:[%s172 + $0x10] sm:$0xff]
        %v866 = vld [vmem:[%s172 + $0x18] sm:$0xff]
        %v867 = vld [vmem:[%s172 + $0x20] sm:$0xff]
        %v868 = vld [vmem:[%s172 + $0x28] sm:$0xff]
        %v869 = vld [vmem:[%s172 + $0x30] sm:$0xff]
        %v870 = vld [vmem:[%s172 + $0x38] sm:$0xff]
        %v871 = vld [vmem:[%s172 + $0x40] sm:$0xff]
        %v872 = vld [vmem:[%s172 + $0x48] sm:$0xff]
        %v873 = vld [vmem:[%s172 + $0x50] sm:$0xff]
        %v874 = vld [vmem:[%s172 + $0x58] sm:$0xff]
        %v875 = vld [vmem:[%s172 + $0x60] sm:$0xff]
        %v876 = vld [vmem:[%s172 + $0x68] sm:$0xff]
        %v877 = vld [vmem:[%s172 + $0x70] sm:$0xff]
        %v878 = vld [vmem:[%s172 + $0x78] sm:$0xff]
        %v879 = vld [vmem:[%s172 + $0x80] sm:$0xff]
        %v880 = vld [vmem:[%s172 + $0x88] sm:$0xff]
        %v881 = vld [vmem:[%s172 + $0x90] sm:$0xff]
        %v882 = vld [vmem:[%s172 + $0x98] sm:$0xff]
        %v883 = vld [vmem:[%s172 + $0xa0] sm:$0xff]
        %v884 = vld [vmem:[%s172 + $0xa8] sm:$0xff]
        %v885 = vld [vmem:[%s172 + $0xb0] sm:$0xff]
        %v886 = vld [vmem:[%s172 + $0xb8] sm:$0xff]
        %v887 = vld [vmem:[%s172 + $0xc0] sm:$0xff]
        %v888 = vld [vmem:[%s172 + $0xc8] sm:$0xff]
        %v889 = vld [vmem:[%s172 + $0xd0] sm:$0xff]
        %v890 = vld [vmem:[%s172 + $0xd8] sm:$0xff]
        %v891 = vld [vmem:[%s172 + $0xe0] sm:$0xff]
        %v892 = vld [vmem:[%s172 + $0xe8] sm:$0xff]
        %v893 = vld [vmem:[%s172 + $0xf0] sm:$0xff]
        %v894 = vld [vmem:[%s172 + $0xf8] sm:$0xff]
        %v895 = vld [vmem:[%s197] sm:$0xf]
        %v897 = vperm.slane %v895, 0
        %v898 = vperm.slane %v895, 1
        %v899 = vperm.slane %v895, 2
        %v900 = vperm.slane %v895, 3
        %v937 = vunpack.c.l.b16 %v863
        %v938 = vunpack.c.h.b16 %v863
        %v939 = vunpack.c.l.b16 %v864
        %v940 = vunpack.c.h.b16 %v864
        %v941 = vunpack.c.l.b16 %v865
        %v942 = vunpack.c.h.b16 %v865
        %v943 = vunpack.c.l.b16 %v866
        %v944 = vunpack.c.h.b16 %v866
        %v945 = vunpack.c.l.b16 %v867
        %v946 = vunpack.c.h.b16 %v867
        %v947 = vunpack.c.l.b16 %v868
        %v948 = vunpack.c.h.b16 %v868
        %v949 = vunpack.c.l.b16 %v869
        %v950 = vunpack.c.h.b16 %v869
        %v951 = vunpack.c.l.b16 %v870
        %v952 = vunpack.c.h.b16 %v870
        %v953 = vunpack.c.l.b16 %v871
        %v954 = vunpack.c.h.b16 %v871
        %v955 = vunpack.c.l.b16 %v872
        %v956 = vunpack.c.h.b16 %v872
        %v957 = vunpack.c.l.b16 %v873
        %v958 = vunpack.c.h.b16 %v873
        %v959 = vunpack.c.l.b16 %v874
        %v960 = vunpack.c.h.b16 %v874
        %v961 = vunpack.c.l.b16 %v875
        %v962 = vunpack.c.h.b16 %v875
        %v963 = vunpack.c.l.b16 %v876
        %v964 = vunpack.c.h.b16 %v876
        %v965 = vunpack.c.l.b16 %v877
        %v966 = vunpack.c.h.b16 %v877
        %v967 = vunpack.c.l.b16 %v878
        %v968 = vunpack.c.h.b16 %v878
        %v969 = vunpack.c.l.b16 %v879
        %v970 = vunpack.c.h.b16 %v879
        %v971 = vunpack.c.l.b16 %v880
        %v972 = vunpack.c.h.b16 %v880
        %v973 = vunpack.c.l.b16 %v881
        %v974 = vunpack.c.h.b16 %v881
        %v975 = vunpack.c.l.b16 %v882
        %v976 = vunpack.c.h.b16 %v882
        %v977 = vunpack.c.l.b16 %v883
        %v978 = vunpack.c.h.b16 %v883
        %v979 = vunpack.c.l.b16 %v884
        %v980 = vunpack.c.h.b16 %v884
        %v981 = vunpack.c.l.b16 %v885
        %v982 = vunpack.c.h.b16 %v885
        %v983 = vunpack.c.l.b16 %v886
        %v984 = vunpack.c.h.b16 %v886
        %v985 = vunpack.c.l.b16 %v887
        %v986 = vunpack.c.h.b16 %v887
        %v987 = vunpack.c.l.b16 %v888
        %v988 = vunpack.c.h.b16 %v888
        %v989 = vunpack.c.l.b16 %v889
        %v990 = vunpack.c.h.b16 %v889
        %v991 = vunpack.c.l.b16 %v890
        %v992 = vunpack.c.h.b16 %v890
        %v993 = vunpack.c.l.b16 %v891
        %v994 = vunpack.c.h.b16 %v891
        %v995 = vunpack.c.l.b16 %v892
        %v996 = vunpack.c.h.b16 %v892
        %v997 = vunpack.c.l.b16 %v893
        %v998 = vunpack.c.h.b16 %v893
        %v999 = vunpack.c.l.b16 %v894
        %v1000 = vunpack.c.h.b16 %v894
        %v1001 = vpack.c.b16 %v941, %v937
        %v1002 = vpack.c.b16 %v942, %v938
        %v1003 = vpack.c.b16 %v943, %v939
        %v1004 = vpack.c.b16 %v944, %v940
        %v1005 = vpack.c.b16 %v949, %v945
        %v1006 = vpack.c.b16 %v950, %v946
        %v1007 = vpack.c.b16 %v951, %v947
        %v1008 = vpack.c.b16 %v952, %v948
        %v1009 = vpack.c.b16 %v957, %v953
        %v1010 = vpack.c.b16 %v958, %v954
        %v1011 = vpack.c.b16 %v959, %v955
        %v1012 = vpack.c.b16 %v960, %v956
        %v1013 = vpack.c.b16 %v965, %v961
        %v1014 = vpack.c.b16 %v966, %v962
        %v1015 = vpack.c.b16 %v967, %v963
        %v1016 = vpack.c.b16 %v968, %v964
        %v1017 = vpack.c.b16 %v973, %v969
        %v1018 = vpack.c.b16 %v974, %v970
        %v1019 = vpack.c.b16 %v975, %v971
        %v1020 = vpack.c.b16 %v976, %v972
        %v1021 = vpack.c.b16 %v981, %v977
        %v1022 = vpack.c.b16 %v982, %v978
        %v1023 = vpack.c.b16 %v983, %v979
        %v1024 = vpack.c.b16 %v984, %v980
        %v1025 = vpack.c.b16 %v989, %v985
        %v1026 = vpack.c.b16 %v990, %v986
        %v1027 = vpack.c.b16 %v991, %v987
        %v1028 = vpack.c.b16 %v992, %v988
        %v1029 = vpack.c.b16 %v997, %v993
        %v1030 = vpack.c.b16 %v998, %v994
        %v1031 = vpack.c.b16 %v999, %v995
        %v1032 = vpack.c.b16 %v1000, %v996
        %1065 = vmatpush.bf16.msra.mxu0 %v1029
        %1066 = vmatpush.bf16.msra.mxu0 %v1025
        %1067 = vmatpush.bf16.msra.mxu0 %v1021
        %1068 = vmatpush.bf16.msra.mxu0 %v1017
        %1069 = vmatpush.bf16.msra.mxu0 %v1013
        %1070 = vmatpush.bf16.msra.mxu0 %v1009
        %1071 = vmatpush.bf16.msra.mxu0 %v1005
        %1072 = vmatpush.bf16.msra.mxu0 %v1001
        %1073 = vmatmul.bf16.gmra.mxu0 %v862
        %v1074 = vpop.f32.mrf.mxu0
        %v1075 = vadd.f32 %v897, %v1074
        %v1076 = vpop.f32.mrf.mxu0
        %1077 = vdwg.mxu0
        %1078 = vmatpush.bf16.msra.mxu0 %v1030
        %1079 = vmatpush.bf16.msra.mxu0 %v1026
        %1080 = vmatpush.bf16.msra.mxu0 %v1022
        %1081 = vmatpush.bf16.msra.mxu0 %v1018
        %1082 = vmatpush.bf16.msra.mxu0 %v1014
        %1083 = vmatpush.bf16.msra.mxu0 %v1010
        %1084 = vmatpush.bf16.msra.mxu0 %v1006
        %1085 = vmatpush.bf16.msra.mxu0 %v1002
        %1086 = vmatmul.bf16.gmra.mxu0 %v862
        %v1087 = vpop.f32.mrf.mxu0
        %v1088 = vadd.f32 %v898, %v1087
        %v1089 = vpop.f32.mrf.mxu0
        %1090 = vdwg.mxu0
        %1091 = vmatpush.bf16.msra.mxu0 %v1031
        %1092 = vmatpush.bf16.msra.mxu0 %v1027
        %1093 = vmatpush.bf16.msra.mxu0 %v1023
        %1094 = vmatpush.bf16.msra.mxu0 %v1019
        %1095 = vmatpush.bf16.msra.mxu0 %v1015
        %1096 = vmatpush.bf16.msra.mxu0 %v1011
        %1097 = vmatpush.bf16.msra.mxu0 %v1007
        %1098 = vmatpush.bf16.msra.mxu0 %v1003
        %1099 = vmatmul.bf16.gmra.mxu0 %v862
        %v1100 = vpop.f32.mrf.mxu0
        %v1101 = vadd.f32 %v899, %v1100
        %v1102 = vpop.f32.mrf.mxu0
        %1103 = vdwg.mxu0
        %1104 = vmatpush.bf16.msra.mxu0 %v1032
        %1105 = vmatpush.bf16.msra.mxu0 %v1028
        %1106 = vmatpush.bf16.msra.mxu0 %v1024
        %1107 = vmatpush.bf16.msra.mxu0 %v1020
        %1108 = vmatpush.bf16.msra.mxu0 %v1016
        %1109 = vmatpush.bf16.msra.mxu0 %v1012
        %1110 = vmatpush.bf16.msra.mxu0 %v1008
        %1111 = vmatpush.bf16.msra.mxu0 %v1004
        %1112 = vmatmul.bf16.gmra.mxu0 %v862
        %v1113 = vpop.f32.mrf.mxu0
        %v1114 = vadd.f32 %v900, %v1113
        %v1115 = vpop.f32.mrf.mxu0
        %1116 = vdwg.mxu0
        %v1117 = vld [vmem:[#allocation4] sm:$0xff]
        %v1118 = vmax.f32 %v1075, %v1088
        %v1119 = vmax.f32 %v1101, %v1114
        %v1120 = vmax.f32 %v1118, %v1119
        %1121 = vmax.xlane.f32.xlu0 %v1120
        %v1122 = vpop.xlane.xlu0 %1121
        %v1123 = vmax.f32 %v1117, %v1122
        %v1124 = vld [vmem:[#allocation5] sm:$0xff]
        %v1125 = vsub.f32 %v1117, %v1123
        %v1126 = vmul.f32 %v1125, 1.442695
        %v1127 = vpow.pop %v1126
        %v1128 = vmul.f32 %v1124, %v1127
        %1130 = vset.pattern.permute.xlu0 0
        %1131 = vperm.xlu0 %1130, %v1123
        %v1132 = vpop.permute.xlu0 %1131
        %v1134 = vsub.f32 %v1075, %v1132
        %v1135 = vsub.f32 %v1088, %v1132
        %v1136 = vsub.f32 %v1101, %v1132
        %v1137 = vsub.f32 %v1114, %v1132
        %v1138 = vmul.f32 %v1134, 1.442695
        %v1139 = vpow.pop %v1138
        %v1140 = vmul.f32 %v1135, 1.442695
        %v1141 = vpow.pop %v1140
        %v1142 = vmul.f32 %v1136, 1.442695
        %v1143 = vpow.pop %v1142
        %v1144 = vmul.f32 %v1137, 1.442695
        %v1145 = vpow.pop %v1144
        %v1146 = vadd.f32 %v1139, %v1141
        %v1147 = vadd.f32 %v1146, %v1143
        %v1148 = vadd.f32 %v1147, %v1145
        %1149 = vadd.xlane.f32.xlu0 %v1148
        %v1150 = vpop.xlane.xlu0 %1149
        %v1151 = vadd.f32 %v1128, %v1150
        %vm1152 = vcmask 7168
        %1153 = vst.msk [vmem:[#allocation5] sm:$0xff] %vm1152, %v1151
        %1154 = vst.msk [vmem:[#allocation4] sm:$0xff] %vm1152, %v1123
        %s1155 = smul.u32 %s32, 512
        %s1156 = sshra.s32 %s1155, 7
        %s1157 = sand.u32 %s1155, 127
        %s1158 = smul.addr %s1156, 8
        %s1159 = scalar_lea.vmem [#allocation12], %s1158
        %1160 = vst [vmem:[%s1159] sm:$0xff] %v1075
        %1161 = vst [vmem:[%s1159 + $0x8] sm:$0xff] %v1088
        %1162 = vst [vmem:[%s1159 + $0x10] sm:$0xff] %v1101
        %1163 = vst [vmem:[%s1159 + $0x18] sm:$0xff] %v1114
        %p1164 = scmp.eq.s32.totalorder %s32, 1
        // Predicated region
        $region165: #{cbow_forward.1} parent=27 // pred_check
          %p1165 = pneg %p1164
        $region166: #{cbow_forward.1} parent=27 // pred_check_branch
          %1167 = sbr.rel (%p1165) target = $region168
        $region167: #{cbow_forward.1} parent=27 // pred_region
          %v1168 = vld [vmem:[#allocation4] sm:$0xff]
          %v1169 = vld [vmem:[#allocation5] sm:$0xff]
          %v1170 = vlog2.pop %v1169
          %v1171 = vmul.f32 %v1170, 0.6931472
          %v1172 = vadd.f32 %v1168, %v1171
          %v1173 = vld [vmem:[#allocation12] sm:$0xff]
          %v1174 = vld [vmem:[#allocation12 + $0x8] sm:$0xff]
          %v1175 = vld [vmem:[#allocation12 + $0x10] sm:$0xff]
          %v1176 = vld [vmem:[#allocation12 + $0x18] sm:$0xff]
          %v1177 = vld [vmem:[#allocation12 + $0x20] sm:$0xff]
          %v1178 = vld [vmem:[#allocation12 + $0x28] sm:$0xff]
          %v1179 = vld [vmem:[#allocation12 + $0x30] sm:$0xff]
          %v1180 = vld [vmem:[#allocation12 + $0x38] sm:$0xff]
          %1182 = vset.pattern.permute.xlu0 0
          %1183 = vperm.xlu0 %1182, %v1172
          %v1184 = vpop.permute.xlu0 %1183
          %v1186 = vsub.f32 %v1173, %v1184
          %v1187 = vsub.f32 %v1174, %v1184
          %v1188 = vsub.f32 %v1175, %v1184
          %v1189 = vsub.f32 %v1176, %v1184
          %v1190 = vsub.f32 %v1177, %v1184
          %v1191 = vsub.f32 %v1178, %v1184
          %v1192 = vsub.f32 %v1179, %v1184
          %v1193 = vsub.f32 %v1180, %v1184
          %1194 = vst [vmem:[#allocation12] sm:$0xff] %v1186
          %1195 = vst [vmem:[#allocation12 + $0x8] sm:$0xff] %v1187
          %1196 = vst [vmem:[#allocation12 + $0x10] sm:$0xff] %v1188
          %1197 = vst [vmem:[#allocation12 + $0x18] sm:$0xff] %v1189
          %1198 = vst [vmem:[#allocation12 + $0x20] sm:$0xff] %v1190
          %1199 = vst [vmem:[#allocation12 + $0x28] sm:$0xff] %v1191
          %1200 = vst [vmem:[#allocation12 + $0x30] sm:$0xff] %v1192
          %1201 = vst [vmem:[#allocation12 + $0x38] sm:$0xff] %v1193
        $region168: #{cbow_forward.1} parent=27 // pred_fallthru
          _
        // Predicated region
        $region169: #{cbow_forward.1} parent=27 // pred_check
          %p1202 = pneg %p109
        $region170: #{cbow_forward.1} parent=27 // pred_check_branch
          %1204 = sbr.rel (%p1202) target = $region172
        $region171: #{cbow_forward.1} parent=27 // pred_region
          %1206 = vsyncadd [#allocation11], 0
          %s1207 = smul.addr %s31, 8
          %s1208 = smul.addr %s1207, 8
          %s1209 = scalar_lea.hbm %s4, %s1208
          %s1211 = sshll.u32 [#allocation12], 4
          %s1212 = int_to_ptr.vmem [resolvable:$true] %s1211
          %s1213 = sshll.u32 %s1209, 4
          %s1214 = int_to_ptr.hbm [resolvable:$true] %s1213
          %1216 = dma.vmem_to_hbm [thread:$0]  %s1212, 1024, %s1214, [#allocation11]
        $region172: #{cbow_forward.1} parent=27 // pred_fallthru
          _
        // Predicated region
        $region173: #{cbow_forward.1} parent=27 // pred_check
          %p1217 = pneg %p109
        $region174: #{cbow_forward.1} parent=27 // pred_check_branch
          %1219 = sbr.rel (%p1217) target = $region176
        $region175: #{cbow_forward.1} parent=27 // pred_region
          %1221 = dma.done [#allocation11], 1024
        $region176: #{cbow_forward.1} parent=27 // pred_fallthru
          _
      $region28: #{cbow_forward.1} parent=5 // pred_fallthru
        _
      %p1222 = scmp.le.s32.totalorder 2, %s22
      // Predicated region
      $region177: #{cbow_forward.1} parent=5 // pred_check
        %p1223 = pneg %p1222
      $region178: #{cbow_forward.1} parent=5 // pred_check_branch
        %1225 = sbr.rel (%p1223) target = $region180
      $region179: #{cbow_forward.1} parent=5 // pred_region
        %s1226 = ssub.s32 %s22, 2
      $region180: #{cbow_forward.1} parent=5 // pred_fallthru
        _
    $region6: #{cbow_forward.1} parent=1 // loop_footer
      %s26 = sadd.s32 1, %s22
    $region7: #{cbow_forward.1} parent=1 // loop_footer_branch
      %21 = sbr.rel target = $region3
    $region8: #{cbow_forward.1} parent=1 // loop_exit
      _
    %1227 = vsyncpa [#allocation10], 1
    %s1228 = scalar_lea.sflag [#allocation10], 1
    %1229 = vsyncpa %s1228, 1
    %1230 = vsyncpa [#allocation11], 1
    %s1231 = scalar_lea.sflag [#allocation11], 1
    %1232 = vsyncpa %s1231, 1
  %1233 = vsyncmov [#allocation6]
  %s1234 = vpop.sfrf %1233
  %p1235 = scmp.eq.s32.totalorder %s1234, 0
  %p1236 = pneg %p1235
  %1238 = shalt.err (%p1236)
  %s1239 = scalar_lea.sflag [#allocation6], 1
  %1240 = vsyncmov %s1239
  %s1241 = vpop.sfrf %1240
  %p1242 = scmp.eq.s32.totalorder %s1241, 0
  %p1243 = pneg %p1242
  %1245 = shalt.err (%p1243)
  %s1246 = scalar_lea.sflag [#allocation6], 2
  %1247 = vsyncmov %s1246
  %s1248 = vpop.sfrf %1247
  %p1249 = scmp.eq.s32.totalorder %s1248, 0
  %p1250 = pneg %p1249
  %1252 = shalt.err (%p1250)
  %s1253 = scalar_lea.sflag [#allocation6], 3
  %1254 = vsyncmov %s1253
  %s1255 = vpop.sfrf %1254
  %p1256 = scmp.eq.s32.totalorder %s1255, 0
  %p1257 = pneg %p1256
  %1259 = shalt.err (%p1257)
  %s1260 = scalar_lea.sflag [#allocation6], 4
  %1261 = vsyncmov %s1260
  %s1262 = vpop.sfrf %1261
  %p1263 = scmp.eq.s32.totalorder %s1262, 0
  %p1264 = pneg %p1263
  %1266 = shalt.err (%p1264)
  %s1267 = scalar_lea.sflag [#allocation6], 5
  %1268 = vsyncmov %s1267
  %s1269 = vpop.sfrf %1268
  %p1270 = scmp.eq.s32.totalorder %s1269, 0
  %p1271 = pneg %p1270
  %1273 = shalt.err (%p1271)
  %s1274 = scalar_lea.sflag [#allocation6], 6
  %1275 = vsyncmov %s1274
  %s1276 = vpop.sfrf %1275
  %p1277 = scmp.eq.s32.totalorder %s1276, 0
  %p1278 = pneg %p1277
  %1280 = shalt.err (%p1278)
  %s1281 = scalar_lea.sflag [#allocation6], 7
  %1282 = vsyncmov %s1281
  %s1283 = vpop.sfrf %1282
  %p1284 = scmp.eq.s32.totalorder %s1283, 0
  %p1285 = pneg %p1284
  %1287 = shalt.err (%p1285)
  %s1288 = scalar_lea.sflag [#allocation6], 8
  %1289 = vsyncmov %s1288
  %s1290 = vpop.sfrf %1289
  %p1291 = scmp.eq.s32.totalorder %s1290, 0
  %p1292 = pneg %p1291
  %1294 = shalt.err (%p1292)
  %s1295 = scalar_lea.sflag [#allocation6], 9
  %1296 = vsyncmov %s1295
  %s1297 = vpop.sfrf %1296
  %p1298 = scmp.eq.s32.totalorder %s1297, 0
  %p1299 = pneg %p1298
  %1301 = shalt.err (%p1299)
  %s1302 = scalar_lea.sflag [#allocation6], 10
  %1303 = vsyncmov %s1302
  %s1304 = vpop.sfrf %1303
  %p1305 = scmp.eq.s32.totalorder %s1304, 0
  %p1306 = pneg %p1305
  %1308 = shalt.err (%p1306)
  %s1309 = scalar_lea.sflag [#allocation6], 11
  %1310 = vsyncmov %s1309
  %s1311 = vpop.sfrf %1310
  %p1312 = scmp.eq.s32.totalorder %s1311, 0
  %p1313 = pneg %p1312
  %1315 = shalt.err (%p1313)
  %s1316 = scalar_lea.sflag [#allocation6], 12
  %1317 = vsyncmov %s1316
  %s1318 = vpop.sfrf %1317
  %p1319 = scmp.eq.s32.totalorder %s1318, 0
  %p1320 = pneg %p1319
  %1322 = shalt.err (%p1320)
  %s1323 = scalar_lea.sflag [#allocation6], 13
  %1324 = vsyncmov %s1323
  %s1325 = vpop.sfrf %1324
  %p1326 = scmp.eq.s32.totalorder %s1325, 0
  %p1327 = pneg %p1326
  %1329 = shalt.err (%p1327)
  %s1330 = scalar_lea.sflag [#allocation6], 14
  %1331 = vsyncmov %s1330
  %s1332 = vpop.sfrf %1331
  %p1333 = scmp.eq.s32.totalorder %s1332, 0
  %p1334 = pneg %p1333
  %1336 = shalt.err (%p1334)
  %s1337 = scalar_lea.sflag [#allocation6], 15
  %1338 = vsyncmov %s1337
  %s1339 = vpop.sfrf %1338
  %p1340 = scmp.eq.s32.totalorder %s1339, 0
  %p1341 = pneg %p1340
  %1343 = shalt.err (%p1341)
  %s1344 = scalar_lea.sflag [#allocation6], 16
  %1345 = vsyncmov %s1344
  %s1346 = vpop.sfrf %1345
  %p1347 = scmp.eq.s32.totalorder %s1346, 0
  %p1348 = pneg %p1347
  %1350 = shalt.err (%p1348)
  %s1351 = scalar_lea.sflag [#allocation6], 17
  %1352 = vsyncmov %s1351
  %s1353 = vpop.sfrf %1352
  %p1354 = scmp.eq.s32.totalorder %s1353, 0
  %p1355 = pneg %p1354
  %1357 = shalt.err (%p1355)
  %s1358 = scalar_lea.sflag [#allocation6], 18
  %1359 = vsyncmov %s1358
  %s1360 = vpop.sfrf %1359
  %p1361 = scmp.eq.s32.totalorder %s1360, 0
  %p1362 = pneg %p1361
  %1364 = shalt.err (%p1362)
  %s1365 = scalar_lea.sflag [#allocation6], 19
  %1366 = vsyncmov %s1365
  %s1367 = vpop.sfrf %1366
  %p1368 = scmp.eq.s32.totalorder %s1367, 0
  %p1369 = pneg %p1368
  %1371 = shalt.err (%p1369)
  %s1372 = scalar_lea.sflag [#allocation6], 20
  %1373 = vsyncmov %s1372
  %s1374 = vpop.sfrf %1373
  %p1375 = scmp.eq.s32.totalorder %s1374, 0
  %p1376 = pneg %p1375
  %1378 = shalt.err (%p1376)
  %s1379 = scalar_lea.sflag [#allocation6], 21
  %1380 = vsyncmov %s1379
  %s1381 = vpop.sfrf %1380
  %p1382 = scmp.eq.s32.totalorder %s1381, 0
  %p1383 = pneg %p1382
  %1385 = shalt.err (%p1383)
  %s1386 = scalar_lea.sflag [#allocation6], 22
  %1387 = vsyncmov %s1386
  %s1388 = vpop.sfrf %1387
  %p1389 = scmp.eq.s32.totalorder %s1388, 0
  %p1390 = pneg %p1389
  %1392 = shalt.err (%p1390)
  %s1393 = scalar_lea.sflag [#allocation6], 23
  %1394 = vsyncmov %s1393
  %s1395 = vpop.sfrf %1394
  %p1396 = scmp.eq.s32.totalorder %s1395, 0
  %p1397 = pneg %p1396
  %1399 = shalt.err (%p1397)
  %s1400 = scalar_lea.sflag [#allocation6], 24
  %1401 = vsyncmov %s1400
  %s1402 = vpop.sfrf %1401
  %p1403 = scmp.eq.s32.totalorder %s1402, 0
  %p1404 = pneg %p1403
  %1406 = shalt.err (%p1404)
  %s1407 = scalar_lea.sflag [#allocation6], 25
  %1408 = vsyncmov %s1407
  %s1409 = vpop.sfrf %1408
  %p1410 = scmp.eq.s32.totalorder %s1409, 0
  %p1411 = pneg %p1410
  %1413 = shalt.err (%p1411)
  %s1414 = scalar_lea.sflag [#allocation6], 26
  %1415 = vsyncmov %s1414
  %s1416 = vpop.sfrf %1415
  %p1417 = scmp.eq.s32.totalorder %s1416, 0
  %p1418 = pneg %p1417
  %1420 = shalt.err (%p1418)
  %s1421 = scalar_lea.sflag [#allocation6], 27
  %1422 = vsyncmov %s1421
  %s1423 = vpop.sfrf %1422
  %p1424 = scmp.eq.s32.totalorder %s1423, 0
  %p1425 = pneg %p1424
  %1427 = shalt.err (%p1425)
  %s1428 = scalar_lea.sflag [#allocation6], 28
  %1429 = vsyncmov %s1428
  %s1430 = vpop.sfrf %1429
  %p1431 = scmp.eq.s32.totalorder %s1430, 0
  %p1432 = pneg %p1431
  %1434 = shalt.err (%p1432)
  %s1435 = scalar_lea.sflag [#allocation6], 29
  %1436 = vsyncmov %s1435
  %s1437 = vpop.sfrf %1436
  %p1438 = scmp.eq.s32.totalorder %s1437, 0
  %p1439 = pneg %p1438
  %1441 = shalt.err (%p1439)
  %s1442 = scalar_lea.sflag [#allocation6], 30
  %1443 = vsyncmov %s1442
  %s1444 = vpop.sfrf %1443
  %p1445 = scmp.eq.s32.totalorder %s1444, 0
  %p1446 = pneg %p1445
  %1448 = shalt.err (%p1446)
  %s1449 = scalar_lea.sflag [#allocation6], 31
  %1450 = vsyncmov %s1449
  %s1451 = vpop.sfrf %1450
  %p1452 = scmp.eq.s32.totalorder %s1451, 0
  %p1453 = pneg %p1452
  %1455 = shalt.err (%p1453)

</llo_original>
